<compile_context>
chip_gen: v5e
topology: v5e:2x2
jax: 0.10.0
libtpu: 0.0.40
codegen_flags: <defaults>
</compile_context>

<pallas_src>
import math
import functools

import jax
import jax.numpy as jnp
from jax.experimental import pallas as pl
from jax.experimental.pallas import tpu as pltpu


def _layer_norm(x, gamma, beta, eps=1e-5):
    mu = jnp.mean(x, axis=-1, keepdims=True)
    xc = x - mu
    var = jnp.mean(xc * xc, axis=-1, keepdims=True)
    return xc * jax.lax.rsqrt(var + eps) * gamma + beta


def trans_enc_kernel(tok_ref, pe_ref, mask_ref, emb_ref,
                     wqkv_ref, bqkv_ref, wo_ref, bo_ref,
                     ln1g_ref, ln1b_ref, ln2g_ref, ln2b_ref,
                     w1_ref, b1_ref, w2_ref, b2_ref,
                     o_ref,
                     *, batch, seq, nhead, num_layers, ff_chunk):
    B, S, H = batch, seq, nhead
    BS = B * S
    V, D = emb_ref.shape
    hd = D // H
    HB = H * B
    F = w1_ref.shape[1]
    scale = jnp.float32(1.0 / math.sqrt(hd))

    # ---- fused embedding lookup (exact one-hot matmul) + positional encoding ----
    tok = tok_ref[...]                                            # (BS, 1) int32
    vocab_iota = jax.lax.broadcasted_iota(jnp.int32, (BS, V), 1)
    onehot = (vocab_iota == tok).astype(jnp.float32)              # (BS, V)
    x = jnp.dot(onehot, emb_ref[...],
                preferred_element_type=jnp.float32) + pe_ref[...]  # (BS, D) f32

    # ---- hoisted small parameters (reused by every unrolled layer) ----
    wqkv = wqkv_ref[...]                  # (D, 3D) bf16
    bqkv = bqkv_ref[...]                  # (1, 3D) f32
    wo = wo_ref[...]                      # (H, hd, D) bf16
    bo = bo_ref[...]                      # (1, D) f32
    ln1g = ln1g_ref[...]; ln1b = ln1b_ref[...]
    ln2g = ln2g_ref[...]; ln2b = ln2b_ref[...]
    b2 = b2_ref[...]                      # (1, D) f32

    # ---- key-padding bias, broadcast ONCE to the full head-batched shape ----
    pad = mask_ref[...]                                           # (B,1,S): 1.0 = pad
    key_bias = jnp.broadcast_to((pad * jnp.float32(-1e30))[None],
                                (H, B, S, S)).reshape(HB, S, S)
    # NOTE: a fully-padded row yields a uniform softmax over padded keys
    # (PyTorch with -inf masking would produce NaNs in that degenerate case).

    def split_heads(t):                   # (BS, D) -> (H*B, S, hd), head-major batch
        parts = [t[:, h * hd:(h + 1) * hd].reshape(1, BS, hd) for h in range(H)]
        return jnp.concatenate(parts, axis=0).reshape(HB, S, hd)

    # Weights are SHARED across depth (same layer instance in the ModuleList).
    for _ in range(num_layers):
        xb = x.astype(jnp.bfloat16)

        # ---- fused QKV projection: one (BS,D)@(D,3D) matmul ----
        qkv = jnp.dot(xb, wqkv, preferred_element_type=jnp.float32) + bqkv
        q = split_heads(qkv[:, 0 * D:1 * D])                      # (HB, S, hd) f32
        k = split_heads(qkv[:, 1 * D:2 * D])
        v = split_heads(qkv[:, 2 * D:3 * D])

        # ---- head-batched self attention (single batch dim = H*B) ----
        scores = jnp.einsum('bqd,bkd->bqk',
                            q.astype(jnp.bfloat16), k.astype(jnp.bfloat16),
                            preferred_element_type=jnp.float32) * scale
        scores = scores + key_bias                                 # (HB,S,S), no bcast
        m = jnp.max(scores, axis=-1, keepdims=True)
        e = jnp.exp(scores - m)
        attn = e / jnp.sum(e, axis=-1, keepdims=True)              # exact normalize
        ctx = jnp.einsum('bqk,bkd->bqd',
                         attn.astype(jnp.bfloat16), v.astype(jnp.bfloat16),
                         preferred_element_type=jnp.float32)       # (HB, S, hd)

        # ---- output projection: head-batched matmul, then reduce over heads ----
        ctx3 = ctx.reshape(H, BS, hd)
        partial = jnp.einsum('hmd,hde->hme',
                             ctx3.astype(jnp.bfloat16), wo,
                             preferred_element_type=jnp.float32)   # (H, BS, D)
        attn_out = jnp.sum(partial, axis=0)                        # (BS, D)

        x = _layer_norm(x + attn_out + bo, ln1g, ln1b)

        # ---- feed forward (ReLU), chunked over the F lane dimension ----
        xb2 = x.astype(jnp.bfloat16)
        ff = jnp.zeros((BS, D), jnp.float32)
        for c in range(F // ff_chunk):
            lo = c * ff_chunk
            w1c = w1_ref[:, lo:lo + ff_chunk]                      # (D, FC) bf16
            b1c = b1_ref[:, lo:lo + ff_chunk]                      # (1, FC) f32
            h1c = jnp.maximum(
                jnp.dot(xb2, w1c, preferred_element_type=jnp.float32) + b1c, 0.0)
            ff = ff + jnp.dot(h1c.astype(jnp.bfloat16),
                              w2_ref[lo:lo + ff_chunk, :],
                              preferred_element_type=jnp.float32)
        x = _layer_norm(x + ff + b2, ln2g, ln2b)

    # ---- masked mean pooling over the sequence (exact divide, lane-dense out) ----
    nonpad = 1.0 - pad                                             # (B, 1, S)
    x3 = x.reshape(B, S, D)
    summed = jnp.einsum('bos,bsd->bod', nonpad, x3,
                        preferred_element_type=jnp.float32)        # (B, 1, D)
    count = jnp.maximum(jnp.sum(nonpad, axis=-1, keepdims=True), 1.0)
    o_ref[...] = summed / count


def init_params(key, vocab_size, d_model, dim_ff, max_len=5000):
    ks = jax.random.split(key, 11)
    s = 0.02
    p = {}
    p['emb'] = jax.random.normal(ks[0], (vocab_size, d_model), jnp.float32)
    p['in_proj_w'] = jax.random.normal(ks[1], (3 * d_model, d_model), jnp.float32) * s
    p['in_proj_b'] = jax.random.normal(ks[2], (3 * d_model,), jnp.float32) * s
    p['out_proj_w'] = jax.random.normal(ks[3], (d_model, d_model), jnp.float32) * s
    p['out_proj_b'] = jax.random.normal(ks[4], (d_model,), jnp.float32) * s
    p['ln1_g'] = jnp.ones((d_model,), jnp.float32)
    p['ln1_b'] = jnp.zeros((d_model,), jnp.float32)
    p['ln2_g'] = jnp.ones((d_model,), jnp.float32)
    p['ln2_b'] = jnp.zeros((d_model,), jnp.float32)
    p['w1'] = jax.random.normal(ks[5], (dim_ff, d_model), jnp.float32) * s
    p['b1'] = jax.random.normal(ks[6], (dim_ff,), jnp.float32) * s
    p['w2'] = jax.random.normal(ks[7], (d_model, dim_ff), jnp.float32) * s
    p['b2'] = jax.random.normal(ks[8], (d_model,), jnp.float32) * s
    p['wout'] = jax.random.normal(ks[9], (2, d_model), jnp.float32) * s
    p['bout'] = jax.random.normal(ks[10], (2,), jnp.float32) * s

    # PositionalEncoding buffer (same formula as the PyTorch module)
    pos = jnp.arange(max_len, dtype=jnp.float32)[:, None]
    div = jnp.exp(jnp.arange(0, d_model, 2, dtype=jnp.float32)
                  * (-math.log(10000.0) / d_model))
    ang = pos * div
    pe = jnp.zeros((max_len, d_model), jnp.float32)
    pe = pe.at[:, 0::2].set(jnp.sin(ang)).at[:, 1::2].set(jnp.cos(ang))
    p['pe'] = pe
    return p


def trans_enc_forward(tokens, params, *, nhead, num_layers):
    B, S = tokens.shape
    V, D = params['emb'].shape
    F = params['w1'].shape[0]
    assert D % nhead == 0
    hd = D // nhead
    assert S <= params['pe'].shape[0], "sequence longer than positional-encoding buffer"
    BS = B * S
    ff_chunk = 512 if F % 512 == 0 else F

    # glue (tiny XLA prep): token ids, padding mask, pre-tiled positional encodings
    tok2d = tokens.reshape(BS, 1).astype(jnp.int32)
    maskf = (tokens == 2).astype(jnp.float32).reshape(B, 1, S)
    pe_t = jnp.tile(params['pe'][:S, :], (B, 1)).astype(jnp.float32)      # (BS, D)

    # weight prep: fused QKV, per-head out-proj, bf16 matmul operands
    wqkv = params['in_proj_w'].T.astype(jnp.bfloat16)                     # (D, 3D)
    bqkv = params['in_proj_b'].reshape(1, 3 * D).astype(jnp.float32)
    wo_h = params['out_proj_w'].T.reshape(nhead, hd, D).astype(jnp.bfloat16)
    bo = params['out_proj_b'].reshape(1, D)
    ln1g = params['ln1_g'].reshape(1, D)
    ln1b = params['ln1_b'].reshape(1, D)
    ln2g = params['ln2_g'].reshape(1, D)
    ln2b = params['ln2_b'].reshape(1, D)
    w1_t = params['w1'].T.astype(jnp.bfloat16)                            # (D, F)
    b1 = params['b1'].reshape(1, F)
    w2_t = params['w2'].T.astype(jnp.bfloat16)                            # (F, D)
    b2 = params['b2'].reshape(1, D)
    emb = params['emb'].astype(jnp.float32)

    operands = (tok2d, pe_t, maskf, emb, wqkv, bqkv, wo_h, bo,
                ln1g, ln1b, ln2g, ln2b, w1_t, b1, w2_t, b2)

    def full_spec(arr):
        shp = tuple(arr.shape)
        nd = len(shp)
        return pl.BlockSpec(shp, lambda *_, _nd=nd: (0,) * _nd)

    kern = functools.partial(trans_enc_kernel, batch=B, seq=S, nhead=nhead,
                             num_layers=num_layers, ff_chunk=ff_chunk)

    pooled3 = pl.pallas_call(
        kern,
        out_shape=jax.ShapeDtypeStruct((B, 1, D), jnp.float32),
        grid=(1,),                                     # whole batch in one step
        in_specs=[full_spec(a) for a in operands],
        out_specs=pl.BlockSpec((B, 1, D), lambda *_: (0, 0, 0)),
        compiler_params=pltpu.CompilerParams(
            dimension_semantics=("arbitrary",)),
    )(*operands)

    pooled = pooled3.reshape(B, D)
    # D -> 2 head kept in the XLA wrapper so the kernel output stays lane-dense.
    logits = pooled @ params['wout'].T + params['bout']
    # matches PyTorch return: (logits, (torch.zeros(d_model),))
    return logits, (jnp.zeros((D,), jnp.float32),)


if __name__ == "__main__":
    vocab_size = 50
    d_model = 32
    nhead = 4
    num_encoder_layers = 2
    dim_ff = 2048            # nn.TransformerEncoderLayer default dim_feedforward
    B, S = 2, 8

    root = jax.random.PRNGKey(0)
    k_tok, k_par = jax.random.split(root)

    params = init_params(k_par, vocab_size, d_model, dim_ff)

    tokens = jax.random.randint(k_tok, (B, S), 0, vocab_size, dtype=jnp.int32)
    # inject some padding tokens (id == 2), but keep at least one real token per row
    tokens = tokens.at[0, 6:].set(2).at[1, 5:].set(2)

    fwd = jax.jit(functools.partial(trans_enc_forward, nhead=nhead,
                                    num_layers=num_encoder_layers))
    logits, hidden = fwd(tokens, params)
    jax.block_until_ready(logits)

    assert logits.shape == (B, 2)
    assert hidden[0].shape == (d_model,)
    assert bool(jnp.all(jnp.isfinite(logits)))
    # TODO(synk): nn.Dropout layers are treated as identity (eval mode); training-mode
    # stochastic dropout is not implemented in the kernel.
    print("KERNEL_OK")
</pallas_src>

<mosaic_0001>
module attributes {stable_mosaic.version = 11 : i64} {
  func.func @trans_enc_kernel(%arg0: i32, %arg1: memref<16x1xi32, #tpu.memory_space<vmem>>, %arg2: memref<16x32xf32, #tpu.memory_space<vmem>>, %arg3: memref<2x1x8xf32, #tpu.memory_space<vmem>>, %arg4: memref<50x32xf32, #tpu.memory_space<vmem>>, %arg5: memref<32x96xbf16, #tpu.memory_space<vmem>>, %arg6: memref<1x96xf32, #tpu.memory_space<vmem>>, %arg7: memref<4x8x32xbf16, #tpu.memory_space<vmem>>, %arg8: memref<1x32xf32, #tpu.memory_space<vmem>>, %arg9: memref<1x32xf32, #tpu.memory_space<vmem>>, %arg10: memref<1x32xf32, #tpu.memory_space<vmem>>, %arg11: memref<1x32xf32, #tpu.memory_space<vmem>>, %arg12: memref<1x32xf32, #tpu.memory_space<vmem>>, %arg13: memref<32x2048xbf16, #tpu.memory_space<vmem>>, %arg14: memref<1x2048xf32, #tpu.memory_space<vmem>>, %arg15: memref<2048x32xbf16, #tpu.memory_space<vmem>>, %arg16: memref<1x32xf32, #tpu.memory_space<vmem>>, %arg17: memref<2x1x32xf32, #tpu.memory_space<vmem>>) attributes {dimension_semantics = [#tpu.dimension_semantics<arbitrary>], iteration_bounds = array<i64: 1>, scalar_prefetch = 0 : i64, scratch_operands = 0 : i64, tpu.core_type = #tpu.core_type<tc>, window_params = [{pipeline_mode = #tpu.pipeline_mode<synchronous>, transform_indices = @transform_0, window_bounds = array<i64: 16, 1>}, {pipeline_mode = #tpu.pipeline_mode<synchronous>, transform_indices = @transform_1, window_bounds = array<i64: 16, 32>}, {pipeline_mode = #tpu.pipeline_mode<synchronous>, transform_indices = @transform_2, window_bounds = array<i64: 2, 1, 8>}, {pipeline_mode = #tpu.pipeline_mode<synchronous>, transform_indices = @transform_3, window_bounds = array<i64: 50, 32>}, {pipeline_mode = #tpu.pipeline_mode<synchronous>, transform_indices = @transform_4, window_bounds = array<i64: 32, 96>}, {pipeline_mode = #tpu.pipeline_mode<synchronous>, transform_indices = @transform_5, window_bounds = array<i64: 1, 96>}, {pipeline_mode = #tpu.pipeline_mode<synchronous>, transform_indices = @transform_6, window_bounds = array<i64: 4, 8, 32>}, {pipeline_mode = #tpu.pipeline_mode<synchronous>, transform_indices = @transform_7, window_bounds = array<i64: 1, 32>}, {pipeline_mode = #tpu.pipeline_mode<synchronous>, transform_indices = @transform_8, window_bounds = array<i64: 1, 32>}, {pipeline_mode = #tpu.pipeline_mode<synchronous>, transform_indices = @transform_9, window_bounds = array<i64: 1, 32>}, {pipeline_mode = #tpu.pipeline_mode<synchronous>, transform_indices = @transform_10, window_bounds = array<i64: 1, 32>}, {pipeline_mode = #tpu.pipeline_mode<synchronous>, transform_indices = @transform_11, window_bounds = array<i64: 1, 32>}, {pipeline_mode = #tpu.pipeline_mode<synchronous>, transform_indices = @transform_12, window_bounds = array<i64: 32, 2048>}, {pipeline_mode = #tpu.pipeline_mode<synchronous>, transform_indices = @transform_13, window_bounds = array<i64: 1, 2048>}, {pipeline_mode = #tpu.pipeline_mode<synchronous>, transform_indices = @transform_14, window_bounds = array<i64: 2048, 32>}, {pipeline_mode = #tpu.pipeline_mode<synchronous>, transform_indices = @transform_15, window_bounds = array<i64: 1, 32>}, {pipeline_mode = #tpu.pipeline_mode<synchronous>, transform_indices = @transform_16, window_bounds = array<i64: 2, 1, 32>}]} {
    %c0 = arith.constant 0 : index
    %c0_0 = arith.constant 0 : index
    %0 = vector.load %arg1[%c0, %c0_0] : memref<16x1xi32, #tpu.memory_space<vmem>>, vector<16x1xi32>
    %1 = tpu.iota {dimensions = array<i32: 1>} : vector<16x50xi32>
    %2 = vector.broadcast %0 : vector<16x1xi32> to vector<16x50xi32>
    %3 = arith.cmpi eq, %1, %2 : vector<16x50xi32>
    %4 = arith.extui %3 : vector<16x50xi1> to vector<16x50xi32>
    %5 = arith.sitofp %4 : vector<16x50xi32> to vector<16x50xf32>
    %c0_1 = arith.constant 0 : index
    %c0_2 = arith.constant 0 : index
    %6 = vector.load %arg4[%c0_1, %c0_2] : memref<50x32xf32, #tpu.memory_space<vmem>>, vector<50x32xf32>
    %cst = arith.constant dense<0.000000e+00> : vector<16x32xf32>
    %7 = tpu.matmul %5, %6, %cst {dimension_numbers = #tpu.dot_dimension_numbers<[1], [0], [0], [1], [0, 0, 1, 1], [], []>} : vector<16x50xf32>, vector<50x32xf32>, vector<16x32xf32> -> vector<16x32xf32>
    %c0_3 = arith.constant 0 : index
    %c0_4 = arith.constant 0 : index
    %8 = vector.load %arg2[%c0_3, %c0_4] : memref<16x32xf32, #tpu.memory_space<vmem>>, vector<16x32xf32>
    %9 = arith.addf %7, %8 : vector<16x32xf32>
    %c0_5 = arith.constant 0 : index
    %c0_6 = arith.constant 0 : index
    %10 = vector.load %arg5[%c0_5, %c0_6] : memref<32x96xbf16, #tpu.memory_space<vmem>>, vector<32x96xbf16>
    %c0_7 = arith.constant 0 : index
    %c0_8 = arith.constant 0 : index
    %11 = vector.load %arg6[%c0_7, %c0_8] : memref<1x96xf32, #tpu.memory_space<vmem>>, vector<1x96xf32>
    %c0_9 = arith.constant 0 : index
    %c0_10 = arith.constant 0 : index
    %c0_11 = arith.constant 0 : index
    %12 = vector.load %arg7[%c0_9, %c0_10, %c0_11] : memref<4x8x32xbf16, #tpu.memory_space<vmem>>, vector<4x8x32xbf16>
    %c0_12 = arith.constant 0 : index
    %c0_13 = arith.constant 0 : index
    %13 = vector.load %arg8[%c0_12, %c0_13] : memref<1x32xf32, #tpu.memory_space<vmem>>, vector<1x32xf32>
    %c0_14 = arith.constant 0 : index
    %c0_15 = arith.constant 0 : index
    %14 = vector.load %arg9[%c0_14, %c0_15] : memref<1x32xf32, #tpu.memory_space<vmem>>, vector<1x32xf32>
    %c0_16 = arith.constant 0 : index
    %c0_17 = arith.constant 0 : index
    %15 = vector.load %arg10[%c0_16, %c0_17] : memref<1x32xf32, #tpu.memory_space<vmem>>, vector<1x32xf32>
    %c0_18 = arith.constant 0 : index
    %c0_19 = arith.constant 0 : index
    %16 = vector.load %arg11[%c0_18, %c0_19] : memref<1x32xf32, #tpu.memory_space<vmem>>, vector<1x32xf32>
    %c0_20 = arith.constant 0 : index
    %c0_21 = arith.constant 0 : index
    %17 = vector.load %arg12[%c0_20, %c0_21] : memref<1x32xf32, #tpu.memory_space<vmem>>, vector<1x32xf32>
    %c0_22 = arith.constant 0 : index
    %c0_23 = arith.constant 0 : index
    %18 = vector.load %arg16[%c0_22, %c0_23] : memref<1x32xf32, #tpu.memory_space<vmem>>, vector<1x32xf32>
    %c0_24 = arith.constant 0 : index
    %c0_25 = arith.constant 0 : index
    %c0_26 = arith.constant 0 : index
    %19 = vector.load %arg3[%c0_24, %c0_25, %c0_26] : memref<2x1x8xf32, #tpu.memory_space<vmem>>, vector<2x1x8xf32>
    %cst_27 = arith.constant -1.000000e+30 : f32
    %20 = vector.broadcast %cst_27 : f32 to vector<2x1x8xf32>
    %21 = arith.mulf %19, %20 : vector<2x1x8xf32>
    %22 = vector.shape_cast %21 : vector<2x1x8xf32> to vector<1x2x1x8xf32>
    %23 = vector.shape_cast %22 : vector<1x2x1x8xf32> to vector<1x2x1x8xf32>
    %24 = vector.broadcast %23 : vector<1x2x1x8xf32> to vector<4x2x8x8xf32>
    %25 = vector.shape_cast %24 : vector<4x2x8x8xf32> to vector<8x8x8xf32>
    %26 = arith.truncf %9 : vector<16x32xf32> to vector<16x32xbf16>
    %cst_28 = arith.constant dense<0.000000e+00> : vector<16x96xf32>
    %27 = tpu.matmul %26, %10, %cst_28 {dimension_numbers = #tpu.dot_dimension_numbers<[1], [0], [0], [1], [0, 0, 1, 1], [], []>} : vector<16x32xbf16>, vector<32x96xbf16>, vector<16x96xf32> -> vector<16x96xf32>
    %28 = vector.broadcast %11 : vector<1x96xf32> to vector<16x96xf32>
    %29 = arith.addf %27, %28 : vector<16x96xf32>
    %30 = vector.extract_strided_slice %29 {offsets = [0, 0], sizes = [16, 32], strides = [1, 1]} : vector<16x96xf32> to vector<16x32xf32>
    %31 = vector.extract_strided_slice %30 {offsets = [0, 0], sizes = [16, 8], strides = [1, 1]} : vector<16x32xf32> to vector<16x8xf32>
    %32 = vector.shape_cast %31 : vector<16x8xf32> to vector<1x16x8xf32>
    %33 = vector.extract_strided_slice %30 {offsets = [0, 8], sizes = [16, 8], strides = [1, 1]} : vector<16x32xf32> to vector<16x8xf32>
    %34 = vector.shape_cast %33 : vector<16x8xf32> to vector<1x16x8xf32>
    %35 = vector.extract_strided_slice %30 {offsets = [0, 16], sizes = [16, 8], strides = [1, 1]} : vector<16x32xf32> to vector<16x8xf32>
    %36 = vector.shape_cast %35 : vector<16x8xf32> to vector<1x16x8xf32>
    %37 = vector.extract_strided_slice %30 {offsets = [0, 24], sizes = [16, 8], strides = [1, 1]} : vector<16x32xf32> to vector<16x8xf32>
    %38 = vector.shape_cast %37 : vector<16x8xf32> to vector<1x16x8xf32>
    %39 = tpu.concatenate %32, %34, %36, %38 in 0 : vector<1x16x8xf32>, vector<1x16x8xf32>, vector<1x16x8xf32>, vector<1x16x8xf32> -> vector<4x16x8xf32>
    %40 = vector.shape_cast %39 : vector<4x16x8xf32> to vector<8x8x8xf32>
    %41 = vector.extract_strided_slice %29 {offsets = [0, 32], sizes = [16, 32], strides = [1, 1]} : vector<16x96xf32> to vector<16x32xf32>
    %42 = vector.extract_strided_slice %41 {offsets = [0, 0], sizes = [16, 8], strides = [1, 1]} : vector<16x32xf32> to vector<16x8xf32>
    %43 = vector.shape_cast %42 : vector<16x8xf32> to vector<1x16x8xf32>
    %44 = vector.extract_strided_slice %41 {offsets = [0, 8], sizes = [16, 8], strides = [1, 1]} : vector<16x32xf32> to vector<16x8xf32>
    %45 = vector.shape_cast %44 : vector<16x8xf32> to vector<1x16x8xf32>
    %46 = vector.extract_strided_slice %41 {offsets = [0, 16], sizes = [16, 8], strides = [1, 1]} : vector<16x32xf32> to vector<16x8xf32>
    %47 = vector.shape_cast %46 : vector<16x8xf32> to vector<1x16x8xf32>
    %48 = vector.extract_strided_slice %41 {offsets = [0, 24], sizes = [16, 8], strides = [1, 1]} : vector<16x32xf32> to vector<16x8xf32>
    %49 = vector.shape_cast %48 : vector<16x8xf32> to vector<1x16x8xf32>
    %50 = tpu.concatenate %43, %45, %47, %49 in 0 : vector<1x16x8xf32>, vector<1x16x8xf32>, vector<1x16x8xf32>, vector<1x16x8xf32> -> vector<4x16x8xf32>
    %51 = vector.shape_cast %50 : vector<4x16x8xf32> to vector<8x8x8xf32>
    %52 = vector.extract_strided_slice %29 {offsets = [0, 64], sizes = [16, 32], strides = [1, 1]} : vector<16x96xf32> to vector<16x32xf32>
    %53 = vector.extract_strided_slice %52 {offsets = [0, 0], sizes = [16, 8], strides = [1, 1]} : vector<16x32xf32> to vector<16x8xf32>
    %54 = vector.shape_cast %53 : vector<16x8xf32> to vector<1x16x8xf32>
    %55 = vector.extract_strided_slice %52 {offsets = [0, 8], sizes = [16, 8], strides = [1, 1]} : vector<16x32xf32> to vector<16x8xf32>
    %56 = vector.shape_cast %55 : vector<16x8xf32> to vector<1x16x8xf32>
    %57 = vector.extract_strided_slice %52 {offsets = [0, 16], sizes = [16, 8], strides = [1, 1]} : vector<16x32xf32> to vector<16x8xf32>
    %58 = vector.shape_cast %57 : vector<16x8xf32> to vector<1x16x8xf32>
    %59 = vector.extract_strided_slice %52 {offsets = [0, 24], sizes = [16, 8], strides = [1, 1]} : vector<16x32xf32> to vector<16x8xf32>
    %60 = vector.shape_cast %59 : vector<16x8xf32> to vector<1x16x8xf32>
    %61 = tpu.concatenate %54, %56, %58, %60 in 0 : vector<1x16x8xf32>, vector<1x16x8xf32>, vector<1x16x8xf32>, vector<1x16x8xf32> -> vector<4x16x8xf32>
    %62 = vector.shape_cast %61 : vector<4x16x8xf32> to vector<8x8x8xf32>
    %63 = arith.truncf %40 : vector<8x8x8xf32> to vector<8x8x8xbf16>
    %64 = arith.truncf %51 : vector<8x8x8xf32> to vector<8x8x8xbf16>
    "tpu.trace_start"() <{level = 10 : i32, message = "bqd,bkd->bqk"}> : () -> ()
    %cst_29 = arith.constant dense<0.000000e+00> : vector<8x8x8xf32>
    %65 = tpu.matmul %63, %64, %cst_29 {dimension_numbers = #tpu.dot_dimension_numbers<[2], [2], [1], [1], [0, 0, 0, 1, 1, 1], [0], [0]>} : vector<8x8x8xbf16>, vector<8x8x8xbf16>, vector<8x8x8xf32> -> vector<8x8x8xf32>
    "tpu.trace_stop"() : () -> ()
    %cst_30 = arith.constant 0.353553385 : f32
    %66 = vector.broadcast %cst_30 : f32 to vector<8x8x8xf32>
    %67 = arith.mulf %65, %66 : vector<8x8x8xf32>
    %68 = arith.addf %67, %25 : vector<8x8x8xf32>
    %cst_31 = arith.constant dense<0xFF800000> : vector<8x8xf32>
    %69 = vector.multi_reduction <maximumf>, %68, %cst_31 [2] : vector<8x8x8xf32> to vector<8x8xf32>
    %70 = vector.shape_cast %69 : vector<8x8xf32> to vector<8x8x1xf32>
    %71 = vector.broadcast %70 : vector<8x8x1xf32> to vector<8x8x8xf32>
    %72 = arith.subf %68, %71 : vector<8x8x8xf32>
    %73 = math.exp %72 : vector<8x8x8xf32>
    %cst_32 = arith.constant dense<0.000000e+00> : vector<8x8xf32>
    %74 = vector.multi_reduction <add>, %73, %cst_32 [2] : vector<8x8x8xf32> to vector<8x8xf32>
    %75 = vector.shape_cast %74 : vector<8x8xf32> to vector<8x8x1xf32>
    %76 = vector.broadcast %75 : vector<8x8x1xf32> to vector<8x8x8xf32>
    %77 = arith.divf %73, %76 : vector<8x8x8xf32>
    %78 = arith.truncf %77 : vector<8x8x8xf32> to vector<8x8x8xbf16>
    %79 = arith.truncf %62 : vector<8x8x8xf32> to vector<8x8x8xbf16>
    "tpu.trace_start"() <{level = 10 : i32, message = "bqk,bkd->bqd"}> : () -> ()
    %cst_33 = arith.constant dense<0.000000e+00> : vector<8x8x8xf32>
    %80 = tpu.matmul %78, %79, %cst_33 {dimension_numbers = #tpu.dot_dimension_numbers<[2], [1], [1], [2], [0, 0, 0, 1, 1, 2], [0], [0]>} : vector<8x8x8xbf16>, vector<8x8x8xbf16>, vector<8x8x8xf32> -> vector<8x8x8xf32>
    "tpu.trace_stop"() : () -> ()
    %81 = vector.shape_cast %80 : vector<8x8x8xf32> to vector<4x16x8xf32>
    %82 = arith.truncf %81 : vector<4x16x8xf32> to vector<4x16x8xbf16>
    "tpu.trace_start"() <{level = 10 : i32, message = "hmd,hde->hme"}> : () -> ()
    %cst_34 = arith.constant dense<0.000000e+00> : vector<4x16x32xf32>
    %83 = tpu.matmul %82, %12, %cst_34 {dimension_numbers = #tpu.dot_dimension_numbers<[2], [1], [1], [2], [0, 0, 0, 1, 1, 2], [0], [0]>} : vector<4x16x8xbf16>, vector<4x8x32xbf16>, vector<4x16x32xf32> -> vector<4x16x32xf32>
    "tpu.trace_stop"() : () -> ()
    %cst_35 = arith.constant dense<0.000000e+00> : vector<16x32xf32>
    %84 = vector.multi_reduction <add>, %83, %cst_35 [0] : vector<4x16x32xf32> to vector<16x32xf32>
    %85 = arith.addf %9, %84 : vector<16x32xf32>
    %86 = vector.broadcast %13 : vector<1x32xf32> to vector<16x32xf32>
    %87 = arith.addf %85, %86 : vector<16x32xf32>
    %cst_36 = arith.constant dense<0.000000e+00> : vector<16xf32>
    %88 = vector.multi_reduction <add>, %87, %cst_36 [1] : vector<16x32xf32> to vector<16xf32>
    %89 = vector.shape_cast %88 : vector<16xf32> to vector<16x1xf32>
    %cst_37 = arith.constant 3.200000e+01 : f32
    %90 = vector.broadcast %cst_37 : f32 to vector<16x1xf32>
    %91 = arith.divf %89, %90 : vector<16x1xf32>
    %92 = vector.broadcast %91 : vector<16x1xf32> to vector<16x32xf32>
    %93 = arith.subf %87, %92 : vector<16x32xf32>
    %94 = arith.mulf %93, %93 : vector<16x32xf32>
    %cst_38 = arith.constant dense<0.000000e+00> : vector<16xf32>
    %95 = vector.multi_reduction <add>, %94, %cst_38 [1] : vector<16x32xf32> to vector<16xf32>
    %96 = vector.shape_cast %95 : vector<16xf32> to vector<16x1xf32>
    %cst_39 = arith.constant 3.200000e+01 : f32
    %97 = vector.broadcast %cst_39 : f32 to vector<16x1xf32>
    %98 = arith.divf %96, %97 : vector<16x1xf32>
    %cst_40 = arith.constant 9.99999974E-6 : f32
    %99 = vector.broadcast %cst_40 : f32 to vector<16x1xf32>
    %100 = arith.addf %98, %99 : vector<16x1xf32>
    %101 = math.rsqrt %100 : vector<16x1xf32>
    %102 = vector.broadcast %101 : vector<16x1xf32> to vector<16x32xf32>
    %103 = arith.mulf %93, %102 : vector<16x32xf32>
    %104 = vector.broadcast %14 : vector<1x32xf32> to vector<16x32xf32>
    %105 = arith.mulf %103, %104 : vector<16x32xf32>
    %106 = vector.broadcast %15 : vector<1x32xf32> to vector<16x32xf32>
    %107 = arith.addf %105, %106 : vector<16x32xf32>
    %108 = arith.truncf %107 : vector<16x32xf32> to vector<16x32xbf16>
    %cst_41 = arith.constant 0.000000e+00 : f32
    %109 = vector.broadcast %cst_41 : f32 to vector<16x32xf32>
    %c0_42 = arith.constant 0 : index
    %c0_43 = arith.constant 0 : index
    %110 = vector.load %arg13[%c0_42, %c0_43] : memref<32x2048xbf16, #tpu.memory_space<vmem>>, vector<32x512xbf16>
    %c0_44 = arith.constant 0 : index
    %c0_45 = arith.constant 0 : index
    %111 = vector.load %arg14[%c0_44, %c0_45] : memref<1x2048xf32, #tpu.memory_space<vmem>>, vector<1x512xf32>
    %cst_46 = arith.constant dense<0.000000e+00> : vector<16x512xf32>
    %112 = tpu.matmul %108, %110, %cst_46 {dimension_numbers = #tpu.dot_dimension_numbers<[1], [0], [0], [1], [0, 0, 1, 1], [], []>} : vector<16x32xbf16>, vector<32x512xbf16>, vector<16x512xf32> -> vector<16x512xf32>
    %113 = vector.broadcast %111 : vector<1x512xf32> to vector<16x512xf32>
    %114 = arith.addf %112, %113 : vector<16x512xf32>
    %cst_47 = arith.constant 0.000000e+00 : f32
    %115 = vector.broadcast %cst_47 : f32 to vector<16x512xf32>
    %116 = arith.maximumf %114, %115 : vector<16x512xf32>
    %117 = arith.truncf %116 : vector<16x512xf32> to vector<16x512xbf16>
    %c0_48 = arith.constant 0 : index
    %c0_49 = arith.constant 0 : index
    %118 = vector.load %arg15[%c0_48, %c0_49] : memref<2048x32xbf16, #tpu.memory_space<vmem>>, vector<512x32xbf16>
    %cst_50 = arith.constant dense<0.000000e+00> : vector<16x32xf32>
    %119 = tpu.matmul %117, %118, %cst_50 {dimension_numbers = #tpu.dot_dimension_numbers<[1], [0], [0], [1], [0, 0, 1, 1], [], []>} : vector<16x512xbf16>, vector<512x32xbf16>, vector<16x32xf32> -> vector<16x32xf32>
    %120 = arith.addf %109, %119 : vector<16x32xf32>
    %c0_51 = arith.constant 0 : index
    %c512 = arith.constant 512 : index
    %121 = vector.load %arg13[%c0_51, %c512] : memref<32x2048xbf16, #tpu.memory_space<vmem>>, vector<32x512xbf16>
    %c0_52 = arith.constant 0 : index
    %c512_53 = arith.constant 512 : index
    %122 = vector.load %arg14[%c0_52, %c512_53] : memref<1x2048xf32, #tpu.memory_space<vmem>>, vector<1x512xf32>
    %cst_54 = arith.constant dense<0.000000e+00> : vector<16x512xf32>
    %123 = tpu.matmul %108, %121, %cst_54 {dimension_numbers = #tpu.dot_dimension_numbers<[1], [0], [0], [1], [0, 0, 1, 1], [], []>} : vector<16x32xbf16>, vector<32x512xbf16>, vector<16x512xf32> -> vector<16x512xf32>
    %124 = vector.broadcast %122 : vector<1x512xf32> to vector<16x512xf32>
    %125 = arith.addf %123, %124 : vector<16x512xf32>
    %cst_55 = arith.constant 0.000000e+00 : f32
    %126 = vector.broadcast %cst_55 : f32 to vector<16x512xf32>
    %127 = arith.maximumf %125, %126 : vector<16x512xf32>
    %128 = arith.truncf %127 : vector<16x512xf32> to vector<16x512xbf16>
    %c512_56 = arith.constant 512 : index
    %c0_57 = arith.constant 0 : index
    %129 = vector.load %arg15[%c512_56, %c0_57] : memref<2048x32xbf16, #tpu.memory_space<vmem>>, vector<512x32xbf16>
    %cst_58 = arith.constant dense<0.000000e+00> : vector<16x32xf32>
    %130 = tpu.matmul %128, %129, %cst_58 {dimension_numbers = #tpu.dot_dimension_numbers<[1], [0], [0], [1], [0, 0, 1, 1], [], []>} : vector<16x512xbf16>, vector<512x32xbf16>, vector<16x32xf32> -> vector<16x32xf32>
    %131 = arith.addf %120, %130 : vector<16x32xf32>
    %c0_59 = arith.constant 0 : index
    %c1024 = arith.constant 1024 : index
    %132 = vector.load %arg13[%c0_59, %c1024] : memref<32x2048xbf16, #tpu.memory_space<vmem>>, vector<32x512xbf16>
    %c0_60 = arith.constant 0 : index
    %c1024_61 = arith.constant 1024 : index
    %133 = vector.load %arg14[%c0_60, %c1024_61] : memref<1x2048xf32, #tpu.memory_space<vmem>>, vector<1x512xf32>
    %cst_62 = arith.constant dense<0.000000e+00> : vector<16x512xf32>
    %134 = tpu.matmul %108, %132, %cst_62 {dimension_numbers = #tpu.dot_dimension_numbers<[1], [0], [0], [1], [0, 0, 1, 1], [], []>} : vector<16x32xbf16>, vector<32x512xbf16>, vector<16x512xf32> -> vector<16x512xf32>
    %135 = vector.broadcast %133 : vector<1x512xf32> to vector<16x512xf32>
    %136 = arith.addf %134, %135 : vector<16x512xf32>
    %cst_63 = arith.constant 0.000000e+00 : f32
    %137 = vector.broadcast %cst_63 : f32 to vector<16x512xf32>
    %138 = arith.maximumf %136, %137 : vector<16x512xf32>
    %139 = arith.truncf %138 : vector<16x512xf32> to vector<16x512xbf16>
    %c1024_64 = arith.constant 1024 : index
    %c0_65 = arith.constant 0 : index
    %140 = vector.load %arg15[%c1024_64, %c0_65] : memref<2048x32xbf16, #tpu.memory_space<vmem>>, vector<512x32xbf16>
    %cst_66 = arith.constant dense<0.000000e+00> : vector<16x32xf32>
    %141 = tpu.matmul %139, %140, %cst_66 {dimension_numbers = #tpu.dot_dimension_numbers<[1], [0], [0], [1], [0, 0, 1, 1], [], []>} : vector<16x512xbf16>, vector<512x32xbf16>, vector<16x32xf32> -> vector<16x32xf32>
    %142 = arith.addf %131, %141 : vector<16x32xf32>
    %c0_67 = arith.constant 0 : index
    %c1536 = arith.constant 1536 : index
    %143 = vector.load %arg13[%c0_67, %c1536] : memref<32x2048xbf16, #tpu.memory_space<vmem>>, vector<32x512xbf16>
    %c0_68 = arith.constant 0 : index
    %c1536_69 = arith.constant 1536 : index
    %144 = vector.load %arg14[%c0_68, %c1536_69] : memref<1x2048xf32, #tpu.memory_space<vmem>>, vector<1x512xf32>
    %cst_70 = arith.constant dense<0.000000e+00> : vector<16x512xf32>
    %145 = tpu.matmul %108, %143, %cst_70 {dimension_numbers = #tpu.dot_dimension_numbers<[1], [0], [0], [1], [0, 0, 1, 1], [], []>} : vector<16x32xbf16>, vector<32x512xbf16>, vector<16x512xf32> -> vector<16x512xf32>
    %146 = vector.broadcast %144 : vector<1x512xf32> to vector<16x512xf32>
    %147 = arith.addf %145, %146 : vector<16x512xf32>
    %cst_71 = arith.constant 0.000000e+00 : f32
    %148 = vector.broadcast %cst_71 : f32 to vector<16x512xf32>
    %149 = arith.maximumf %147, %148 : vector<16x512xf32>
    %150 = arith.truncf %149 : vector<16x512xf32> to vector<16x512xbf16>
    %c1536_72 = arith.constant 1536 : index
    %c0_73 = arith.constant 0 : index
    %151 = vector.load %arg15[%c1536_72, %c0_73] : memref<2048x32xbf16, #tpu.memory_space<vmem>>, vector<512x32xbf16>
    %cst_74 = arith.constant dense<0.000000e+00> : vector<16x32xf32>
    %152 = tpu.matmul %150, %151, %cst_74 {dimension_numbers = #tpu.dot_dimension_numbers<[1], [0], [0], [1], [0, 0, 1, 1], [], []>} : vector<16x512xbf16>, vector<512x32xbf16>, vector<16x32xf32> -> vector<16x32xf32>
    %153 = arith.addf %142, %152 : vector<16x32xf32>
    %154 = arith.addf %107, %153 : vector<16x32xf32>
    %155 = vector.broadcast %18 : vector<1x32xf32> to vector<16x32xf32>
    %156 = arith.addf %154, %155 : vector<16x32xf32>
    %cst_75 = arith.constant dense<0.000000e+00> : vector<16xf32>
    %157 = vector.multi_reduction <add>, %156, %cst_75 [1] : vector<16x32xf32> to vector<16xf32>
    %158 = vector.shape_cast %157 : vector<16xf32> to vector<16x1xf32>
    %cst_76 = arith.constant 3.200000e+01 : f32
    %159 = vector.broadcast %cst_76 : f32 to vector<16x1xf32>
    %160 = arith.divf %158, %159 : vector<16x1xf32>
    %161 = vector.broadcast %160 : vector<16x1xf32> to vector<16x32xf32>
    %162 = arith.subf %156, %161 : vector<16x32xf32>
    %163 = arith.mulf %162, %162 : vector<16x32xf32>
    %cst_77 = arith.constant dense<0.000000e+00> : vector<16xf32>
    %164 = vector.multi_reduction <add>, %163, %cst_77 [1] : vector<16x32xf32> to vector<16xf32>
    %165 = vector.shape_cast %164 : vector<16xf32> to vector<16x1xf32>
    %cst_78 = arith.constant 3.200000e+01 : f32
    %166 = vector.broadcast %cst_78 : f32 to vector<16x1xf32>
    %167 = arith.divf %165, %166 : vector<16x1xf32>
    %cst_79 = arith.constant 9.99999974E-6 : f32
    %168 = vector.broadcast %cst_79 : f32 to vector<16x1xf32>
    %169 = arith.addf %167, %168 : vector<16x1xf32>
    %170 = math.rsqrt %169 : vector<16x1xf32>
    %171 = vector.broadcast %170 : vector<16x1xf32> to vector<16x32xf32>
    %172 = arith.mulf %162, %171 : vector<16x32xf32>
    %173 = vector.broadcast %16 : vector<1x32xf32> to vector<16x32xf32>
    %174 = arith.mulf %172, %173 : vector<16x32xf32>
    %175 = vector.broadcast %17 : vector<1x32xf32> to vector<16x32xf32>
    %176 = arith.addf %174, %175 : vector<16x32xf32>
    %177 = arith.truncf %176 : vector<16x32xf32> to vector<16x32xbf16>
    %cst_80 = arith.constant dense<0.000000e+00> : vector<16x96xf32>
    %178 = tpu.matmul %177, %10, %cst_80 {dimension_numbers = #tpu.dot_dimension_numbers<[1], [0], [0], [1], [0, 0, 1, 1], [], []>} : vector<16x32xbf16>, vector<32x96xbf16>, vector<16x96xf32> -> vector<16x96xf32>
    %179 = vector.broadcast %11 : vector<1x96xf32> to vector<16x96xf32>
    %180 = arith.addf %178, %179 : vector<16x96xf32>
    %181 = vector.extract_strided_slice %180 {offsets = [0, 0], sizes = [16, 32], strides = [1, 1]} : vector<16x96xf32> to vector<16x32xf32>
    %182 = vector.extract_strided_slice %181 {offsets = [0, 0], sizes = [16, 8], strides = [1, 1]} : vector<16x32xf32> to vector<16x8xf32>
    %183 = vector.shape_cast %182 : vector<16x8xf32> to vector<1x16x8xf32>
    %184 = vector.extract_strided_slice %181 {offsets = [0, 8], sizes = [16, 8], strides = [1, 1]} : vector<16x32xf32> to vector<16x8xf32>
    %185 = vector.shape_cast %184 : vector<16x8xf32> to vector<1x16x8xf32>
    %186 = vector.extract_strided_slice %181 {offsets = [0, 16], sizes = [16, 8], strides = [1, 1]} : vector<16x32xf32> to vector<16x8xf32>
    %187 = vector.shape_cast %186 : vector<16x8xf32> to vector<1x16x8xf32>
    %188 = vector.extract_strided_slice %181 {offsets = [0, 24], sizes = [16, 8], strides = [1, 1]} : vector<16x32xf32> to vector<16x8xf32>
    %189 = vector.shape_cast %188 : vector<16x8xf32> to vector<1x16x8xf32>
    %190 = tpu.concatenate %183, %185, %187, %189 in 0 : vector<1x16x8xf32>, vector<1x16x8xf32>, vector<1x16x8xf32>, vector<1x16x8xf32> -> vector<4x16x8xf32>
    %191 = vector.shape_cast %190 : vector<4x16x8xf32> to vector<8x8x8xf32>
    %192 = vector.extract_strided_slice %180 {offsets = [0, 32], sizes = [16, 32], strides = [1, 1]} : vector<16x96xf32> to vector<16x32xf32>
    %193 = vector.extract_strided_slice %192 {offsets = [0, 0], sizes = [16, 8], strides = [1, 1]} : vector<16x32xf32> to vector<16x8xf32>
    %194 = vector.shape_cast %193 : vector<16x8xf32> to vector<1x16x8xf32>
    %195 = vector.extract_strided_slice %192 {offsets = [0, 8], sizes = [16, 8], strides = [1, 1]} : vector<16x32xf32> to vector<16x8xf32>
    %196 = vector.shape_cast %195 : vector<16x8xf32> to vector<1x16x8xf32>
    %197 = vector.extract_strided_slice %192 {offsets = [0, 16], sizes = [16, 8], strides = [1, 1]} : vector<16x32xf32> to vector<16x8xf32>
    %198 = vector.shape_cast %197 : vector<16x8xf32> to vector<1x16x8xf32>
    %199 = vector.extract_strided_slice %192 {offsets = [0, 24], sizes = [16, 8], strides = [1, 1]} : vector<16x32xf32> to vector<16x8xf32>
    %200 = vector.shape_cast %199 : vector<16x8xf32> to vector<1x16x8xf32>
    %201 = tpu.concatenate %194, %196, %198, %200 in 0 : vector<1x16x8xf32>, vector<1x16x8xf32>, vector<1x16x8xf32>, vector<1x16x8xf32> -> vector<4x16x8xf32>
    %202 = vector.shape_cast %201 : vector<4x16x8xf32> to vector<8x8x8xf32>
    %203 = vector.extract_strided_slice %180 {offsets = [0, 64], sizes = [16, 32], strides = [1, 1]} : vector<16x96xf32> to vector<16x32xf32>
    %204 = vector.extract_strided_slice %203 {offsets = [0, 0], sizes = [16, 8], strides = [1, 1]} : vector<16x32xf32> to vector<16x8xf32>
    %205 = vector.shape_cast %204 : vector<16x8xf32> to vector<1x16x8xf32>
    %206 = vector.extract_strided_slice %203 {offsets = [0, 8], sizes = [16, 8], strides = [1, 1]} : vector<16x32xf32> to vector<16x8xf32>
    %207 = vector.shape_cast %206 : vector<16x8xf32> to vector<1x16x8xf32>
    %208 = vector.extract_strided_slice %203 {offsets = [0, 16], sizes = [16, 8], strides = [1, 1]} : vector<16x32xf32> to vector<16x8xf32>
    %209 = vector.shape_cast %208 : vector<16x8xf32> to vector<1x16x8xf32>
    %210 = vector.extract_strided_slice %203 {offsets = [0, 24], sizes = [16, 8], strides = [1, 1]} : vector<16x32xf32> to vector<16x8xf32>
    %211 = vector.shape_cast %210 : vector<16x8xf32> to vector<1x16x8xf32>
    %212 = tpu.concatenate %205, %207, %209, %211 in 0 : vector<1x16x8xf32>, vector<1x16x8xf32>, vector<1x16x8xf32>, vector<1x16x8xf32> -> vector<4x16x8xf32>
    %213 = vector.shape_cast %212 : vector<4x16x8xf32> to vector<8x8x8xf32>
    %214 = arith.truncf %191 : vector<8x8x8xf32> to vector<8x8x8xbf16>
    %215 = arith.truncf %202 : vector<8x8x8xf32> to vector<8x8x8xbf16>
    "tpu.trace_start"() <{level = 10 : i32, message = "bqd,bkd->bqk"}> : () -> ()
    %cst_81 = arith.constant dense<0.000000e+00> : vector<8x8x8xf32>
    %216 = tpu.matmul %214, %215, %cst_81 {dimension_numbers = #tpu.dot_dimension_numbers<[2], [2], [1], [1], [0, 0, 0, 1, 1, 1], [0], [0]>} : vector<8x8x8xbf16>, vector<8x8x8xbf16>, vector<8x8x8xf32> -> vector<8x8x8xf32>
    "tpu.trace_stop"() : () -> ()
    %cst_82 = arith.constant 0.353553385 : f32
    %217 = vector.broadcast %cst_82 : f32 to vector<8x8x8xf32>
    %218 = arith.mulf %216, %217 : vector<8x8x8xf32>
    %219 = arith.addf %218, %25 : vector<8x8x8xf32>
    %cst_83 = arith.constant dense<0xFF800000> : vector<8x8xf32>
    %220 = vector.multi_reduction <maximumf>, %219, %cst_83 [2] : vector<8x8x8xf32> to vector<8x8xf32>
    %221 = vector.shape_cast %220 : vector<8x8xf32> to vector<8x8x1xf32>
    %222 = vector.broadcast %221 : vector<8x8x1xf32> to vector<8x8x8xf32>
    %223 = arith.subf %219, %222 : vector<8x8x8xf32>
    %224 = math.exp %223 : vector<8x8x8xf32>
    %cst_84 = arith.constant dense<0.000000e+00> : vector<8x8xf32>
    %225 = vector.multi_reduction <add>, %224, %cst_84 [2] : vector<8x8x8xf32> to vector<8x8xf32>
    %226 = vector.shape_cast %225 : vector<8x8xf32> to vector<8x8x1xf32>
    %227 = vector.broadcast %226 : vector<8x8x1xf32> to vector<8x8x8xf32>
    %228 = arith.divf %224, %227 : vector<8x8x8xf32>
    %229 = arith.truncf %228 : vector<8x8x8xf32> to vector<8x8x8xbf16>
    %230 = arith.truncf %213 : vector<8x8x8xf32> to vector<8x8x8xbf16>
    "tpu.trace_start"() <{level = 10 : i32, message = "bqk,bkd->bqd"}> : () -> ()
    %cst_85 = arith.constant dense<0.000000e+00> : vector<8x8x8xf32>
    %231 = tpu.matmul %229, %230, %cst_85 {dimension_numbers = #tpu.dot_dimension_numbers<[2], [1], [1], [2], [0, 0, 0, 1, 1, 2], [0], [0]>} : vector<8x8x8xbf16>, vector<8x8x8xbf16>, vector<8x8x8xf32> -> vector<8x8x8xf32>
    "tpu.trace_stop"() : () -> ()
    %232 = vector.shape_cast %231 : vector<8x8x8xf32> to vector<4x16x8xf32>
    %233 = arith.truncf %232 : vector<4x16x8xf32> to vector<4x16x8xbf16>
    "tpu.trace_start"() <{level = 10 : i32, message = "hmd,hde->hme"}> : () -> ()
    %cst_86 = arith.constant dense<0.000000e+00> : vector<4x16x32xf32>
    %234 = tpu.matmul %233, %12, %cst_86 {dimension_numbers = #tpu.dot_dimension_numbers<[2], [1], [1], [2], [0, 0, 0, 1, 1, 2], [0], [0]>} : vector<4x16x8xbf16>, vector<4x8x32xbf16>, vector<4x16x32xf32> -> vector<4x16x32xf32>
    "tpu.trace_stop"() : () -> ()
    %cst_87 = arith.constant dense<0.000000e+00> : vector<16x32xf32>
    %235 = vector.multi_reduction <add>, %234, %cst_87 [0] : vector<4x16x32xf32> to vector<16x32xf32>
    %236 = arith.addf %176, %235 : vector<16x32xf32>
    %237 = vector.broadcast %13 : vector<1x32xf32> to vector<16x32xf32>
    %238 = arith.addf %236, %237 : vector<16x32xf32>
    %cst_88 = arith.constant dense<0.000000e+00> : vector<16xf32>
    %239 = vector.multi_reduction <add>, %238, %cst_88 [1] : vector<16x32xf32> to vector<16xf32>
    %240 = vector.shape_cast %239 : vector<16xf32> to vector<16x1xf32>
    %cst_89 = arith.constant 3.200000e+01 : f32
    %241 = vector.broadcast %cst_89 : f32 to vector<16x1xf32>
    %242 = arith.divf %240, %241 : vector<16x1xf32>
    %243 = vector.broadcast %242 : vector<16x1xf32> to vector<16x32xf32>
    %244 = arith.subf %238, %243 : vector<16x32xf32>
    %245 = arith.mulf %244, %244 : vector<16x32xf32>
    %cst_90 = arith.constant dense<0.000000e+00> : vector<16xf32>
    %246 = vector.multi_reduction <add>, %245, %cst_90 [1] : vector<16x32xf32> to vector<16xf32>
    %247 = vector.shape_cast %246 : vector<16xf32> to vector<16x1xf32>
    %cst_91 = arith.constant 3.200000e+01 : f32
    %248 = vector.broadcast %cst_91 : f32 to vector<16x1xf32>
    %249 = arith.divf %247, %248 : vector<16x1xf32>
    %cst_92 = arith.constant 9.99999974E-6 : f32
    %250 = vector.broadcast %cst_92 : f32 to vector<16x1xf32>
    %251 = arith.addf %249, %250 : vector<16x1xf32>
    %252 = math.rsqrt %251 : vector<16x1xf32>
    %253 = vector.broadcast %252 : vector<16x1xf32> to vector<16x32xf32>
    %254 = arith.mulf %244, %253 : vector<16x32xf32>
    %255 = vector.broadcast %14 : vector<1x32xf32> to vector<16x32xf32>
    %256 = arith.mulf %254, %255 : vector<16x32xf32>
    %257 = vector.broadcast %15 : vector<1x32xf32> to vector<16x32xf32>
    %258 = arith.addf %256, %257 : vector<16x32xf32>
    %259 = arith.truncf %258 : vector<16x32xf32> to vector<16x32xbf16>
    %cst_93 = arith.constant 0.000000e+00 : f32
    %260 = vector.broadcast %cst_93 : f32 to vector<16x32xf32>
    %c0_94 = arith.constant 0 : index
    %c0_95 = arith.constant 0 : index
    %261 = vector.load %arg13[%c0_94, %c0_95] : memref<32x2048xbf16, #tpu.memory_space<vmem>>, vector<32x512xbf16>
    %c0_96 = arith.constant 0 : index
    %c0_97 = arith.constant 0 : index
    %262 = vector.load %arg14[%c0_96, %c0_97] : memref<1x2048xf32, #tpu.memory_space<vmem>>, vector<1x512xf32>
    %cst_98 = arith.constant dense<0.000000e+00> : vector<16x512xf32>
    %263 = tpu.matmul %259, %261, %cst_98 {dimension_numbers = #tpu.dot_dimension_numbers<[1], [0], [0], [1], [0, 0, 1, 1], [], []>} : vector<16x32xbf16>, vector<32x512xbf16>, vector<16x512xf32> -> vector<16x512xf32>
    %264 = vector.broadcast %262 : vector<1x512xf32> to vector<16x512xf32>
    %265 = arith.addf %263, %264 : vector<16x512xf32>
    %cst_99 = arith.constant 0.000000e+00 : f32
    %266 = vector.broadcast %cst_99 : f32 to vector<16x512xf32>
    %267 = arith.maximumf %265, %266 : vector<16x512xf32>
    %268 = arith.truncf %267 : vector<16x512xf32> to vector<16x512xbf16>
    %c0_100 = arith.constant 0 : index
    %c0_101 = arith.constant 0 : index
    %269 = vector.load %arg15[%c0_100, %c0_101] : memref<2048x32xbf16, #tpu.memory_space<vmem>>, vector<512x32xbf16>
    %cst_102 = arith.constant dense<0.000000e+00> : vector<16x32xf32>
    %270 = tpu.matmul %268, %269, %cst_102 {dimension_numbers = #tpu.dot_dimension_numbers<[1], [0], [0], [1], [0, 0, 1, 1], [], []>} : vector<16x512xbf16>, vector<512x32xbf16>, vector<16x32xf32> -> vector<16x32xf32>
    %271 = arith.addf %260, %270 : vector<16x32xf32>
    %c0_103 = arith.constant 0 : index
    %c512_104 = arith.constant 512 : index
    %272 = vector.load %arg13[%c0_103, %c512_104] : memref<32x2048xbf16, #tpu.memory_space<vmem>>, vector<32x512xbf16>
    %c0_105 = arith.constant 0 : index
    %c512_106 = arith.constant 512 : index
    %273 = vector.load %arg14[%c0_105, %c512_106] : memref<1x2048xf32, #tpu.memory_space<vmem>>, vector<1x512xf32>
    %cst_107 = arith.constant dense<0.000000e+00> : vector<16x512xf32>
    %274 = tpu.matmul %259, %272, %cst_107 {dimension_numbers = #tpu.dot_dimension_numbers<[1], [0], [0], [1], [0, 0, 1, 1], [], []>} : vector<16x32xbf16>, vector<32x512xbf16>, vector<16x512xf32> -> vector<16x512xf32>
    %275 = vector.broadcast %273 : vector<1x512xf32> to vector<16x512xf32>
    %276 = arith.addf %274, %275 : vector<16x512xf32>
    %cst_108 = arith.constant 0.000000e+00 : f32
    %277 = vector.broadcast %cst_108 : f32 to vector<16x512xf32>
    %278 = arith.maximumf %276, %277 : vector<16x512xf32>
    %279 = arith.truncf %278 : vector<16x512xf32> to vector<16x512xbf16>
    %c512_109 = arith.constant 512 : index
    %c0_110 = arith.constant 0 : index
    %280 = vector.load %arg15[%c512_109, %c0_110] : memref<2048x32xbf16, #tpu.memory_space<vmem>>, vector<512x32xbf16>
    %cst_111 = arith.constant dense<0.000000e+00> : vector<16x32xf32>
    %281 = tpu.matmul %279, %280, %cst_111 {dimension_numbers = #tpu.dot_dimension_numbers<[1], [0], [0], [1], [0, 0, 1, 1], [], []>} : vector<16x512xbf16>, vector<512x32xbf16>, vector<16x32xf32> -> vector<16x32xf32>
    %282 = arith.addf %271, %281 : vector<16x32xf32>
    %c0_112 = arith.constant 0 : index
    %c1024_113 = arith.constant 1024 : index
    %283 = vector.load %arg13[%c0_112, %c1024_113] : memref<32x2048xbf16, #tpu.memory_space<vmem>>, vector<32x512xbf16>
    %c0_114 = arith.constant 0 : index
    %c1024_115 = arith.constant 1024 : index
    %284 = vector.load %arg14[%c0_114, %c1024_115] : memref<1x2048xf32, #tpu.memory_space<vmem>>, vector<1x512xf32>
    %cst_116 = arith.constant dense<0.000000e+00> : vector<16x512xf32>
    %285 = tpu.matmul %259, %283, %cst_116 {dimension_numbers = #tpu.dot_dimension_numbers<[1], [0], [0], [1], [0, 0, 1, 1], [], []>} : vector<16x32xbf16>, vector<32x512xbf16>, vector<16x512xf32> -> vector<16x512xf32>
    %286 = vector.broadcast %284 : vector<1x512xf32> to vector<16x512xf32>
    %287 = arith.addf %285, %286 : vector<16x512xf32>
    %cst_117 = arith.constant 0.000000e+00 : f32
    %288 = vector.broadcast %cst_117 : f32 to vector<16x512xf32>
    %289 = arith.maximumf %287, %288 : vector<16x512xf32>
    %290 = arith.truncf %289 : vector<16x512xf32> to vector<16x512xbf16>
    %c1024_118 = arith.constant 1024 : index
    %c0_119 = arith.constant 0 : index
    %291 = vector.load %arg15[%c1024_118, %c0_119] : memref<2048x32xbf16, #tpu.memory_space<vmem>>, vector<512x32xbf16>
    %cst_120 = arith.constant dense<0.000000e+00> : vector<16x32xf32>
    %292 = tpu.matmul %290, %291, %cst_120 {dimension_numbers = #tpu.dot_dimension_numbers<[1], [0], [0], [1], [0, 0, 1, 1], [], []>} : vector<16x512xbf16>, vector<512x32xbf16>, vector<16x32xf32> -> vector<16x32xf32>
    %293 = arith.addf %282, %292 : vector<16x32xf32>
    %c0_121 = arith.constant 0 : index
    %c1536_122 = arith.constant 1536 : index
    %294 = vector.load %arg13[%c0_121, %c1536_122] : memref<32x2048xbf16, #tpu.memory_space<vmem>>, vector<32x512xbf16>
    %c0_123 = arith.constant 0 : index
    %c1536_124 = arith.constant 1536 : index
    %295 = vector.load %arg14[%c0_123, %c1536_124] : memref<1x2048xf32, #tpu.memory_space<vmem>>, vector<1x512xf32>
    %cst_125 = arith.constant dense<0.000000e+00> : vector<16x512xf32>
    %296 = tpu.matmul %259, %294, %cst_125 {dimension_numbers = #tpu.dot_dimension_numbers<[1], [0], [0], [1], [0, 0, 1, 1], [], []>} : vector<16x32xbf16>, vector<32x512xbf16>, vector<16x512xf32> -> vector<16x512xf32>
    %297 = vector.broadcast %295 : vector<1x512xf32> to vector<16x512xf32>
    %298 = arith.addf %296, %297 : vector<16x512xf32>
    %cst_126 = arith.constant 0.000000e+00 : f32
    %299 = vector.broadcast %cst_126 : f32 to vector<16x512xf32>
    %300 = arith.maximumf %298, %299 : vector<16x512xf32>
    %301 = arith.truncf %300 : vector<16x512xf32> to vector<16x512xbf16>
    %c1536_127 = arith.constant 1536 : index
    %c0_128 = arith.constant 0 : index
    %302 = vector.load %arg15[%c1536_127, %c0_128] : memref<2048x32xbf16, #tpu.memory_space<vmem>>, vector<512x32xbf16>
    %cst_129 = arith.constant dense<0.000000e+00> : vector<16x32xf32>
    %303 = tpu.matmul %301, %302, %cst_129 {dimension_numbers = #tpu.dot_dimension_numbers<[1], [0], [0], [1], [0, 0, 1, 1], [], []>} : vector<16x512xbf16>, vector<512x32xbf16>, vector<16x32xf32> -> vector<16x32xf32>
    %304 = arith.addf %293, %303 : vector<16x32xf32>
    %305 = arith.addf %258, %304 : vector<16x32xf32>
    %306 = vector.broadcast %18 : vector<1x32xf32> to vector<16x32xf32>
    %307 = arith.addf %305, %306 : vector<16x32xf32>
    %cst_130 = arith.constant dense<0.000000e+00> : vector<16xf32>
    %308 = vector.multi_reduction <add>, %307, %cst_130 [1] : vector<16x32xf32> to vector<16xf32>
    %309 = vector.shape_cast %308 : vector<16xf32> to vector<16x1xf32>
    %cst_131 = arith.constant 3.200000e+01 : f32
    %310 = vector.broadcast %cst_131 : f32 to vector<16x1xf32>
    %311 = arith.divf %309, %310 : vector<16x1xf32>
    %312 = vector.broadcast %311 : vector<16x1xf32> to vector<16x32xf32>
    %313 = arith.subf %307, %312 : vector<16x32xf32>
    %314 = arith.mulf %313, %313 : vector<16x32xf32>
    %cst_132 = arith.constant dense<0.000000e+00> : vector<16xf32>
    %315 = vector.multi_reduction <add>, %314, %cst_132 [1] : vector<16x32xf32> to vector<16xf32>
    %316 = vector.shape_cast %315 : vector<16xf32> to vector<16x1xf32>
    %cst_133 = arith.constant 3.200000e+01 : f32
    %317 = vector.broadcast %cst_133 : f32 to vector<16x1xf32>
    %318 = arith.divf %316, %317 : vector<16x1xf32>
    %cst_134 = arith.constant 9.99999974E-6 : f32
    %319 = vector.broadcast %cst_134 : f32 to vector<16x1xf32>
    %320 = arith.addf %318, %319 : vector<16x1xf32>
    %321 = math.rsqrt %320 : vector<16x1xf32>
    %322 = vector.broadcast %321 : vector<16x1xf32> to vector<16x32xf32>
    %323 = arith.mulf %313, %322 : vector<16x32xf32>
    %324 = vector.broadcast %16 : vector<1x32xf32> to vector<16x32xf32>
    %325 = arith.mulf %323, %324 : vector<16x32xf32>
    %326 = vector.broadcast %17 : vector<1x32xf32> to vector<16x32xf32>
    %327 = arith.addf %325, %326 : vector<16x32xf32>
    %cst_135 = arith.constant 1.000000e+00 : f32
    %328 = vector.broadcast %cst_135 : f32 to vector<2x1x8xf32>
    %329 = arith.subf %328, %19 : vector<2x1x8xf32>
    %330 = vector.shape_cast %327 : vector<16x32xf32> to vector<2x8x32xf32>
    "tpu.trace_start"() <{level = 10 : i32, message = "bos,bsd->bod"}> : () -> ()
    %cst_136 = arith.constant dense<0.000000e+00> : vector<2x1x32xf32>
    %331 = tpu.matmul %329, %330, %cst_136 {dimension_numbers = #tpu.dot_dimension_numbers<[2], [1], [1], [2], [0, 0, 0, 1, 1, 2], [0], [0]>} : vector<2x1x8xf32>, vector<2x8x32xf32>, vector<2x1x32xf32> -> vector<2x1x32xf32>
    "tpu.trace_stop"() : () -> ()
    %cst_137 = arith.constant dense<0.000000e+00> : vector<2x1xf32>
    %332 = vector.multi_reduction <add>, %329, %cst_137 [2] : vector<2x1x8xf32> to vector<2x1xf32>
    %333 = vector.shape_cast %332 : vector<2x1xf32> to vector<2x1x1xf32>
    %cst_138 = arith.constant 1.000000e+00 : f32
    %334 = vector.broadcast %cst_138 : f32 to vector<2x1x1xf32>
    %335 = arith.maximumf %333, %334 : vector<2x1x1xf32>
    %336 = vector.broadcast %335 : vector<2x1x1xf32> to vector<2x1x32xf32>
    %337 = arith.divf %331, %336 : vector<2x1x32xf32>
    %c0_139 = arith.constant 0 : index
    %c0_140 = arith.constant 0 : index
    %c0_141 = arith.constant 0 : index
    %338 = vector.load %arg17[%c0_139, %c0_140, %c0_141] : memref<2x1x32xf32, #tpu.memory_space<vmem>>, vector<2x1x32xf32>
    tpu.vector_store %arg17[%c0_139, %c0_140, %c0_141], %337 {strides = array<i32>} : memref<2x1x32xf32, #tpu.memory_space<vmem>>, vector<2x1x32xf32>,
    return
  }
  func.func @transform_0(%arg0: i32) -> (i32, i32) {
    %c0_i32 = arith.constant 0 : i32
    %c0_i32_0 = arith.constant 0 : i32
    %c0_i32_1 = arith.constant 0 : i32
    return %c0_i32, %c0_i32_0 : i32, i32
  }
  func.func @transform_1(%arg0: i32) -> (i32, i32) {
    %c0_i32 = arith.constant 0 : i32
    %c0_i32_0 = arith.constant 0 : i32
    %c0_i32_1 = arith.constant 0 : i32
    return %c0_i32, %c0_i32_0 : i32, i32
  }
  func.func @transform_2(%arg0: i32) -> (i32, i32, i32) {
    %c0_i32 = arith.constant 0 : i32
    %c0_i32_0 = arith.constant 0 : i32
    %c0_i32_1 = arith.constant 0 : i32
    %c0_i32_2 = arith.constant 0 : i32
    return %c0_i32, %c0_i32_0, %c0_i32_1 : i32, i32, i32
  }
  func.func @transform_3(%arg0: i32) -> (i32, i32) {
    %c0_i32 = arith.constant 0 : i32
    %c0_i32_0 = arith.constant 0 : i32
    %c0_i32_1 = arith.constant 0 : i32
    return %c0_i32, %c0_i32_0 : i32, i32
  }
  func.func @transform_4(%arg0: i32) -> (i32, i32) {
    %c0_i32 = arith.constant 0 : i32
    %c0_i32_0 = arith.constant 0 : i32
    %c0_i32_1 = arith.constant 0 : i32
    return %c0_i32, %c0_i32_0 : i32, i32
  }
  func.func @transform_5(%arg0: i32) -> (i32, i32) {
    %c0_i32 = arith.constant 0 : i32
    %c0_i32_0 = arith.constant 0 : i32
    %c0_i32_1 = arith.constant 0 : i32
    return %c0_i32, %c0_i32_0 : i32, i32
  }
  func.func @transform_6(%arg0: i32) -> (i32, i32, i32) {
    %c0_i32 = arith.constant 0 : i32
    %c0_i32_0 = arith.constant 0 : i32
    %c0_i32_1 = arith.constant 0 : i32
    %c0_i32_2 = arith.constant 0 : i32
    return %c0_i32, %c0_i32_0, %c0_i32_1 : i32, i32, i32
  }
  func.func @transform_7(%arg0: i32) -> (i32, i32) {
    %c0_i32 = arith.constant 0 : i32
    %c0_i32_0 = arith.constant 0 : i32
    %c0_i32_1 = arith.constant 0 : i32
    return %c0_i32, %c0_i32_0 : i32, i32
  }
  func.func @transform_8(%arg0: i32) -> (i32, i32) {
    %c0_i32 = arith.constant 0 : i32
    %c0_i32_0 = arith.constant 0 : i32
    %c0_i32_1 = arith.constant 0 : i32
    return %c0_i32, %c0_i32_0 : i32, i32
  }
  func.func @transform_9(%arg0: i32) -> (i32, i32) {
    %c0_i32 = arith.constant 0 : i32
    %c0_i32_0 = arith.constant 0 : i32
    %c0_i32_1 = arith.constant 0 : i32
    return %c0_i32, %c0_i32_0 : i32, i32
  }
  func.func @transform_10(%arg0: i32) -> (i32, i32) {
    %c0_i32 = arith.constant 0 : i32
    %c0_i32_0 = arith.constant 0 : i32
    %c0_i32_1 = arith.constant 0 : i32
    return %c0_i32, %c0_i32_0 : i32, i32
  }
  func.func @transform_11(%arg0: i32) -> (i32, i32) {
    %c0_i32 = arith.constant 0 : i32
    %c0_i32_0 = arith.constant 0 : i32
    %c0_i32_1 = arith.constant 0 : i32
    return %c0_i32, %c0_i32_0 : i32, i32
  }
  func.func @transform_12(%arg0: i32) -> (i32, i32) {
    %c0_i32 = arith.constant 0 : i32
    %c0_i32_0 = arith.constant 0 : i32
    %c0_i32_1 = arith.constant 0 : i32
    return %c0_i32, %c0_i32_0 : i32, i32
  }
  func.func @transform_13(%arg0: i32) -> (i32, i32) {
    %c0_i32 = arith.constant 0 : i32
    %c0_i32_0 = arith.constant 0 : i32
    %c0_i32_1 = arith.constant 0 : i32
    return %c0_i32, %c0_i32_0 : i32, i32
  }
  func.func @transform_14(%arg0: i32) -> (i32, i32) {
    %c0_i32 = arith.constant 0 : i32
    %c0_i32_0 = arith.constant 0 : i32
    %c0_i32_1 = arith.constant 0 : i32
    return %c0_i32, %c0_i32_0 : i32, i32
  }
  func.func @transform_15(%arg0: i32) -> (i32, i32) {
    %c0_i32 = arith.constant 0 : i32
    %c0_i32_0 = arith.constant 0 : i32
    %c0_i32_1 = arith.constant 0 : i32
    return %c0_i32, %c0_i32_0 : i32, i32
  }
  func.func @transform_16(%arg0: i32) -> (i32, i32, i32) {
    %c0_i32 = arith.constant 0 : i32
    %c0_i32_0 = arith.constant 0 : i32
    %c0_i32_1 = arith.constant 0 : i32
    %c0_i32_2 = arith.constant 0 : i32
    return %c0_i32, %c0_i32_0, %c0_i32_1 : i32, i32, i32
  }
}

</mosaic_0001>

<llo_original>
// kernel: trans_enc_forward.1
$region0: #{trans_enc_forward.1}
  #allocation0 [shape = 'u32[]', space=smem, size = 0x4, offset = 0x4, fixed_abs, tag = 'smem constant byte address 0x4 - core index']
  #allocation1 [shape = 'u32[72,128]{1,0:T(1,128)}', space=vmem, size = 0x9000, scoped, tag = 'internal scratch']
  %s0 = inlined_call_operand.vmem [shape: s32[16,1], index: 0, kind: input, shape index: {}]
  %s1 = inlined_call_operand.vmem [shape: f32[16,32], index: 1, kind: input, shape index: {}]
  %s2 = inlined_call_operand.vmem [shape: f32[2,1,8], index: 2, kind: input, shape index: {}]
  %s3 = inlined_call_operand.vmem [shape: f32[50,32], index: 3, kind: input, shape index: {}]
  %s4 = inlined_call_operand.vmem [shape: bf16[32,96], index: 4, kind: input, shape index: {}]
  %s5 = inlined_call_operand.vmem [shape: f32[1,96], index: 5, kind: input, shape index: {}]
  %s6 = inlined_call_operand.vmem [shape: bf16[4,8,32], index: 6, kind: input, shape index: {}]
  %s7 = inlined_call_operand.vmem [shape: f32[1,32], index: 7, kind: input, shape index: {}]
  %s8 = inlined_call_operand.vmem [shape: f32[1,32], index: 8, kind: input, shape index: {}]
  %s9 = inlined_call_operand.vmem [shape: f32[1,32], index: 9, kind: input, shape index: {}]
  %s10 = inlined_call_operand.vmem [shape: f32[1,32], index: 10, kind: input, shape index: {}]
  %s11 = inlined_call_operand.vmem [shape: f32[1,32], index: 11, kind: input, shape index: {}]
  %s12 = inlined_call_operand.vmem [shape: bf16[32,2048], index: 12, kind: input, shape index: {}]
  %s13 = inlined_call_operand.vmem [shape: f32[1,2048], index: 13, kind: input, shape index: {}]
  %s14 = inlined_call_operand.vmem [shape: bf16[2048,32], index: 14, kind: input, shape index: {}]
  %s15 = inlined_call_operand.vmem [shape: f32[1,32], index: 15, kind: input, shape index: {}]
  %s16 = inlined_call_operand.vmem [shape: f32[2,1,32], index: 16, kind: output, shape index: {}]
  %s17 = sld [smem:[#allocation0]]
  $region74: #{trans_enc_forward.1} parent=0
    _
  %s19 = ssub.s32 1, %s17
  %s20 = scalar_select 0, %s19, %s17
  // Predicated region
  $region2: #{trans_enc_forward.1} parent=0 // pred_check
    _
  $region3: #{trans_enc_forward.1} parent=0 // pred_check_branch
    %22 = sbr.rel (0) target = $region5
  $region4: #{trans_enc_forward.1} parent=0 // pred_region
    _
  $region5: #{trans_enc_forward.1} parent=0 // pred_fallthru
    _
  // Predicated region
  $region6: #{trans_enc_forward.1} parent=0 // pred_check
    _
  $region7: #{trans_enc_forward.1} parent=0 // pred_check_branch
    %24 = sbr.rel (0) target = $region9
  $region8: #{trans_enc_forward.1} parent=0 // pred_region
    _
  $region9: #{trans_enc_forward.1} parent=0 // pred_fallthru
    _
  // Predicated region
  $region10: #{trans_enc_forward.1} parent=0 // pred_check
    _
  $region11: #{trans_enc_forward.1} parent=0 // pred_check_branch
    %26 = sbr.rel (0) target = $region13
  $region12: #{trans_enc_forward.1} parent=0 // pred_region
    _
  $region13: #{trans_enc_forward.1} parent=0 // pred_fallthru
    _
  // Predicated region
  $region14: #{trans_enc_forward.1} parent=0 // pred_check
    _
  $region15: #{trans_enc_forward.1} parent=0 // pred_check_branch
    %28 = sbr.rel (0) target = $region17
  $region16: #{trans_enc_forward.1} parent=0 // pred_region
    _
  $region17: #{trans_enc_forward.1} parent=0 // pred_fallthru
    _
  // Predicated region
  $region18: #{trans_enc_forward.1} parent=0 // pred_check
    _
  $region19: #{trans_enc_forward.1} parent=0 // pred_check_branch
    %30 = sbr.rel (0) target = $region21
  $region20: #{trans_enc_forward.1} parent=0 // pred_region
    _
  $region21: #{trans_enc_forward.1} parent=0 // pred_fallthru
    _
  // Predicated region
  $region22: #{trans_enc_forward.1} parent=0 // pred_check
    _
  $region23: #{trans_enc_forward.1} parent=0 // pred_check_branch
    %32 = sbr.rel (0) target = $region25
  $region24: #{trans_enc_forward.1} parent=0 // pred_region
    _
  $region25: #{trans_enc_forward.1} parent=0 // pred_fallthru
    _
  // Predicated region
  $region26: #{trans_enc_forward.1} parent=0 // pred_check
    _
  $region27: #{trans_enc_forward.1} parent=0 // pred_check_branch
    %34 = sbr.rel (0) target = $region29
  $region28: #{trans_enc_forward.1} parent=0 // pred_region
    _
  $region29: #{trans_enc_forward.1} parent=0 // pred_fallthru
    _
  // Predicated region
  $region30: #{trans_enc_forward.1} parent=0 // pred_check
    _
  $region31: #{trans_enc_forward.1} parent=0 // pred_check_branch
    %36 = sbr.rel (0) target = $region33
  $region32: #{trans_enc_forward.1} parent=0 // pred_region
    _
  $region33: #{trans_enc_forward.1} parent=0 // pred_fallthru
    _
  // Predicated region
  $region34: #{trans_enc_forward.1} parent=0 // pred_check
    _
  $region35: #{trans_enc_forward.1} parent=0 // pred_check_branch
    %38 = sbr.rel (0) target = $region37
  $region36: #{trans_enc_forward.1} parent=0 // pred_region
    _
  $region37: #{trans_enc_forward.1} parent=0 // pred_fallthru
    _
  // Predicated region
  $region38: #{trans_enc_forward.1} parent=0 // pred_check
    _
  $region39: #{trans_enc_forward.1} parent=0 // pred_check_branch
    %40 = sbr.rel (0) target = $region41
  $region40: #{trans_enc_forward.1} parent=0 // pred_region
    _
  $region41: #{trans_enc_forward.1} parent=0 // pred_fallthru
    _
  // Predicated region
  $region42: #{trans_enc_forward.1} parent=0 // pred_check
    _
  $region43: #{trans_enc_forward.1} parent=0 // pred_check_branch
    %42 = sbr.rel (0) target = $region45
  $region44: #{trans_enc_forward.1} parent=0 // pred_region
    _
  $region45: #{trans_enc_forward.1} parent=0 // pred_fallthru
    _
  // Predicated region
  $region46: #{trans_enc_forward.1} parent=0 // pred_check
    _
  $region47: #{trans_enc_forward.1} parent=0 // pred_check_branch
    %44 = sbr.rel (0) target = $region49
  $region48: #{trans_enc_forward.1} parent=0 // pred_region
    _
  $region49: #{trans_enc_forward.1} parent=0 // pred_fallthru
    _
  // Predicated region
  $region50: #{trans_enc_forward.1} parent=0 // pred_check
    _
  $region51: #{trans_enc_forward.1} parent=0 // pred_check_branch
    %46 = sbr.rel (0) target = $region53
  $region52: #{trans_enc_forward.1} parent=0 // pred_region
    _
  $region53: #{trans_enc_forward.1} parent=0 // pred_fallthru
    _
  // Predicated region
  $region54: #{trans_enc_forward.1} parent=0 // pred_check
    _
  $region55: #{trans_enc_forward.1} parent=0 // pred_check_branch
    %48 = sbr.rel (0) target = $region57
  $region56: #{trans_enc_forward.1} parent=0 // pred_region
    _
  $region57: #{trans_enc_forward.1} parent=0 // pred_fallthru
    _
  // Predicated region
  $region58: #{trans_enc_forward.1} parent=0 // pred_check
    _
  $region59: #{trans_enc_forward.1} parent=0 // pred_check_branch
    %50 = sbr.rel (0) target = $region61
  $region60: #{trans_enc_forward.1} parent=0 // pred_region
    _
  $region61: #{trans_enc_forward.1} parent=0 // pred_fallthru
    _
  // Predicated region
  $region62: #{trans_enc_forward.1} parent=0 // pred_check
    _
  $region63: #{trans_enc_forward.1} parent=0 // pred_check_branch
    %52 = sbr.rel (0) target = $region65
  $region64: #{trans_enc_forward.1} parent=0 // pred_region
    _
  $region65: #{trans_enc_forward.1} parent=0 // pred_fallthru
    _
  %v54 = vld [vmem:[%s0] sm:$0xff]
  %v55 = vld [vmem:[%s0 + $0x8] sm:$0xff]
  %v56 = vlaneseq
  %v57 = vand.u32 %v56, 127
  %58 = vset.pattern.permute.xlu0 0
  %59 = vperm.xlu0 %58, %v54
  %v60 = vpop.permute.xlu0 %59
  %61 = vset.pattern.permute.xlu0 0
  %62 = vperm.xlu0 %61, %v55
  %v63 = vpop.permute.xlu0 %62
  %vm64 = vcmp.eq.s32.totalorder %v57, %v60
  %vm65 = vcmp.eq.s32.totalorder %v57, %v63
  %v66 = vsel %vm64, 1, 0
  %v67 = vsel %vm65, 1, 0
  %v68 = vcvt.s32.f32 %v66
  %v69 = vcvt.s32.f32 %v67
  %v70 = vld [vmem:[%s3] sm:$0xff]
  %v71 = vld [vmem:[%s3 + $0x8] sm:$0xff]
  %v72 = vld [vmem:[%s3 + $0x10] sm:$0xff]
  %v73 = vld [vmem:[%s3 + $0x18] sm:$0xff]
  %v74 = vld [vmem:[%s3 + $0x20] sm:$0xff]
  %v75 = vld [vmem:[%s3 + $0x28] sm:$0xff]
  %v76 = vld [vmem:[%s3 + $0x30] sm:$0x3]
  %v77 = vld [vmem:[%s1] sm:$0xff]
  %v78 = vld [vmem:[%s1 + $0x8] sm:$0xff]
  %vm79 = vcmask 408576
  %v81 = vsel %vm79, %v68, 0
  %v84 = vsel %vm79, %v69, 0
  %vm86 = vcmask 1041408
  %v88 = vsel %vm86, %v76, 0
  %90 = vmatpush.msra.mxu0 0.0
  %91 = vmatpush.msra.mxu0 0.0
  %92 = vmatpush.msra.mxu0 0.0
  %93 = vmatpush.msra.mxu0 0.0
  %94 = vmatpush.msra.mxu0 0.0
  %95 = vmatpush.msra.mxu0 0.0
  %96 = vmatpush.msra.mxu0 0.0
  %97 = vmatpush.msra.mxu0 0.0
  %98 = vmatpush.msra.mxu0 0.0
  %99 = vmatpush.msra.mxu0 %v88
  %100 = vmatpush.msra.mxu0 %v75
  %101 = vmatpush.msra.mxu0 %v74
  %102 = vmatpush.msra.mxu0 %v73
  %103 = vmatpush.msra.mxu0 %v72
  %104 = vmatpush.msra.mxu0 %v71
  %105 = vmatpush.msra.mxu0 %v70
  %106 = vmatmul.f32.gmra.mxu0 %v81
  %v107 = vpop.f32.mrf.mxu0
  %v108 = vadd.f32 %v77, %v107
  %109 = vmatmul.f32.gmra.mxu0 %v84
  %v110 = vpop.f32.mrf.mxu0
  %v111 = vadd.f32 %v78, %v110
  %112 = vdwg.mxu0
  %v113 = vld [vmem:[%s4] sm:$0xf]
  %v114 = vld [vmem:[%s4 + $0x4] sm:$0xf]
  %v115 = vld [vmem:[%s4 + $0x8] sm:$0xf]
  %v116 = vld [vmem:[%s4 + $0xc] sm:$0xf]
  %v117 = vld [vmem:[%s5] sm:$0x1]
  %v118 = vld [vmem:[%s6] sm:$0xf]
  %v119 = vld [vmem:[%s6 + $0x4] sm:$0xf]
  %v120 = vld [vmem:[%s6 + $0x8] sm:$0xf]
  %v121 = vld [vmem:[%s6 + $0xc] sm:$0xf]
  %v122 = vld [vmem:[%s7] sm:$0x1]
  %v123 = vld [vmem:[%s8] sm:$0x1]
  %v124 = vld [vmem:[%s9] sm:$0x1]
  %v125 = vld [vmem:[%s10] sm:$0x1]
  %v126 = vld [vmem:[%s11] sm:$0x1]
  %v127 = vld [vmem:[%s15] sm:$0x1]
  %v128 = vld [vmem:[%s2] sm:$0x1]
  %v129 = vld [vmem:[%s2 + $0x1] sm:$0x1]
  %v130 = vmul.f32 %v128, -1e+30
  %v131 = vmul.f32 %v129, -1e+30
  %v134 = vperm.slane %v130, 0
  %v135 = vperm.slane %v131, 0
  %v138 = vpack.c.bf16 %v111, %v108
  %v140 = vperm.slane %v117, 0
  %v146 = vunpack.c.l.b16 %v113
  %v147 = vunpack.c.l.b16 %v114
  %v148 = vunpack.c.l.b16 %v115
  %v149 = vunpack.c.l.b16 %v116
  %v150 = vpack.c.b16 %v147, %v146
  %v151 = vpack.c.b16 %v149, %v148
  %vm154 = vcmask 261120
  %v156 = vsel %vm154, %v138, 0
  %158 = vmatpush.bf16.msra.mxu0 0
  %159 = vmatpush.bf16.msra.mxu0 0
  %160 = vmatpush.bf16.msra.mxu0 0
  %161 = vmatpush.bf16.msra.mxu0 0
  %162 = vmatpush.bf16.msra.mxu0 0
  %163 = vmatpush.bf16.msra.mxu0 0
  %164 = vmatpush.bf16.msra.mxu0 %v151
  %165 = vmatpush.bf16.msra.mxu0 %v150
  %166 = vmatmul.bf16.gmra.mxu0 %v156
  %v167 = vpop.f32.mrf.mxu0
  %v168 = vadd.f32 %v140, %v167
  %v169 = vpop.f32.mrf.mxu0
  %v170 = vadd.f32 %v140, %v169
  %171 = vdwg.mxu0
  %174 = vrot.lane.b32.xlu0 %v168, 120
  %v175 = vpop.permute.xlu0 %174
  %176 = vrot.lane.b32.xlu0 %v170, 120
  %v177 = vpop.permute.xlu0 %176
  %180 = vrot.lane.b32.xlu0 %v168, 112
  %v181 = vpop.permute.xlu0 %180
  %182 = vrot.lane.b32.xlu0 %v170, 112
  %v183 = vpop.permute.xlu0 %182
  %186 = vrot.lane.b32.xlu0 %v168, 104
  %v187 = vpop.permute.xlu0 %186
  %188 = vrot.lane.b32.xlu0 %v170, 104
  %v189 = vpop.permute.xlu0 %188
  %v192 = vpack.c.bf16 %v168, %v168
  %v193 = vpack.c.bf16 %v170, %v170
  %v194 = vpack.c.bf16 %v175, %v175
  %v195 = vpack.c.bf16 %v177, %v177
  %v196 = vpack.c.bf16 %v181, %v181
  %v197 = vpack.c.bf16 %v183, %v183
  %v198 = vpack.c.bf16 %v187, %v187
  %v199 = vpack.c.bf16 %v189, %v189
  %v201 = vunpack.c.l.b16 %v192
  %v202 = vpack.c.b16 %v201, %v201
  %203 = vrot.lane.b32.xlu0 %v202, 96
  %v204 = vpop.permute.xlu0 %203
  %vm205 = vcmask 64512
  %v207 = vsel %vm205, %v192, 0
  %v210 = vsel %vm205, %v204, 0
  %212 = vmatpush.bf16.xpose.msra.mxu0 0
  %213 = vmatpush.bf16.xpose.msra.mxu0 0
  %214 = vmatpush.bf16.xpose.msra.mxu0 0
  %215 = vmatpush.bf16.xpose.msra.mxu0 0
  %216 = vmatpush.bf16.xpose.msra.mxu0 0
  %217 = vmatpush.bf16.xpose.msra.mxu0 0
  %218 = vmatpush.bf16.xpose.msra.mxu0 0
  %219 = vmatpush.bf16.xpose.msra.mxu0 %v210
  %220 = vmatmul.bf16.gmra.mxu0 %v207
  %v221 = vpop.f32.mrf.mxu0
  %v222 = vadd.f32 0.0, %v221
  %v223 = vpop.f32.mrf.mxu0
  %224 = vdwg.mxu0
  %v226 = vunpack.c.l.b16 %v193
  %v227 = vpack.c.b16 %v226, %v226
  %228 = vrot.lane.b32.xlu0 %v227, 96
  %v229 = vpop.permute.xlu0 %228
  %v231 = vsel %vm205, %v193, 0
  %v234 = vsel %vm205, %v229, 0
  %236 = vmatpush.bf16.xpose.msra.mxu0 0
  %237 = vmatpush.bf16.xpose.msra.mxu0 0
  %238 = vmatpush.bf16.xpose.msra.mxu0 0
  %239 = vmatpush.bf16.xpose.msra.mxu0 0
  %240 = vmatpush.bf16.xpose.msra.mxu0 0
  %241 = vmatpush.bf16.xpose.msra.mxu0 0
  %242 = vmatpush.bf16.xpose.msra.mxu0 0
  %243 = vmatpush.bf16.xpose.msra.mxu0 %v234
  %244 = vmatmul.bf16.gmra.mxu0 %v231
  %v245 = vpop.f32.mrf.mxu0
  %v246 = vadd.f32 0.0, %v245
  %v247 = vpop.f32.mrf.mxu0
  %248 = vdwg.mxu0
  %v250 = vunpack.c.l.b16 %v194
  %v251 = vpack.c.b16 %v250, %v250
  %252 = vrot.lane.b32.xlu0 %v251, 96
  %v253 = vpop.permute.xlu0 %252
  %v255 = vsel %vm205, %v194, 0
  %v258 = vsel %vm205, %v253, 0
  %260 = vmatpush.bf16.xpose.msra.mxu0 0
  %261 = vmatpush.bf16.xpose.msra.mxu0 0
  %262 = vmatpush.bf16.xpose.msra.mxu0 0
  %263 = vmatpush.bf16.xpose.msra.mxu0 0
  %264 = vmatpush.bf16.xpose.msra.mxu0 0
  %265 = vmatpush.bf16.xpose.msra.mxu0 0
  %266 = vmatpush.bf16.xpose.msra.mxu0 0
  %267 = vmatpush.bf16.xpose.msra.mxu0 %v258
  %268 = vmatmul.bf16.gmra.mxu0 %v255
  %v269 = vpop.f32.mrf.mxu0
  %v270 = vadd.f32 0.0, %v269
  %v271 = vpop.f32.mrf.mxu0
  %272 = vdwg.mxu0
  %v274 = vunpack.c.l.b16 %v195
  %v275 = vpack.c.b16 %v274, %v274
  %276 = vrot.lane.b32.xlu0 %v275, 96
  %v277 = vpop.permute.xlu0 %276
  %v279 = vsel %vm205, %v195, 0
  %v282 = vsel %vm205, %v277, 0
  %284 = vmatpush.bf16.xpose.msra.mxu0 0
  %285 = vmatpush.bf16.xpose.msra.mxu0 0
  %286 = vmatpush.bf16.xpose.msra.mxu0 0
  %287 = vmatpush.bf16.xpose.msra.mxu0 0
  %288 = vmatpush.bf16.xpose.msra.mxu0 0
  %289 = vmatpush.bf16.xpose.msra.mxu0 0
  %290 = vmatpush.bf16.xpose.msra.mxu0 0
  %291 = vmatpush.bf16.xpose.msra.mxu0 %v282
  %292 = vmatmul.bf16.gmra.mxu0 %v279
  %v293 = vpop.f32.mrf.mxu0
  %v294 = vadd.f32 0.0, %v293
  %v295 = vpop.f32.mrf.mxu0
  %296 = vdwg.mxu0
  %v298 = vunpack.c.l.b16 %v196
  %v299 = vpack.c.b16 %v298, %v298
  %300 = vrot.lane.b32.xlu0 %v299, 96
  %v301 = vpop.permute.xlu0 %300
  %v303 = vsel %vm205, %v196, 0
  %v306 = vsel %vm205, %v301, 0
  %308 = vmatpush.bf16.xpose.msra.mxu0 0
  %309 = vmatpush.bf16.xpose.msra.mxu0 0
  %310 = vmatpush.bf16.xpose.msra.mxu0 0
  %311 = vmatpush.bf16.xpose.msra.mxu0 0
  %312 = vmatpush.bf16.xpose.msra.mxu0 0
  %313 = vmatpush.bf16.xpose.msra.mxu0 0
  %314 = vmatpush.bf16.xpose.msra.mxu0 0
  %315 = vmatpush.bf16.xpose.msra.mxu0 %v306
  %316 = vmatmul.bf16.gmra.mxu0 %v303
  %v317 = vpop.f32.mrf.mxu0
  %v318 = vadd.f32 0.0, %v317
  %v319 = vpop.f32.mrf.mxu0
  %320 = vdwg.mxu0
  %v322 = vunpack.c.l.b16 %v197
  %v323 = vpack.c.b16 %v322, %v322
  %324 = vrot.lane.b32.xlu0 %v323, 96
  %v325 = vpop.permute.xlu0 %324
  %v327 = vsel %vm205, %v197, 0
  %v330 = vsel %vm205, %v325, 0
  %332 = vmatpush.bf16.xpose.msra.mxu0 0
  %333 = vmatpush.bf16.xpose.msra.mxu0 0
  %334 = vmatpush.bf16.xpose.msra.mxu0 0
  %335 = vmatpush.bf16.xpose.msra.mxu0 0
  %336 = vmatpush.bf16.xpose.msra.mxu0 0
  %337 = vmatpush.bf16.xpose.msra.mxu0 0
  %338 = vmatpush.bf16.xpose.msra.mxu0 0
  %339 = vmatpush.bf16.xpose.msra.mxu0 %v330
  %340 = vmatmul.bf16.gmra.mxu0 %v327
  %v341 = vpop.f32.mrf.mxu0
  %v342 = vadd.f32 0.0, %v341
  %v343 = vpop.f32.mrf.mxu0
  %344 = vdwg.mxu0
  %v346 = vunpack.c.l.b16 %v198
  %v347 = vpack.c.b16 %v346, %v346
  %348 = vrot.lane.b32.xlu0 %v347, 96
  %v349 = vpop.permute.xlu0 %348
  %v351 = vsel %vm205, %v198, 0
  %v354 = vsel %vm205, %v349, 0
  %356 = vmatpush.bf16.xpose.msra.mxu0 0
  %357 = vmatpush.bf16.xpose.msra.mxu0 0
  %358 = vmatpush.bf16.xpose.msra.mxu0 0
  %359 = vmatpush.bf16.xpose.msra.mxu0 0
  %360 = vmatpush.bf16.xpose.msra.mxu0 0
  %361 = vmatpush.bf16.xpose.msra.mxu0 0
  %362 = vmatpush.bf16.xpose.msra.mxu0 0
  %363 = vmatpush.bf16.xpose.msra.mxu0 %v354
  %364 = vmatmul.bf16.gmra.mxu0 %v351
  %v365 = vpop.f32.mrf.mxu0
  %v366 = vadd.f32 0.0, %v365
  %v367 = vpop.f32.mrf.mxu0
  %368 = vdwg.mxu0
  %v370 = vunpack.c.l.b16 %v199
  %v371 = vpack.c.b16 %v370, %v370
  %372 = vrot.lane.b32.xlu0 %v371, 96
  %v373 = vpop.permute.xlu0 %372
  %v375 = vsel %vm205, %v199, 0
  %v378 = vsel %vm205, %v373, 0
  %380 = vmatpush.bf16.xpose.msra.mxu0 0
  %381 = vmatpush.bf16.xpose.msra.mxu0 0
  %382 = vmatpush.bf16.xpose.msra.mxu0 0
  %383 = vmatpush.bf16.xpose.msra.mxu0 0
  %384 = vmatpush.bf16.xpose.msra.mxu0 0
  %385 = vmatpush.bf16.xpose.msra.mxu0 0
  %386 = vmatpush.bf16.xpose.msra.mxu0 0
  %387 = vmatpush.bf16.xpose.msra.mxu0 %v378
  %388 = vmatmul.bf16.gmra.mxu0 %v375
  %v389 = vpop.f32.mrf.mxu0
  %v390 = vadd.f32 0.0, %v389
  %v391 = vpop.f32.mrf.mxu0
  %392 = vdwg.mxu0
  %v393 = vmul.f32 %v222, 0.35355338
  %v394 = vmul.f32 %v246, 0.35355338
  %v395 = vmul.f32 %v270, 0.35355338
  %v396 = vmul.f32 %v294, 0.35355338
  %v397 = vmul.f32 %v318, 0.35355338
  %v398 = vmul.f32 %v342, 0.35355338
  %v399 = vmul.f32 %v366, 0.35355338
  %v400 = vmul.f32 %v390, 0.35355338
  %v401 = vadd.f32 %v393, %v134
  %v402 = vadd.f32 %v394, %v135
  %v403 = vadd.f32 %v395, %v134
  %v404 = vadd.f32 %v396, %v135
  %v405 = vadd.f32 %v397, %v134
  %v406 = vadd.f32 %v398, %v135
  %v407 = vadd.f32 %v399, %v134
  %v408 = vadd.f32 %v400, %v135
  %v409 = vsel %vm205, %v401, -inf
  %410 = vmax.xlane.f32.xlu0 %v409
  %v411 = vpop.xlane.xlu0 %410
  %v412 = vsel %vm205, %v402, -inf
  %413 = vmax.xlane.f32.xlu0 %v412
  %v414 = vpop.xlane.xlu0 %413
  %v415 = vsel %vm205, %v403, -inf
  %416 = vmax.xlane.f32.xlu0 %v415
  %v417 = vpop.xlane.xlu0 %416
  %v418 = vsel %vm205, %v404, -inf
  %419 = vmax.xlane.f32.xlu0 %v418
  %v420 = vpop.xlane.xlu0 %419
  %v421 = vsel %vm205, %v405, -inf
  %422 = vmax.xlane.f32.xlu0 %v421
  %v423 = vpop.xlane.xlu0 %422
  %v424 = vsel %vm205, %v406, -inf
  %425 = vmax.xlane.f32.xlu0 %v424
  %v426 = vpop.xlane.xlu0 %425
  %v427 = vsel %vm205, %v407, -inf
  %428 = vmax.xlane.f32.xlu0 %v427
  %v429 = vpop.xlane.xlu0 %428
  %v430 = vsel %vm205, %v408, -inf
  %431 = vmax.xlane.f32.xlu0 %v430
  %v432 = vpop.xlane.xlu0 %431
  %v433 = vsub.f32 %v401, %v411
  %v434 = vsub.f32 %v402, %v414
  %v435 = vsub.f32 %v403, %v417
  %v436 = vsub.f32 %v404, %v420
  %v437 = vsub.f32 %v405, %v423
  %v438 = vsub.f32 %v406, %v426
  %v439 = vsub.f32 %v407, %v429
  %v440 = vsub.f32 %v408, %v432
  %v441 = vmul.f32 %v433, 1.442695
  %v442 = vpow.pop %v441
  %v443 = vmul.f32 %v434, 1.442695
  %v444 = vpow.pop %v443
  %v445 = vmul.f32 %v435, 1.442695
  %v446 = vpow.pop %v445
  %v447 = vmul.f32 %v436, 1.442695
  %v448 = vpow.pop %v447
  %v449 = vmul.f32 %v437, 1.442695
  %v450 = vpow.pop %v449
  %v451 = vmul.f32 %v438, 1.442695
  %v452 = vpow.pop %v451
  %v453 = vmul.f32 %v439, 1.442695
  %v454 = vpow.pop %v453
  %v455 = vmul.f32 %v440, 1.442695
  %v456 = vpow.pop %v455
  %v457 = vsel %vm205, %v442, 0.0
  %458 = vadd.xlane.f32.xlu0 %v457
  %v459 = vpop.xlane.xlu0 %458
  %v460 = vsel %vm205, %v444, 0.0
  %461 = vadd.xlane.f32.xlu0 %v460
  %v462 = vpop.xlane.xlu0 %461
  %v463 = vsel %vm205, %v446, 0.0
  %464 = vadd.xlane.f32.xlu0 %v463
  %v465 = vpop.xlane.xlu0 %464
  %v466 = vsel %vm205, %v448, 0.0
  %467 = vadd.xlane.f32.xlu0 %v466
  %v468 = vpop.xlane.xlu0 %467
  %v469 = vsel %vm205, %v450, 0.0
  %470 = vadd.xlane.f32.xlu0 %v469
  %v471 = vpop.xlane.xlu0 %470
  %v472 = vsel %vm205, %v452, 0.0
  %473 = vadd.xlane.f32.xlu0 %v472
  %v474 = vpop.xlane.xlu0 %473
  %v475 = vsel %vm205, %v454, 0.0
  %476 = vadd.xlane.f32.xlu0 %v475
  %v477 = vpop.xlane.xlu0 %476
  %v478 = vsel %vm205, %v456, 0.0
  %479 = vadd.xlane.f32.xlu0 %v478
  %v480 = vpop.xlane.xlu0 %479
  %v481 = vrcp.pop %v459
  %v482 = vmul.f32 %v459, %v481
  %v483 = vsub.f32 1.0, %v482
  %v484 = vmul.f32 %v481, %v483
  %v485 = vadd.f32 %v481, %v484
  %vm486 = vweird.f32 %v459
  %vm487 = vweird.f32 %v481
  %vm488 = vmor %vm486, %vm487
  %v489 = vsel %vm488, %v481, %v485
  %v490 = vand.u32 2147483647, %v459
  %vm491 = vcmp.eq.f32.partialorder %v490, 8.507059e+37
  %v492 = vand.u32 %v459, 2147483648
  %v493 = vor.u32 1.1754944e-38, %v492
  %v494 = vsel %vm491, %v493, %v489
  %v495 = vmul.f32 %v442, %v494
  %v496 = vrcp.pop %v462
  %v497 = vmul.f32 %v462, %v496
  %v498 = vsub.f32 1.0, %v497
  %v499 = vmul.f32 %v496, %v498
  %v500 = vadd.f32 %v496, %v499
  %vm501 = vweird.f32 %v462
  %vm502 = vweird.f32 %v496
  %vm503 = vmor %vm501, %vm502
  %v504 = vsel %vm503, %v496, %v500
  %v505 = vand.u32 2147483647, %v462
  %vm506 = vcmp.eq.f32.partialorder %v505, 8.507059e+37
  %v507 = vand.u32 %v462, 2147483648
  %v508 = vor.u32 1.1754944e-38, %v507
  %v509 = vsel %vm506, %v508, %v504
  %v510 = vmul.f32 %v444, %v509
  %v511 = vrcp.pop %v465
  %v512 = vmul.f32 %v465, %v511
  %v513 = vsub.f32 1.0, %v512
  %v514 = vmul.f32 %v511, %v513
  %v515 = vadd.f32 %v511, %v514
  %vm516 = vweird.f32 %v465
  %vm517 = vweird.f32 %v511
  %vm518 = vmor %vm516, %vm517
  %v519 = vsel %vm518, %v511, %v515
  %v520 = vand.u32 2147483647, %v465
  %vm521 = vcmp.eq.f32.partialorder %v520, 8.507059e+37
  %v522 = vand.u32 %v465, 2147483648
  %v523 = vor.u32 1.1754944e-38, %v522
  %v524 = vsel %vm521, %v523, %v519
  %v525 = vmul.f32 %v446, %v524
  %v526 = vrcp.pop %v468
  %v527 = vmul.f32 %v468, %v526
  %v528 = vsub.f32 1.0, %v527
  %v529 = vmul.f32 %v526, %v528
  %v530 = vadd.f32 %v526, %v529
  %vm531 = vweird.f32 %v468
  %vm532 = vweird.f32 %v526
  %vm533 = vmor %vm531, %vm532
  %v534 = vsel %vm533, %v526, %v530
  %v535 = vand.u32 2147483647, %v468
  %vm536 = vcmp.eq.f32.partialorder %v535, 8.507059e+37
  %v537 = vand.u32 %v468, 2147483648
  %v538 = vor.u32 1.1754944e-38, %v537
  %v539 = vsel %vm536, %v538, %v534
  %v540 = vmul.f32 %v448, %v539
  %v541 = vrcp.pop %v471
  %v542 = vmul.f32 %v471, %v541
  %v543 = vsub.f32 1.0, %v542
  %v544 = vmul.f32 %v541, %v543
  %v545 = vadd.f32 %v541, %v544
  %vm546 = vweird.f32 %v471
  %vm547 = vweird.f32 %v541
  %vm548 = vmor %vm546, %vm547
  %v549 = vsel %vm548, %v541, %v545
  %v550 = vand.u32 2147483647, %v471
  %vm551 = vcmp.eq.f32.partialorder %v550, 8.507059e+37
  %v552 = vand.u32 %v471, 2147483648
  %v553 = vor.u32 1.1754944e-38, %v552
  %v554 = vsel %vm551, %v553, %v549
  %v555 = vmul.f32 %v450, %v554
  %v556 = vrcp.pop %v474
  %v557 = vmul.f32 %v474, %v556
  %v558 = vsub.f32 1.0, %v557
  %v559 = vmul.f32 %v556, %v558
  %v560 = vadd.f32 %v556, %v559
  %vm561 = vweird.f32 %v474
  %vm562 = vweird.f32 %v556
  %vm563 = vmor %vm561, %vm562
  %v564 = vsel %vm563, %v556, %v560
  %v565 = vand.u32 2147483647, %v474
  %vm566 = vcmp.eq.f32.partialorder %v565, 8.507059e+37
  %v567 = vand.u32 %v474, 2147483648
  %v568 = vor.u32 1.1754944e-38, %v567
  %v569 = vsel %vm566, %v568, %v564
  %v570 = vmul.f32 %v452, %v569
  %v571 = vrcp.pop %v477
  %v572 = vmul.f32 %v477, %v571
  %v573 = vsub.f32 1.0, %v572
  %v574 = vmul.f32 %v571, %v573
  %v575 = vadd.f32 %v571, %v574
  %vm576 = vweird.f32 %v477
  %vm577 = vweird.f32 %v571
  %vm578 = vmor %vm576, %vm577
  %v579 = vsel %vm578, %v571, %v575
  %v580 = vand.u32 2147483647, %v477
  %vm581 = vcmp.eq.f32.partialorder %v580, 8.507059e+37
  %v582 = vand.u32 %v477, 2147483648
  %v583 = vor.u32 1.1754944e-38, %v582
  %v584 = vsel %vm581, %v583, %v579
  %v585 = vmul.f32 %v454, %v584
  %v586 = vrcp.pop %v480
  %v587 = vmul.f32 %v480, %v586
  %v588 = vsub.f32 1.0, %v587
  %v589 = vmul.f32 %v586, %v588
  %v590 = vadd.f32 %v586, %v589
  %vm591 = vweird.f32 %v480
  %vm592 = vweird.f32 %v586
  %vm593 = vmor %vm591, %vm592
  %v594 = vsel %vm593, %v586, %v590
  %v595 = vand.u32 2147483647, %v480
  %vm596 = vcmp.eq.f32.partialorder %v595, 8.507059e+37
  %v597 = vand.u32 %v480, 2147483648
  %v598 = vor.u32 1.1754944e-38, %v597
  %v599 = vsel %vm596, %v598, %v594
  %v600 = vmul.f32 %v456, %v599
  %v601 = vpack.c.bf16 %v495, %v495
  %v602 = vpack.c.bf16 %v510, %v510
  %v603 = vpack.c.bf16 %v525, %v525
  %v604 = vpack.c.bf16 %v540, %v540
  %v605 = vpack.c.bf16 %v555, %v555
  %v606 = vpack.c.bf16 %v570, %v570
  %v607 = vpack.c.bf16 %v585, %v585
  %v608 = vpack.c.bf16 %v600, %v600
  %609 = vrot.lane.b32.xlu0 %v202, 64
  %v610 = vpop.permute.xlu0 %609
  %v612 = vsel %vm205, %v601, 0
  %vm614 = vcmask 1043456
  %v616 = vsel %vm614, %v610, 0
  %618 = vmatpush.bf16.msra.mxu0 0
  %619 = vmatpush.bf16.msra.mxu0 0
  %620 = vmatpush.bf16.msra.mxu0 0
  %621 = vmatpush.bf16.msra.mxu0 0
  %622 = vmatpush.bf16.msra.mxu0 0
  %623 = vmatpush.bf16.msra.mxu0 0
  %624 = vmatpush.bf16.msra.mxu0 0
  %625 = vmatpush.bf16.msra.mxu0 %v616
  %626 = vmatmul.bf16.gmra.mxu0 %v612
  %v627 = vpop.f32.mrf.mxu0
  %v628 = vadd.f32 0.0, %v627
  %v629 = vpop.f32.mrf.mxu0
  %630 = vdwg.mxu0
  %631 = vrot.lane.b32.xlu0 %v227, 64
  %v632 = vpop.permute.xlu0 %631
  %v634 = vsel %vm205, %v602, 0
  %v637 = vsel %vm614, %v632, 0
  %639 = vmatpush.bf16.msra.mxu0 0
  %640 = vmatpush.bf16.msra.mxu0 0
  %641 = vmatpush.bf16.msra.mxu0 0
  %642 = vmatpush.bf16.msra.mxu0 0
  %643 = vmatpush.bf16.msra.mxu0 0
  %644 = vmatpush.bf16.msra.mxu0 0
  %645 = vmatpush.bf16.msra.mxu0 0
  %646 = vmatpush.bf16.msra.mxu0 %v637
  %647 = vmatmul.bf16.gmra.mxu0 %v634
  %v648 = vpop.f32.mrf.mxu0
  %v649 = vadd.f32 0.0, %v648
  %v650 = vpop.f32.mrf.mxu0
  %651 = vdwg.mxu0
  %652 = vrot.lane.b32.xlu0 %v251, 64
  %v653 = vpop.permute.xlu0 %652
  %v655 = vsel %vm205, %v603, 0
  %v658 = vsel %vm614, %v653, 0
  %660 = vmatpush.bf16.msra.mxu0 0
  %661 = vmatpush.bf16.msra.mxu0 0
  %662 = vmatpush.bf16.msra.mxu0 0
  %663 = vmatpush.bf16.msra.mxu0 0
  %664 = vmatpush.bf16.msra.mxu0 0
  %665 = vmatpush.bf16.msra.mxu0 0
  %666 = vmatpush.bf16.msra.mxu0 0
  %667 = vmatpush.bf16.msra.mxu0 %v658
  %668 = vmatmul.bf16.gmra.mxu0 %v655
  %v669 = vpop.f32.mrf.mxu0
  %v670 = vadd.f32 0.0, %v669
  %v671 = vpop.f32.mrf.mxu0
  %672 = vdwg.mxu0
  %673 = vrot.lane.b32.xlu0 %v275, 64
  %v674 = vpop.permute.xlu0 %673
  %v676 = vsel %vm205, %v604, 0
  %v679 = vsel %vm614, %v674, 0
  %681 = vmatpush.bf16.msra.mxu0 0
  %682 = vmatpush.bf16.msra.mxu0 0
  %683 = vmatpush.bf16.msra.mxu0 0
  %684 = vmatpush.bf16.msra.mxu0 0
  %685 = vmatpush.bf16.msra.mxu0 0
  %686 = vmatpush.bf16.msra.mxu0 0
  %687 = vmatpush.bf16.msra.mxu0 0
  %688 = vmatpush.bf16.msra.mxu0 %v679
  %689 = vmatmul.bf16.gmra.mxu0 %v676
  %v690 = vpop.f32.mrf.mxu0
  %v691 = vadd.f32 0.0, %v690
  %v692 = vpop.f32.mrf.mxu0
  %693 = vdwg.mxu0
  %694 = vrot.lane.b32.xlu0 %v299, 64
  %v695 = vpop.permute.xlu0 %694
  %v697 = vsel %vm205, %v605, 0
  %v700 = vsel %vm614, %v695, 0
  %702 = vmatpush.bf16.msra.mxu0 0
  %703 = vmatpush.bf16.msra.mxu0 0
  %704 = vmatpush.bf16.msra.mxu0 0
  %705 = vmatpush.bf16.msra.mxu0 0
  %706 = vmatpush.bf16.msra.mxu0 0
  %707 = vmatpush.bf16.msra.mxu0 0
  %708 = vmatpush.bf16.msra.mxu0 0
  %709 = vmatpush.bf16.msra.mxu0 %v700
  %710 = vmatmul.bf16.gmra.mxu0 %v697
  %v711 = vpop.f32.mrf.mxu0
  %v712 = vadd.f32 0.0, %v711
  %v713 = vpop.f32.mrf.mxu0
  %714 = vdwg.mxu0
  %715 = vrot.lane.b32.xlu0 %v323, 64
  %v716 = vpop.permute.xlu0 %715
  %v718 = vsel %vm205, %v606, 0
  %v721 = vsel %vm614, %v716, 0
  %723 = vmatpush.bf16.msra.mxu0 0
  %724 = vmatpush.bf16.msra.mxu0 0
  %725 = vmatpush.bf16.msra.mxu0 0
  %726 = vmatpush.bf16.msra.mxu0 0
  %727 = vmatpush.bf16.msra.mxu0 0
  %728 = vmatpush.bf16.msra.mxu0 0
  %729 = vmatpush.bf16.msra.mxu0 0
  %730 = vmatpush.bf16.msra.mxu0 %v721
  %731 = vmatmul.bf16.gmra.mxu0 %v718
  %v732 = vpop.f32.mrf.mxu0
  %v733 = vadd.f32 0.0, %v732
  %v734 = vpop.f32.mrf.mxu0
  %735 = vdwg.mxu0
  %736 = vrot.lane.b32.xlu0 %v347, 64
  %v737 = vpop.permute.xlu0 %736
  %v739 = vsel %vm205, %v607, 0
  %v742 = vsel %vm614, %v737, 0
  %744 = vmatpush.bf16.msra.mxu0 0
  %745 = vmatpush.bf16.msra.mxu0 0
  %746 = vmatpush.bf16.msra.mxu0 0
  %747 = vmatpush.bf16.msra.mxu0 0
  %748 = vmatpush.bf16.msra.mxu0 0
  %749 = vmatpush.bf16.msra.mxu0 0
  %750 = vmatpush.bf16.msra.mxu0 0
  %751 = vmatpush.bf16.msra.mxu0 %v742
  %752 = vmatmul.bf16.gmra.mxu0 %v739
  %v753 = vpop.f32.mrf.mxu0
  %v754 = vadd.f32 0.0, %v753
  %v755 = vpop.f32.mrf.mxu0
  %756 = vdwg.mxu0
  %757 = vrot.lane.b32.xlu0 %v371, 64
  %v758 = vpop.permute.xlu0 %757
  %v760 = vsel %vm205, %v608, 0
  %v763 = vsel %vm614, %v758, 0
  %765 = vmatpush.bf16.msra.mxu0 0
  %766 = vmatpush.bf16.msra.mxu0 0
  %767 = vmatpush.bf16.msra.mxu0 0
  %768 = vmatpush.bf16.msra.mxu0 0
  %769 = vmatpush.bf16.msra.mxu0 0
  %770 = vmatpush.bf16.msra.mxu0 0
  %771 = vmatpush.bf16.msra.mxu0 0
  %772 = vmatpush.bf16.msra.mxu0 %v763
  %773 = vmatmul.bf16.gmra.mxu0 %v760
  %v774 = vpop.f32.mrf.mxu0
  %v775 = vadd.f32 0.0, %v774
  %v776 = vpop.f32.mrf.mxu0
  %777 = vdwg.mxu0
  %v778 = vpack.c.bf16 %v628, %v628
  %v779 = vpack.c.bf16 %v649, %v649
  %v780 = vpack.c.bf16 %v670, %v670
  %v781 = vpack.c.bf16 %v691, %v691
  %v782 = vpack.c.bf16 %v712, %v712
  %v783 = vpack.c.bf16 %v733, %v733
  %v784 = vpack.c.bf16 %v754, %v754
  %v785 = vpack.c.bf16 %v775, %v775
  %v788 = vunpack.c.l.b16 %v778
  %v789 = vunpack.c.l.b16 %v779
  %v790 = vpack.c.b16 %v789, %v788
  %v792 = vsel %vm205, %v790, 0
  %v795 = vsel %vm614, %v118, 0
  %797 = vmatpush.bf16.msra.mxu0 0
  %798 = vmatpush.bf16.msra.mxu0 0
  %799 = vmatpush.bf16.msra.mxu0 0
  %800 = vmatpush.bf16.msra.mxu0 0
  %801 = vmatpush.bf16.msra.mxu0 0
  %802 = vmatpush.bf16.msra.mxu0 0
  %803 = vmatpush.bf16.msra.mxu0 0
  %804 = vmatpush.bf16.msra.mxu0 %v795
  %805 = vmatmul.bf16.gmra.mxu0 %v792
  %v806 = vpop.f32.mrf.mxu0
  %v807 = vadd.f32 0.0, %v806
  %v808 = vpop.f32.mrf.mxu0
  %v809 = vadd.f32 0.0, %v808
  %810 = vdwg.mxu0
  %v813 = vunpack.c.l.b16 %v780
  %v814 = vunpack.c.l.b16 %v781
  %v815 = vpack.c.b16 %v814, %v813
  %v817 = vsel %vm205, %v815, 0
  %v820 = vsel %vm614, %v119, 0
  %822 = vmatpush.bf16.msra.mxu0 0
  %823 = vmatpush.bf16.msra.mxu0 0
  %824 = vmatpush.bf16.msra.mxu0 0
  %825 = vmatpush.bf16.msra.mxu0 0
  %826 = vmatpush.bf16.msra.mxu0 0
  %827 = vmatpush.bf16.msra.mxu0 0
  %828 = vmatpush.bf16.msra.mxu0 0
  %829 = vmatpush.bf16.msra.mxu0 %v820
  %830 = vmatmul.bf16.gmra.mxu0 %v817
  %v831 = vpop.f32.mrf.mxu0
  %v832 = vadd.f32 0.0, %v831
  %v833 = vpop.f32.mrf.mxu0
  %v834 = vadd.f32 0.0, %v833
  %835 = vdwg.mxu0
  %v838 = vunpack.c.l.b16 %v782
  %v839 = vunpack.c.l.b16 %v783
  %v840 = vpack.c.b16 %v839, %v838
  %v842 = vsel %vm205, %v840, 0
  %v845 = vsel %vm614, %v120, 0
  %847 = vmatpush.bf16.msra.mxu0 0
  %848 = vmatpush.bf16.msra.mxu0 0
  %849 = vmatpush.bf16.msra.mxu0 0
  %850 = vmatpush.bf16.msra.mxu0 0
  %851 = vmatpush.bf16.msra.mxu0 0
  %852 = vmatpush.bf16.msra.mxu0 0
  %853 = vmatpush.bf16.msra.mxu0 0
  %854 = vmatpush.bf16.msra.mxu0 %v845
  %855 = vmatmul.bf16.gmra.mxu0 %v842
  %v856 = vpop.f32.mrf.mxu0
  %v857 = vadd.f32 0.0, %v856
  %v858 = vpop.f32.mrf.mxu0
  %v859 = vadd.f32 0.0, %v858
  %860 = vdwg.mxu0
  %v863 = vunpack.c.l.b16 %v784
  %v864 = vunpack.c.l.b16 %v785
  %v865 = vpack.c.b16 %v864, %v863
  %v867 = vsel %vm205, %v865, 0
  %v870 = vsel %vm614, %v121, 0
  %872 = vmatpush.bf16.msra.mxu0 0
  %873 = vmatpush.bf16.msra.mxu0 0
  %874 = vmatpush.bf16.msra.mxu0 0
  %875 = vmatpush.bf16.msra.mxu0 0
  %876 = vmatpush.bf16.msra.mxu0 0
  %877 = vmatpush.bf16.msra.mxu0 0
  %878 = vmatpush.bf16.msra.mxu0 0
  %879 = vmatpush.bf16.msra.mxu0 %v870
  %880 = vmatmul.bf16.gmra.mxu0 %v867
  %v881 = vpop.f32.mrf.mxu0
  %v882 = vadd.f32 0.0, %v881
  %v883 = vpop.f32.mrf.mxu0
  %v884 = vadd.f32 0.0, %v883
  %885 = vdwg.mxu0
  %v886 = vsel %vm154, %v807, 0.0
  %v887 = vsel %vm154, %v832, 0.0
  %v888 = vadd.f32 %v886, %v887
  %v889 = vsel %vm154, %v857, 0.0
  %v890 = vadd.f32 %v888, %v889
  %v891 = vsel %vm154, %v882, 0.0
  %v892 = vadd.f32 %v890, %v891
  %v893 = vsel %vm154, %v809, 0.0
  %v894 = vsel %vm154, %v834, 0.0
  %v895 = vadd.f32 %v893, %v894
  %v896 = vsel %vm154, %v859, 0.0
  %v897 = vadd.f32 %v895, %v896
  %v898 = vsel %vm154, %v884, 0.0
  %v899 = vadd.f32 %v897, %v898
  %v900 = vadd.f32 %v108, %v892
  %v901 = vadd.f32 %v111, %v899
  %v903 = vperm.slane %v122, 0
  %v905 = vadd.f32 %v900, %v903
  %v906 = vadd.f32 %v901, %v903
  %v907 = vsel %vm154, %v905, 0.0
  %908 = vadd.xlane.f32.xlu0 %v907
  %v909 = vpop.xlane.xlu0 %908
  %v910 = vsel %vm154, %v906, 0.0
  %911 = vadd.xlane.f32.xlu0 %v910
  %v912 = vpop.xlane.xlu0 %911
  %v913 = vrcp.pop 32.0
  %v914 = vmul.f32 32.0, %v913
  %v915 = vsub.f32 1.0, %v914
  %v916 = vmul.f32 %v913, %v915
  %v917 = vadd.f32 %v913, %v916
  %vm918 = vweird.f32 %v913
  %v919 = vsel %vm918, %v913, %v917
  %v920 = vmul.f32 %v909, %v919
  %v921 = vmul.f32 %v912, %v919
  %v922 = vsub.f32 %v905, %v920
  %v923 = vsub.f32 %v906, %v921
  %v924 = vmul.f32 %v922, %v922
  %v925 = vmul.f32 %v923, %v923
  %v926 = vsel %vm154, %v924, 0.0
  %927 = vadd.xlane.f32.xlu0 %v926
  %v928 = vpop.xlane.xlu0 %927
  %v929 = vsel %vm154, %v925, 0.0
  %930 = vadd.xlane.f32.xlu0 %v929
  %v931 = vpop.xlane.xlu0 %930
  %v932 = vmul.f32 %v928, %v919
  %v933 = vmul.f32 %v931, %v919
  %v934 = vadd.f32 %v932, 1e-05
  %v935 = vadd.f32 %v933, 1e-05
  %v936 = vrsqrt.pop %v934
  %v937 = vmul.f32 %v936, %v934
  %v938 = vmul.f32 %v937, %v936
  %v939 = vmul.f32 0.5, %v938
  %v940 = vsub.f32 1.5, %v939
  %v941 = vmul.f32 %v936, %v940
  %vm942 = vweird.f32 %v934
  %vm943 = vweird.f32 %v936
  %vm944 = vmor %vm942, %vm943
  %v945 = vsel %vm944, %v936, %v941
  %v946 = vrsqrt.pop %v935
  %v947 = vmul.f32 %v946, %v935
  %v948 = vmul.f32 %v947, %v946
  %v949 = vmul.f32 0.5, %v948
  %v950 = vsub.f32 1.5, %v949
  %v951 = vmul.f32 %v946, %v950
  %vm952 = vweird.f32 %v935
  %vm953 = vweird.f32 %v946
  %vm954 = vmor %vm952, %vm953
  %v955 = vsel %vm954, %v946, %v951
  %v956 = vmul.f32 %v922, %v945
  %v957 = vmul.f32 %v923, %v955
  %v959 = vperm.slane %v123, 0
  %v961 = vmul.f32 %v956, %v959
  %v962 = vmul.f32 %v957, %v959
  %v964 = vperm.slane %v124, 0
  %v966 = vadd.f32 %v961, %v964
  %v967 = vadd.f32 %v962, %v964
  %v968 = vpack.c.bf16 %v967, %v966
  %v969 = vld [vmem:[%s12] sm:$0xff]
  %v970 = vld [vmem:[%s12 + $0x8] sm:$0xff]
  %v971 = vld [vmem:[%s12 + $0x40] sm:$0xff]
  %v972 = vld [vmem:[%s12 + $0x48] sm:$0xff]
  %v973 = vld [vmem:[%s12 + $0x80] sm:$0xff]
  %v974 = vld [vmem:[%s12 + $0x88] sm:$0xff]
  %v975 = vld [vmem:[%s12 + $0xc0] sm:$0xff]
  %v976 = vld [vmem:[%s12 + $0xc8] sm:$0xff]
  %v977 = vld [vmem:[%s13] sm:$0xf]
  %v979 = vperm.slane %v977, 0
  %v980 = vperm.slane %v977, 1
  %v981 = vperm.slane %v977, 2
  %v982 = vperm.slane %v977, 3
  %v995 = vunpack.c.l.b16 %v969
  %v996 = vunpack.c.h.b16 %v969
  %v997 = vunpack.c.l.b16 %v970
  %v998 = vunpack.c.h.b16 %v970
  %v999 = vunpack.c.l.b16 %v971
  %v1000 = vunpack.c.h.b16 %v971
  %v1001 = vunpack.c.l.b16 %v972
  %v1002 = vunpack.c.h.b16 %v972
  %v1003 = vunpack.c.l.b16 %v973
  %v1004 = vunpack.c.h.b16 %v973
  %v1005 = vunpack.c.l.b16 %v974
  %v1006 = vunpack.c.h.b16 %v974
  %v1007 = vunpack.c.l.b16 %v975
  %v1008 = vunpack.c.h.b16 %v975
  %v1009 = vunpack.c.l.b16 %v976
  %v1010 = vunpack.c.h.b16 %v976
  %v1011 = vpack.c.b16 %v999, %v995
  %v1012 = vpack.c.b16 %v1000, %v996
  %v1013 = vpack.c.b16 %v1001, %v997
  %v1014 = vpack.c.b16 %v1002, %v998
  %v1015 = vpack.c.b16 %v1007, %v1003
  %v1016 = vpack.c.b16 %v1008, %v1004
  %v1017 = vpack.c.b16 %v1009, %v1005
  %v1018 = vpack.c.b16 %v1010, %v1006
  %v1028 = vsel %vm154, %v968, 0
  %1030 = vmatpush.bf16.msra.mxu0 0
  %1031 = vmatpush.bf16.msra.mxu0 0
  %1032 = vmatpush.bf16.msra.mxu0 0
  %1033 = vmatpush.bf16.msra.mxu0 0
  %1034 = vmatpush.bf16.msra.mxu0 0
  %1035 = vmatpush.bf16.msra.mxu0 0
  %1036 = vmatpush.bf16.msra.mxu0 %v1015
  %1037 = vmatpush.bf16.msra.mxu0 %v1011
  %1038 = vmatmul.bf16.gmra.mxu0 %v1028
  %v1039 = vpop.f32.mrf.mxu0
  %v1040 = vadd.f32 %v979, %v1039
  %v1041 = vpop.f32.mrf.mxu0
  %v1042 = vadd.f32 %v979, %v1041
  %1043 = vdwg.mxu0
  %1044 = vmatpush.bf16.msra.mxu0 0
  %1045 = vmatpush.bf16.msra.mxu0 0
  %1046 = vmatpush.bf16.msra.mxu0 0
  %1047 = vmatpush.bf16.msra.mxu0 0
  %1048 = vmatpush.bf16.msra.mxu0 0
  %1049 = vmatpush.bf16.msra.mxu0 0
  %1050 = vmatpush.bf16.msra.mxu0 %v1016
  %1051 = vmatpush.bf16.msra.mxu0 %v1012
  %1052 = vmatmul.bf16.gmra.mxu0 %v1028
  %v1053 = vpop.f32.mrf.mxu0
  %v1054 = vadd.f32 %v980, %v1053
  %v1055 = vpop.f32.mrf.mxu0
  %v1056 = vadd.f32 %v980, %v1055
  %1057 = vdwg.mxu0
  %1058 = vmatpush.bf16.msra.mxu0 0
  %1059 = vmatpush.bf16.msra.mxu0 0
  %1060 = vmatpush.bf16.msra.mxu0 0
  %1061 = vmatpush.bf16.msra.mxu0 0
  %1062 = vmatpush.bf16.msra.mxu0 0
  %1063 = vmatpush.bf16.msra.mxu0 0
  %1064 = vmatpush.bf16.msra.mxu0 %v1017
  %1065 = vmatpush.bf16.msra.mxu0 %v1013
  %1066 = vmatmul.bf16.gmra.mxu0 %v1028
  %v1067 = vpop.f32.mrf.mxu0
  %v1068 = vadd.f32 %v981, %v1067
  %v1069 = vpop.f32.mrf.mxu0
  %v1070 = vadd.f32 %v981, %v1069
  %1071 = vdwg.mxu0
  %1072 = vmatpush.bf16.msra.mxu0 0
  %1073 = vmatpush.bf16.msra.mxu0 0
  %1074 = vmatpush.bf16.msra.mxu0 0
  %1075 = vmatpush.bf16.msra.mxu0 0
  %1076 = vmatpush.bf16.msra.mxu0 0
  %1077 = vmatpush.bf16.msra.mxu0 0
  %1078 = vmatpush.bf16.msra.mxu0 %v1018
  %1079 = vmatpush.bf16.msra.mxu0 %v1014
  %1080 = vmatmul.bf16.gmra.mxu0 %v1028
  %v1081 = vpop.f32.mrf.mxu0
  %v1082 = vadd.f32 %v982, %v1081
  %v1083 = vpop.f32.mrf.mxu0
  %v1084 = vadd.f32 %v982, %v1083
  %1085 = vdwg.mxu0
  %v1086 = vmax.f32 %v1040, 0.0
  %v1087 = vmax.f32 %v1054, 0.0
  %v1088 = vmax.f32 %v1068, 0.0
  %v1089 = vmax.f32 %v1082, 0.0
  %v1090 = vmax.f32 %v1042, 0.0
  %v1091 = vmax.f32 %v1056, 0.0
  %v1092 = vmax.f32 %v1070, 0.0
  %v1093 = vmax.f32 %v1084, 0.0
  %v1094 = vpack.c.bf16 %v1090, %v1086
  %v1095 = vpack.c.bf16 %v1091, %v1087
  %v1096 = vpack.c.bf16 %v1092, %v1088
  %v1097 = vpack.c.bf16 %v1093, %v1089
  %v1098 = vld [vmem:[%s14] sm:$0xf]
  %v1099 = vld [vmem:[%s14 + $0x4] sm:$0xf]
  %v1100 = vld [vmem:[%s14 + $0x8] sm:$0xf]
  %v1101 = vld [vmem:[%s14 + $0xc] sm:$0xf]
  %v1102 = vld [vmem:[%s14 + $0x10] sm:$0xf]
  %v1103 = vld [vmem:[%s14 + $0x14] sm:$0xf]
  %v1104 = vld [vmem:[%s14 + $0x18] sm:$0xf]
  %v1105 = vld [vmem:[%s14 + $0x1c] sm:$0xf]
  %v1106 = vld [vmem:[%s14 + $0x20] sm:$0xf]
  %v1107 = vld [vmem:[%s14 + $0x24] sm:$0xf]
  %v1108 = vld [vmem:[%s14 + $0x28] sm:$0xf]
  %v1109 = vld [vmem:[%s14 + $0x2c] sm:$0xf]
  %v1110 = vld [vmem:[%s14 + $0x30] sm:$0xf]
  %v1111 = vld [vmem:[%s14 + $0x34] sm:$0xf]
  %v1112 = vld [vmem:[%s14 + $0x38] sm:$0xf]
  %v1113 = vld [vmem:[%s14 + $0x3c] sm:$0xf]
  %v1114 = vld [vmem:[%s14 + $0x40] sm:$0xf]
  %v1115 = vld [vmem:[%s14 + $0x44] sm:$0xf]
  %v1116 = vld [vmem:[%s14 + $0x48] sm:$0xf]
  %v1117 = vld [vmem:[%s14 + $0x4c] sm:$0xf]
  %v1118 = vld [vmem:[%s14 + $0x50] sm:$0xf]
  %v1119 = vld [vmem:[%s14 + $0x54] sm:$0xf]
  %v1120 = vld [vmem:[%s14 + $0x58] sm:$0xf]
  %v1121 = vld [vmem:[%s14 + $0x5c] sm:$0xf]
  %v1122 = vld [vmem:[%s14 + $0x60] sm:$0xf]
  %v1123 = vld [vmem:[%s14 + $0x64] sm:$0xf]
  %v1124 = vld [vmem:[%s14 + $0x68] sm:$0xf]
  %v1125 = vld [vmem:[%s14 + $0x6c] sm:$0xf]
  %v1126 = vld [vmem:[%s14 + $0x70] sm:$0xf]
  %v1127 = vld [vmem:[%s14 + $0x74] sm:$0xf]
  %v1128 = vld [vmem:[%s14 + $0x78] sm:$0xf]
  %v1129 = vld [vmem:[%s14 + $0x7c] sm:$0xf]
  %v1130 = vld [vmem:[%s14 + $0x80] sm:$0xf]
  %v1131 = vld [vmem:[%s14 + $0x84] sm:$0xf]
  %v1132 = vld [vmem:[%s14 + $0x88] sm:$0xf]
  %v1133 = vld [vmem:[%s14 + $0x8c] sm:$0xf]
  %v1134 = vld [vmem:[%s14 + $0x90] sm:$0xf]
  %v1135 = vld [vmem:[%s14 + $0x94] sm:$0xf]
  %v1136 = vld [vmem:[%s14 + $0x98] sm:$0xf]
  %v1137 = vld [vmem:[%s14 + $0x9c] sm:$0xf]
  %v1138 = vld [vmem:[%s14 + $0xa0] sm:$0xf]
  %v1139 = vld [vmem:[%s14 + $0xa4] sm:$0xf]
  %v1140 = vld [vmem:[%s14 + $0xa8] sm:$0xf]
  %v1141 = vld [vmem:[%s14 + $0xac] sm:$0xf]
  %v1142 = vld [vmem:[%s14 + $0xb0] sm:$0xf]
  %v1143 = vld [vmem:[%s14 + $0xb4] sm:$0xf]
  %v1144 = vld [vmem:[%s14 + $0xb8] sm:$0xf]
  %v1145 = vld [vmem:[%s14 + $0xbc] sm:$0xf]
  %v1146 = vld [vmem:[%s14 + $0xc0] sm:$0xf]
  %v1147 = vld [vmem:[%s14 + $0xc4] sm:$0xf]
  %v1148 = vld [vmem:[%s14 + $0xc8] sm:$0xf]
  %v1149 = vld [vmem:[%s14 + $0xcc] sm:$0xf]
  %v1150 = vld [vmem:[%s14 + $0xd0] sm:$0xf]
  %v1151 = vld [vmem:[%s14 + $0xd4] sm:$0xf]
  %v1152 = vld [vmem:[%s14 + $0xd8] sm:$0xf]
  %v1153 = vld [vmem:[%s14 + $0xdc] sm:$0xf]
  %v1154 = vld [vmem:[%s14 + $0xe0] sm:$0xf]
  %v1155 = vld [vmem:[%s14 + $0xe4] sm:$0xf]
  %v1156 = vld [vmem:[%s14 + $0xe8] sm:$0xf]
  %v1157 = vld [vmem:[%s14 + $0xec] sm:$0xf]
  %v1158 = vld [vmem:[%s14 + $0xf0] sm:$0xf]
  %v1159 = vld [vmem:[%s14 + $0xf4] sm:$0xf]
  %v1160 = vld [vmem:[%s14 + $0xf8] sm:$0xf]
  %v1161 = vld [vmem:[%s14 + $0xfc] sm:$0xf]
  %v1162 = vld [vmem:[%s12 + $0x10] sm:$0xff]
  %v1163 = vld [vmem:[%s12 + $0x18] sm:$0xff]
  %v1164 = vld [vmem:[%s12 + $0x50] sm:$0xff]
  %v1165 = vld [vmem:[%s12 + $0x58] sm:$0xff]
  %v1166 = vld [vmem:[%s12 + $0x90] sm:$0xff]
  %v1167 = vld [vmem:[%s12 + $0x98] sm:$0xff]
  %v1168 = vld [vmem:[%s12 + $0xd0] sm:$0xff]
  %v1169 = vld [vmem:[%s12 + $0xd8] sm:$0xff]
  %v1170 = vld [vmem:[%s13 + $0x4] sm:$0xf]
  %v1172 = vperm.slane %v1170, 0
  %v1173 = vperm.slane %v1170, 1
  %v1174 = vperm.slane %v1170, 2
  %v1175 = vperm.slane %v1170, 3
  %v1188 = vunpack.c.l.b16 %v1162
  %v1189 = vunpack.c.h.b16 %v1162
  %v1190 = vunpack.c.l.b16 %v1163
  %v1191 = vunpack.c.h.b16 %v1163
  %v1192 = vunpack.c.l.b16 %v1164
  %v1193 = vunpack.c.h.b16 %v1164
  %v1194 = vunpack.c.l.b16 %v1165
  %v1195 = vunpack.c.h.b16 %v1165
  %v1196 = vunpack.c.l.b16 %v1166
  %v1197 = vunpack.c.h.b16 %v1166
  %v1198 = vunpack.c.l.b16 %v1167
  %v1199 = vunpack.c.h.b16 %v1167
  %v1200 = vunpack.c.l.b16 %v1168
  %v1201 = vunpack.c.h.b16 %v1168
  %v1202 = vunpack.c.l.b16 %v1169
  %v1203 = vunpack.c.h.b16 %v1169
  %v1204 = vpack.c.b16 %v1192, %v1188
  %v1205 = vpack.c.b16 %v1193, %v1189
  %v1206 = vpack.c.b16 %v1194, %v1190
  %v1207 = vpack.c.b16 %v1195, %v1191
  %v1208 = vpack.c.b16 %v1200, %v1196
  %v1209 = vpack.c.b16 %v1201, %v1197
  %v1210 = vpack.c.b16 %v1202, %v1198
  %v1211 = vpack.c.b16 %v1203, %v1199
  %1220 = vmatpush.bf16.msra.mxu0 0
  %1221 = vmatpush.bf16.msra.mxu0 0
  %1222 = vmatpush.bf16.msra.mxu0 0
  %1223 = vmatpush.bf16.msra.mxu0 0
  %1224 = vmatpush.bf16.msra.mxu0 0
  %1225 = vmatpush.bf16.msra.mxu0 0
  %1226 = vmatpush.bf16.msra.mxu0 %v1208
  %1227 = vmatpush.bf16.msra.mxu0 %v1204
  %1228 = vmatmul.bf16.gmra.mxu0 %v1028
  %v1229 = vpop.f32.mrf.mxu0
  %v1230 = vadd.f32 %v1172, %v1229
  %v1231 = vpop.f32.mrf.mxu0
  %v1232 = vadd.f32 %v1172, %v1231
  %1233 = vdwg.mxu0
  %1234 = vmatpush.bf16.msra.mxu0 0
  %1235 = vmatpush.bf16.msra.mxu0 0
  %1236 = vmatpush.bf16.msra.mxu0 0
  %1237 = vmatpush.bf16.msra.mxu0 0
  %1238 = vmatpush.bf16.msra.mxu0 0
  %1239 = vmatpush.bf16.msra.mxu0 0
  %1240 = vmatpush.bf16.msra.mxu0 %v1209
  %1241 = vmatpush.bf16.msra.mxu0 %v1205
  %1242 = vmatmul.bf16.gmra.mxu0 %v1028
  %v1243 = vpop.f32.mrf.mxu0
  %v1244 = vadd.f32 %v1173, %v1243
  %v1245 = vpop.f32.mrf.mxu0
  %v1246 = vadd.f32 %v1173, %v1245
  %1247 = vdwg.mxu0
  %1248 = vmatpush.bf16.msra.mxu0 0
  %1249 = vmatpush.bf16.msra.mxu0 0
  %1250 = vmatpush.bf16.msra.mxu0 0
  %1251 = vmatpush.bf16.msra.mxu0 0
  %1252 = vmatpush.bf16.msra.mxu0 0
  %1253 = vmatpush.bf16.msra.mxu0 0
  %1254 = vmatpush.bf16.msra.mxu0 %v1210
  %1255 = vmatpush.bf16.msra.mxu0 %v1206
  %1256 = vmatmul.bf16.gmra.mxu0 %v1028
  %v1257 = vpop.f32.mrf.mxu0
  %v1258 = vadd.f32 %v1174, %v1257
  %v1259 = vpop.f32.mrf.mxu0
  %v1260 = vadd.f32 %v1174, %v1259
  %1261 = vdwg.mxu0
  %1262 = vmatpush.bf16.msra.mxu0 0
  %1263 = vmatpush.bf16.msra.mxu0 0
  %1264 = vmatpush.bf16.msra.mxu0 0
  %1265 = vmatpush.bf16.msra.mxu0 0
  %1266 = vmatpush.bf16.msra.mxu0 0
  %1267 = vmatpush.bf16.msra.mxu0 0
  %1268 = vmatpush.bf16.msra.mxu0 %v1211
  %1269 = vmatpush.bf16.msra.mxu0 %v1207
  %1270 = vmatmul.bf16.gmra.mxu0 %v1028
  %v1271 = vpop.f32.mrf.mxu0
  %v1272 = vadd.f32 %v1175, %v1271
  %v1273 = vpop.f32.mrf.mxu0
  %v1274 = vadd.f32 %v1175, %v1273
  %1275 = vdwg.mxu0
  %v1276 = vmax.f32 %v1230, 0.0
  %v1277 = vmax.f32 %v1244, 0.0
  %v1278 = vmax.f32 %v1258, 0.0
  %v1279 = vmax.f32 %v1272, 0.0
  %v1280 = vmax.f32 %v1232, 0.0
  %v1281 = vmax.f32 %v1246, 0.0
  %v1282 = vmax.f32 %v1260, 0.0
  %v1283 = vmax.f32 %v1274, 0.0
  %v1284 = vpack.c.bf16 %v1280, %v1276
  %v1285 = vpack.c.bf16 %v1281, %v1277
  %v1286 = vpack.c.bf16 %v1282, %v1278
  %v1287 = vpack.c.bf16 %v1283, %v1279
  %v1288 = vld [vmem:[%s14 + $0x100] sm:$0xf]
  %v1289 = vld [vmem:[%s14 + $0x104] sm:$0xf]
  %v1290 = vld [vmem:[%s14 + $0x108] sm:$0xf]
  %v1291 = vld [vmem:[%s14 + $0x10c] sm:$0xf]
  %v1292 = vld [vmem:[%s14 + $0x110] sm:$0xf]
  %v1293 = vld [vmem:[%s14 + $0x114] sm:$0xf]
  %v1294 = vld [vmem:[%s14 + $0x118] sm:$0xf]
  %v1295 = vld [vmem:[%s14 + $0x11c] sm:$0xf]
  %v1296 = vld [vmem:[%s14 + $0x120] sm:$0xf]
  %v1297 = vld [vmem:[%s14 + $0x124] sm:$0xf]
  %v1298 = vld [vmem:[%s14 + $0x128] sm:$0xf]
  %v1299 = vld [vmem:[%s14 + $0x12c] sm:$0xf]
  %v1300 = vld [vmem:[%s14 + $0x130] sm:$0xf]
  %v1301 = vld [vmem:[%s14 + $0x134] sm:$0xf]
  %v1302 = vld [vmem:[%s14 + $0x138] sm:$0xf]
  %v1303 = vld [vmem:[%s14 + $0x13c] sm:$0xf]
  %v1304 = vld [vmem:[%s14 + $0x140] sm:$0xf]
  %v1305 = vld [vmem:[%s14 + $0x144] sm:$0xf]
  %v1306 = vld [vmem:[%s14 + $0x148] sm:$0xf]
  %v1307 = vld [vmem:[%s14 + $0x14c] sm:$0xf]
  %v1308 = vld [vmem:[%s14 + $0x150] sm:$0xf]
  %v1309 = vld [vmem:[%s14 + $0x154] sm:$0xf]
  %v1310 = vld [vmem:[%s14 + $0x158] sm:$0xf]
  %v1311 = vld [vmem:[%s14 + $0x15c] sm:$0xf]
  %v1312 = vld [vmem:[%s14 + $0x160] sm:$0xf]
  %v1313 = vld [vmem:[%s14 + $0x164] sm:$0xf]
  %v1314 = vld [vmem:[%s14 + $0x168] sm:$0xf]
  %v1315 = vld [vmem:[%s14 + $0x16c] sm:$0xf]
  %v1316 = vld [vmem:[%s14 + $0x170] sm:$0xf]
  %v1317 = vld [vmem:[%s14 + $0x174] sm:$0xf]
  %v1318 = vld [vmem:[%s14 + $0x178] sm:$0xf]
  %v1319 = vld [vmem:[%s14 + $0x17c] sm:$0xf]
  %v1320 = vld [vmem:[%s14 + $0x180] sm:$0xf]
  %v1321 = vld [vmem:[%s14 + $0x184] sm:$0xf]
  %v1322 = vld [vmem:[%s14 + $0x188] sm:$0xf]
  %v1323 = vld [vmem:[%s14 + $0x18c] sm:$0xf]
  %v1324 = vld [vmem:[%s14 + $0x190] sm:$0xf]
  %v1325 = vld [vmem:[%s14 + $0x194] sm:$0xf]
  %v1326 = vld [vmem:[%s14 + $0x198] sm:$0xf]
  %v1327 = vld [vmem:[%s14 + $0x19c] sm:$0xf]
  %v1328 = vld [vmem:[%s14 + $0x1a0] sm:$0xf]
  %v1329 = vld [vmem:[%s14 + $0x1a4] sm:$0xf]
  %v1330 = vld [vmem:[%s14 + $0x1a8] sm:$0xf]
  %v1331 = vld [vmem:[%s14 + $0x1ac] sm:$0xf]
  %v1332 = vld [vmem:[%s14 + $0x1b0] sm:$0xf]
  %v1333 = vld [vmem:[%s14 + $0x1b4] sm:$0xf]
  %v1334 = vld [vmem:[%s14 + $0x1b8] sm:$0xf]
  %v1335 = vld [vmem:[%s14 + $0x1bc] sm:$0xf]
  %v1336 = vld [vmem:[%s14 + $0x1c0] sm:$0xf]
  %v1337 = vld [vmem:[%s14 + $0x1c4] sm:$0xf]
  %v1338 = vld [vmem:[%s14 + $0x1c8] sm:$0xf]
  %v1339 = vld [vmem:[%s14 + $0x1cc] sm:$0xf]
  %v1340 = vld [vmem:[%s14 + $0x1d0] sm:$0xf]
  %v1341 = vld [vmem:[%s14 + $0x1d4] sm:$0xf]
  %v1342 = vld [vmem:[%s14 + $0x1d8] sm:$0xf]
  %v1343 = vld [vmem:[%s14 + $0x1dc] sm:$0xf]
  %v1344 = vld [vmem:[%s14 + $0x1e0] sm:$0xf]
  %v1345 = vld [vmem:[%s14 + $0x1e4] sm:$0xf]
  %v1346 = vld [vmem:[%s14 + $0x1e8] sm:$0xf]
  %v1347 = vld [vmem:[%s14 + $0x1ec] sm:$0xf]
  %v1348 = vld [vmem:[%s14 + $0x1f0] sm:$0xf]
  %v1349 = vld [vmem:[%s14 + $0x1f4] sm:$0xf]
  %v1350 = vld [vmem:[%s14 + $0x1f8] sm:$0xf]
  %v1351 = vld [vmem:[%s14 + $0x1fc] sm:$0xf]
  %v1416 = vunpack.c.l.b16 %v1288
  %v1417 = vunpack.c.l.b16 %v1289
  %v1418 = vunpack.c.l.b16 %v1290
  %v1419 = vunpack.c.l.b16 %v1291
  %v1420 = vunpack.c.l.b16 %v1292
  %v1421 = vunpack.c.l.b16 %v1293
  %v1422 = vunpack.c.l.b16 %v1294
  %v1423 = vunpack.c.l.b16 %v1295
  %v1424 = vunpack.c.l.b16 %v1296
  %v1425 = vunpack.c.l.b16 %v1297
  %v1426 = vunpack.c.l.b16 %v1298
  %v1427 = vunpack.c.l.b16 %v1299
  %v1428 = vunpack.c.l.b16 %v1300
  %v1429 = vunpack.c.l.b16 %v1301
  %v1430 = vunpack.c.l.b16 %v1302
  %v1431 = vunpack.c.l.b16 %v1303
  %v1432 = vunpack.c.l.b16 %v1304
  %v1433 = vunpack.c.l.b16 %v1305
  %v1434 = vunpack.c.l.b16 %v1306
  %v1435 = vunpack.c.l.b16 %v1307
  %v1436 = vunpack.c.l.b16 %v1308
  %v1437 = vunpack.c.l.b16 %v1309
  %v1438 = vunpack.c.l.b16 %v1310
  %v1439 = vunpack.c.l.b16 %v1311
  %v1440 = vunpack.c.l.b16 %v1312
  %v1441 = vunpack.c.l.b16 %v1313
  %v1442 = vunpack.c.l.b16 %v1314
  %v1443 = vunpack.c.l.b16 %v1315
  %v1444 = vunpack.c.l.b16 %v1316
  %v1445 = vunpack.c.l.b16 %v1317
  %v1446 = vunpack.c.l.b16 %v1318
  %v1447 = vunpack.c.l.b16 %v1319
  %v1448 = vunpack.c.l.b16 %v1320
  %v1449 = vunpack.c.l.b16 %v1321
  %v1450 = vunpack.c.l.b16 %v1322
  %v1451 = vunpack.c.l.b16 %v1323
  %v1452 = vunpack.c.l.b16 %v1324
  %v1453 = vunpack.c.l.b16 %v1325
  %v1454 = vunpack.c.l.b16 %v1326
  %v1455 = vunpack.c.l.b16 %v1327
  %v1456 = vunpack.c.l.b16 %v1328
  %v1457 = vunpack.c.l.b16 %v1329
  %v1458 = vunpack.c.l.b16 %v1330
  %v1459 = vunpack.c.l.b16 %v1331
  %v1460 = vunpack.c.l.b16 %v1332
  %v1461 = vunpack.c.l.b16 %v1333
  %v1462 = vunpack.c.l.b16 %v1334
  %v1463 = vunpack.c.l.b16 %v1335
  %v1464 = vunpack.c.l.b16 %v1336
  %v1465 = vunpack.c.l.b16 %v1337
  %v1466 = vunpack.c.l.b16 %v1338
  %v1467 = vunpack.c.l.b16 %v1339
  %v1468 = vunpack.c.l.b16 %v1340
  %v1469 = vunpack.c.l.b16 %v1341
  %v1470 = vunpack.c.l.b16 %v1342
  %v1471 = vunpack.c.l.b16 %v1343
  %v1472 = vunpack.c.l.b16 %v1344
  %v1473 = vunpack.c.l.b16 %v1345
  %v1474 = vunpack.c.l.b16 %v1346
  %v1475 = vunpack.c.l.b16 %v1347
  %v1476 = vunpack.c.l.b16 %v1348
  %v1477 = vunpack.c.l.b16 %v1349
  %v1478 = vunpack.c.l.b16 %v1350
  %v1479 = vunpack.c.l.b16 %v1351
  %v1480 = vpack.c.b16 %v1417, %v1416
  %v1481 = vpack.c.b16 %v1419, %v1418
  %v1482 = vpack.c.b16 %v1421, %v1420
  %v1483 = vpack.c.b16 %v1423, %v1422
  %v1484 = vpack.c.b16 %v1425, %v1424
  %v1485 = vpack.c.b16 %v1427, %v1426
  %v1486 = vpack.c.b16 %v1429, %v1428
  %v1487 = vpack.c.b16 %v1431, %v1430
  %v1488 = vpack.c.b16 %v1433, %v1432
  %v1489 = vpack.c.b16 %v1435, %v1434
  %v1490 = vpack.c.b16 %v1437, %v1436
  %v1491 = vpack.c.b16 %v1439, %v1438
  %v1492 = vpack.c.b16 %v1441, %v1440
  %v1493 = vpack.c.b16 %v1443, %v1442
  %v1494 = vpack.c.b16 %v1445, %v1444
  %v1495 = vpack.c.b16 %v1447, %v1446
  %v1496 = vpack.c.b16 %v1449, %v1448
  %v1497 = vpack.c.b16 %v1451, %v1450
  %v1498 = vpack.c.b16 %v1453, %v1452
  %v1499 = vpack.c.b16 %v1455, %v1454
  %v1500 = vpack.c.b16 %v1457, %v1456
  %v1501 = vpack.c.b16 %v1459, %v1458
  %v1502 = vpack.c.b16 %v1461, %v1460
  %v1503 = vpack.c.b16 %v1463, %v1462
  %v1504 = vpack.c.b16 %v1465, %v1464
  %v1505 = vpack.c.b16 %v1467, %v1466
  %v1506 = vpack.c.b16 %v1469, %v1468
  %v1507 = vpack.c.b16 %v1471, %v1470
  %v1508 = vpack.c.b16 %v1473, %v1472
  %v1509 = vpack.c.b16 %v1475, %v1474
  %v1510 = vpack.c.b16 %v1477, %v1476
  %v1511 = vpack.c.b16 %v1479, %v1478
  %1544 = vmatpush.bf16.msra.mxu0 %v1487
  %1545 = vmatpush.bf16.msra.mxu0 %v1486
  %1546 = vmatpush.bf16.msra.mxu0 %v1485
  %1547 = vmatpush.bf16.msra.mxu0 %v1484
  %1548 = vmatpush.bf16.msra.mxu0 %v1483
  %1549 = vmatpush.bf16.msra.mxu0 %v1482
  %1550 = vmatpush.bf16.msra.mxu0 %v1481
  %1551 = vmatpush.bf16.msra.mxu0 %v1480
  %1552 = vmatmul.bf16.gmra.mxu0 %v1284
  %v1553 = vpop.f32.mrf.mxu0
  %v1554 = vadd.f32 0.0, %v1553
  %v1555 = vpop.f32.mrf.mxu0
  %v1556 = vadd.f32 0.0, %v1555
  %1557 = vdwg.mxu0
  %1558 = vmatpush.bf16.msra.mxu0 %v1495
  %1559 = vmatpush.bf16.msra.mxu0 %v1494
  %1560 = vmatpush.bf16.msra.mxu0 %v1493
  %1561 = vmatpush.bf16.msra.mxu0 %v1492
  %1562 = vmatpush.bf16.msra.mxu0 %v1491
  %1563 = vmatpush.bf16.msra.mxu0 %v1490
  %1564 = vmatpush.bf16.msra.mxu0 %v1489
  %1565 = vmatpush.bf16.msra.mxu0 %v1488
  %1566 = vmatmul.bf16.gmra.mxu0 %v1285
  %v1567 = vpop.f32.mrf.mxu0
  %v1568 = vadd.f32 %v1554, %v1567
  %v1569 = vpop.f32.mrf.mxu0
  %v1570 = vadd.f32 %v1556, %v1569
  %1571 = vdwg.mxu0
  %1572 = vmatpush.bf16.msra.mxu0 %v1503
  %1573 = vmatpush.bf16.msra.mxu0 %v1502
  %1574 = vmatpush.bf16.msra.mxu0 %v1501
  %1575 = vmatpush.bf16.msra.mxu0 %v1500
  %1576 = vmatpush.bf16.msra.mxu0 %v1499
  %1577 = vmatpush.bf16.msra.mxu0 %v1498
  %1578 = vmatpush.bf16.msra.mxu0 %v1497
  %1579 = vmatpush.bf16.msra.mxu0 %v1496
  %1580 = vmatmul.bf16.gmra.mxu0 %v1286
  %v1581 = vpop.f32.mrf.mxu0
  %v1582 = vadd.f32 %v1568, %v1581
  %v1583 = vpop.f32.mrf.mxu0
  %v1584 = vadd.f32 %v1570, %v1583
  %1585 = vdwg.mxu0
  %1586 = vmatpush.bf16.msra.mxu0 %v1511
  %1587 = vmatpush.bf16.msra.mxu0 %v1510
  %1588 = vmatpush.bf16.msra.mxu0 %v1509
  %1589 = vmatpush.bf16.msra.mxu0 %v1508
  %1590 = vmatpush.bf16.msra.mxu0 %v1507
  %1591 = vmatpush.bf16.msra.mxu0 %v1506
  %1592 = vmatpush.bf16.msra.mxu0 %v1505
  %1593 = vmatpush.bf16.msra.mxu0 %v1504
  %1594 = vmatmul.bf16.gmra.mxu0 %v1287
  %v1595 = vpop.f32.mrf.mxu0
  %v1596 = vadd.f32 %v1582, %v1595
  %v1597 = vpop.f32.mrf.mxu0
  %v1598 = vadd.f32 %v1584, %v1597
  %1599 = vdwg.mxu0
  %v1664 = vunpack.c.l.b16 %v1098
  %v1665 = vunpack.c.l.b16 %v1099
  %v1666 = vunpack.c.l.b16 %v1100
  %v1667 = vunpack.c.l.b16 %v1101
  %v1668 = vunpack.c.l.b16 %v1102
  %v1669 = vunpack.c.l.b16 %v1103
  %v1670 = vunpack.c.l.b16 %v1104
  %v1671 = vunpack.c.l.b16 %v1105
  %v1672 = vunpack.c.l.b16 %v1106
  %v1673 = vunpack.c.l.b16 %v1107
  %v1674 = vunpack.c.l.b16 %v1108
  %v1675 = vunpack.c.l.b16 %v1109
  %v1676 = vunpack.c.l.b16 %v1110
  %v1677 = vunpack.c.l.b16 %v1111
  %v1678 = vunpack.c.l.b16 %v1112
  %v1679 = vunpack.c.l.b16 %v1113
  %v1680 = vunpack.c.l.b16 %v1114
  %v1681 = vunpack.c.l.b16 %v1115
  %v1682 = vunpack.c.l.b16 %v1116
  %v1683 = vunpack.c.l.b16 %v1117
  %v1684 = vunpack.c.l.b16 %v1118
  %v1685 = vunpack.c.l.b16 %v1119
  %v1686 = vunpack.c.l.b16 %v1120
  %v1687 = vunpack.c.l.b16 %v1121
  %v1688 = vunpack.c.l.b16 %v1122
  %v1689 = vunpack.c.l.b16 %v1123
  %v1690 = vunpack.c.l.b16 %v1124
  %v1691 = vunpack.c.l.b16 %v1125
  %v1692 = vunpack.c.l.b16 %v1126
  %v1693 = vunpack.c.l.b16 %v1127
  %v1694 = vunpack.c.l.b16 %v1128
  %v1695 = vunpack.c.l.b16 %v1129
  %v1696 = vunpack.c.l.b16 %v1130
  %v1697 = vunpack.c.l.b16 %v1131
  %v1698 = vunpack.c.l.b16 %v1132
  %v1699 = vunpack.c.l.b16 %v1133
  %v1700 = vunpack.c.l.b16 %v1134
  %v1701 = vunpack.c.l.b16 %v1135
  %v1702 = vunpack.c.l.b16 %v1136
  %v1703 = vunpack.c.l.b16 %v1137
  %v1704 = vunpack.c.l.b16 %v1138
  %v1705 = vunpack.c.l.b16 %v1139
  %v1706 = vunpack.c.l.b16 %v1140
  %v1707 = vunpack.c.l.b16 %v1141
  %v1708 = vunpack.c.l.b16 %v1142
  %v1709 = vunpack.c.l.b16 %v1143
  %v1710 = vunpack.c.l.b16 %v1144
  %v1711 = vunpack.c.l.b16 %v1145
  %v1712 = vunpack.c.l.b16 %v1146
  %v1713 = vunpack.c.l.b16 %v1147
  %v1714 = vunpack.c.l.b16 %v1148
  %v1715 = vunpack.c.l.b16 %v1149
  %v1716 = vunpack.c.l.b16 %v1150
  %v1717 = vunpack.c.l.b16 %v1151
  %v1718 = vunpack.c.l.b16 %v1152
  %v1719 = vunpack.c.l.b16 %v1153
  %v1720 = vunpack.c.l.b16 %v1154
  %v1721 = vunpack.c.l.b16 %v1155
  %v1722 = vunpack.c.l.b16 %v1156
  %v1723 = vunpack.c.l.b16 %v1157
  %v1724 = vunpack.c.l.b16 %v1158
  %v1725 = vunpack.c.l.b16 %v1159
  %v1726 = vunpack.c.l.b16 %v1160
  %v1727 = vunpack.c.l.b16 %v1161
  %v1728 = vpack.c.b16 %v1665, %v1664
  %v1729 = vpack.c.b16 %v1667, %v1666
  %v1730 = vpack.c.b16 %v1669, %v1668
  %v1731 = vpack.c.b16 %v1671, %v1670
  %v1732 = vpack.c.b16 %v1673, %v1672
  %v1733 = vpack.c.b16 %v1675, %v1674
  %v1734 = vpack.c.b16 %v1677, %v1676
  %v1735 = vpack.c.b16 %v1679, %v1678
  %v1736 = vpack.c.b16 %v1681, %v1680
  %v1737 = vpack.c.b16 %v1683, %v1682
  %v1738 = vpack.c.b16 %v1685, %v1684
  %v1739 = vpack.c.b16 %v1687, %v1686
  %v1740 = vpack.c.b16 %v1689, %v1688
  %v1741 = vpack.c.b16 %v1691, %v1690
  %v1742 = vpack.c.b16 %v1693, %v1692
  %v1743 = vpack.c.b16 %v1695, %v1694
  %v1744 = vpack.c.b16 %v1697, %v1696
  %v1745 = vpack.c.b16 %v1699, %v1698
  %v1746 = vpack.c.b16 %v1701, %v1700
  %v1747 = vpack.c.b16 %v1703, %v1702
  %v1748 = vpack.c.b16 %v1705, %v1704
  %v1749 = vpack.c.b16 %v1707, %v1706
  %v1750 = vpack.c.b16 %v1709, %v1708
  %v1751 = vpack.c.b16 %v1711, %v1710
  %v1752 = vpack.c.b16 %v1713, %v1712
  %v1753 = vpack.c.b16 %v1715, %v1714
  %v1754 = vpack.c.b16 %v1717, %v1716
  %v1755 = vpack.c.b16 %v1719, %v1718
  %v1756 = vpack.c.b16 %v1721, %v1720
  %v1757 = vpack.c.b16 %v1723, %v1722
  %v1758 = vpack.c.b16 %v1725, %v1724
  %v1759 = vpack.c.b16 %v1727, %v1726
  %1792 = vmatpush.bf16.msra.mxu0 %v1735
  %1793 = vmatpush.bf16.msra.mxu0 %v1734
  %1794 = vmatpush.bf16.msra.mxu0 %v1733
  %1795 = vmatpush.bf16.msra.mxu0 %v1732
  %1796 = vmatpush.bf16.msra.mxu0 %v1731
  %1797 = vmatpush.bf16.msra.mxu0 %v1730
  %1798 = vmatpush.bf16.msra.mxu0 %v1729
  %1799 = vmatpush.bf16.msra.mxu0 %v1728
  %1800 = vmatmul.bf16.gmra.mxu0 %v1094
  %v1801 = vpop.f32.mrf.mxu0
  %v1802 = vadd.f32 %v1596, %v1801
  %v1803 = vpop.f32.mrf.mxu0
  %v1804 = vadd.f32 %v1598, %v1803
  %1805 = vdwg.mxu0
  %1806 = vmatpush.bf16.msra.mxu0 %v1743
  %1807 = vmatpush.bf16.msra.mxu0 %v1742
  %1808 = vmatpush.bf16.msra.mxu0 %v1741
  %1809 = vmatpush.bf16.msra.mxu0 %v1740
  %1810 = vmatpush.bf16.msra.mxu0 %v1739
  %1811 = vmatpush.bf16.msra.mxu0 %v1738
  %1812 = vmatpush.bf16.msra.mxu0 %v1737
  %1813 = vmatpush.bf16.msra.mxu0 %v1736
  %1814 = vmatmul.bf16.gmra.mxu0 %v1095
  %v1815 = vpop.f32.mrf.mxu0
  %v1816 = vadd.f32 %v1802, %v1815
  %v1817 = vpop.f32.mrf.mxu0
  %v1818 = vadd.f32 %v1804, %v1817
  %1819 = vdwg.mxu0
  %1820 = vmatpush.bf16.msra.mxu0 %v1751
  %1821 = vmatpush.bf16.msra.mxu0 %v1750
  %1822 = vmatpush.bf16.msra.mxu0 %v1749
  %1823 = vmatpush.bf16.msra.mxu0 %v1748
  %1824 = vmatpush.bf16.msra.mxu0 %v1747
  %1825 = vmatpush.bf16.msra.mxu0 %v1746
  %1826 = vmatpush.bf16.msra.mxu0 %v1745
  %1827 = vmatpush.bf16.msra.mxu0 %v1744
  %1828 = vmatmul.bf16.gmra.mxu0 %v1096
  %v1829 = vpop.f32.mrf.mxu0
  %v1830 = vadd.f32 %v1816, %v1829
  %v1831 = vpop.f32.mrf.mxu0
  %v1832 = vadd.f32 %v1818, %v1831
  %1833 = vdwg.mxu0
  %1834 = vmatpush.bf16.msra.mxu0 %v1759
  %1835 = vmatpush.bf16.msra.mxu0 %v1758
  %1836 = vmatpush.bf16.msra.mxu0 %v1757
  %1837 = vmatpush.bf16.msra.mxu0 %v1756
  %1838 = vmatpush.bf16.msra.mxu0 %v1755
  %1839 = vmatpush.bf16.msra.mxu0 %v1754
  %1840 = vmatpush.bf16.msra.mxu0 %v1753
  %1841 = vmatpush.bf16.msra.mxu0 %v1752
  %1842 = vmatmul.bf16.gmra.mxu0 %v1097
  %v1843 = vpop.f32.mrf.mxu0
  %v1844 = vadd.f32 %v1830, %v1843
  %v1845 = vpop.f32.mrf.mxu0
  %v1846 = vadd.f32 %v1832, %v1845
  %1847 = vdwg.mxu0
  %v1848 = vld [vmem:[%s12 + $0x20] sm:$0xff]
  %v1849 = vld [vmem:[%s12 + $0x28] sm:$0xff]
  %v1850 = vld [vmem:[%s12 + $0x60] sm:$0xff]
  %v1851 = vld [vmem:[%s12 + $0x68] sm:$0xff]
  %v1852 = vld [vmem:[%s12 + $0xa0] sm:$0xff]
  %v1853 = vld [vmem:[%s12 + $0xa8] sm:$0xff]
  %v1854 = vld [vmem:[%s12 + $0xe0] sm:$0xff]
  %v1855 = vld [vmem:[%s12 + $0xe8] sm:$0xff]
  %v1856 = vld [vmem:[%s13 + $0x8] sm:$0xf]
  %v1858 = vperm.slane %v1856, 0
  %v1859 = vperm.slane %v1856, 1
  %v1860 = vperm.slane %v1856, 2
  %v1861 = vperm.slane %v1856, 3
  %v1874 = vunpack.c.l.b16 %v1848
  %v1875 = vunpack.c.h.b16 %v1848
  %v1876 = vunpack.c.l.b16 %v1849
  %v1877 = vunpack.c.h.b16 %v1849
  %v1878 = vunpack.c.l.b16 %v1850
  %v1879 = vunpack.c.h.b16 %v1850
  %v1880 = vunpack.c.l.b16 %v1851
  %v1881 = vunpack.c.h.b16 %v1851
  %v1882 = vunpack.c.l.b16 %v1852
  %v1883 = vunpack.c.h.b16 %v1852
  %v1884 = vunpack.c.l.b16 %v1853
  %v1885 = vunpack.c.h.b16 %v1853
  %v1886 = vunpack.c.l.b16 %v1854
  %v1887 = vunpack.c.h.b16 %v1854
  %v1888 = vunpack.c.l.b16 %v1855
  %v1889 = vunpack.c.h.b16 %v1855
  %v1890 = vpack.c.b16 %v1878, %v1874
  %v1891 = vpack.c.b16 %v1879, %v1875
  %v1892 = vpack.c.b16 %v1880, %v1876
  %v1893 = vpack.c.b16 %v1881, %v1877
  %v1894 = vpack.c.b16 %v1886, %v1882
  %v1895 = vpack.c.b16 %v1887, %v1883
  %v1896 = vpack.c.b16 %v1888, %v1884
  %v1897 = vpack.c.b16 %v1889, %v1885
  %1906 = vmatpush.bf16.msra.mxu0 0
  %1907 = vmatpush.bf16.msra.mxu0 0
  %1908 = vmatpush.bf16.msra.mxu0 0
  %1909 = vmatpush.bf16.msra.mxu0 0
  %1910 = vmatpush.bf16.msra.mxu0 0
  %1911 = vmatpush.bf16.msra.mxu0 0
  %1912 = vmatpush.bf16.msra.mxu0 %v1894
  %1913 = vmatpush.bf16.msra.mxu0 %v1890
  %1914 = vmatmul.bf16.gmra.mxu0 %v1028
  %v1915 = vpop.f32.mrf.mxu0
  %v1916 = vadd.f32 %v1858, %v1915
  %v1917 = vpop.f32.mrf.mxu0
  %v1918 = vadd.f32 %v1858, %v1917
  %1919 = vdwg.mxu0
  %1920 = vmatpush.bf16.msra.mxu0 0
  %1921 = vmatpush.bf16.msra.mxu0 0
  %1922 = vmatpush.bf16.msra.mxu0 0
  %1923 = vmatpush.bf16.msra.mxu0 0
  %1924 = vmatpush.bf16.msra.mxu0 0
  %1925 = vmatpush.bf16.msra.mxu0 0
  %1926 = vmatpush.bf16.msra.mxu0 %v1895
  %1927 = vmatpush.bf16.msra.mxu0 %v1891
  %1928 = vmatmul.bf16.gmra.mxu0 %v1028
  %v1929 = vpop.f32.mrf.mxu0
  %v1930 = vadd.f32 %v1859, %v1929
  %v1931 = vpop.f32.mrf.mxu0
  %v1932 = vadd.f32 %v1859, %v1931
  %1933 = vdwg.mxu0
  %1934 = vmatpush.bf16.msra.mxu0 0
  %1935 = vmatpush.bf16.msra.mxu0 0
  %1936 = vmatpush.bf16.msra.mxu0 0
  %1937 = vmatpush.bf16.msra.mxu0 0
  %1938 = vmatpush.bf16.msra.mxu0 0
  %1939 = vmatpush.bf16.msra.mxu0 0
  %1940 = vmatpush.bf16.msra.mxu0 %v1896
  %1941 = vmatpush.bf16.msra.mxu0 %v1892
  %1942 = vmatmul.bf16.gmra.mxu0 %v1028
  %v1943 = vpop.f32.mrf.mxu0
  %v1944 = vadd.f32 %v1860, %v1943
  %v1945 = vpop.f32.mrf.mxu0
  %v1946 = vadd.f32 %v1860, %v1945
  %1947 = vdwg.mxu0
  %1948 = vmatpush.bf16.msra.mxu0 0
  %1949 = vmatpush.bf16.msra.mxu0 0
  %1950 = vmatpush.bf16.msra.mxu0 0
  %1951 = vmatpush.bf16.msra.mxu0 0
  %1952 = vmatpush.bf16.msra.mxu0 0
  %1953 = vmatpush.bf16.msra.mxu0 0
  %1954 = vmatpush.bf16.msra.mxu0 %v1897
  %1955 = vmatpush.bf16.msra.mxu0 %v1893
  %1956 = vmatmul.bf16.gmra.mxu0 %v1028
  %v1957 = vpop.f32.mrf.mxu0
  %v1958 = vadd.f32 %v1861, %v1957
  %v1959 = vpop.f32.mrf.mxu0
  %v1960 = vadd.f32 %v1861, %v1959
  %1961 = vdwg.mxu0
  %v1962 = vmax.f32 %v1916, 0.0
  %v1963 = vmax.f32 %v1930, 0.0
  %v1964 = vmax.f32 %v1944, 0.0
  %v1965 = vmax.f32 %v1958, 0.0
  %v1966 = vmax.f32 %v1918, 0.0
  %v1967 = vmax.f32 %v1932, 0.0
  %v1968 = vmax.f32 %v1946, 0.0
  %v1969 = vmax.f32 %v1960, 0.0
  %v1970 = vpack.c.bf16 %v1966, %v1962
  %v1971 = vpack.c.bf16 %v1967, %v1963
  %v1972 = vpack.c.bf16 %v1968, %v1964
  %v1973 = vpack.c.bf16 %v1969, %v1965
  %v1974 = vld [vmem:[%s14 + $0x200] sm:$0xf]
  %v1975 = vld [vmem:[%s14 + $0x204] sm:$0xf]
  %v1976 = vld [vmem:[%s14 + $0x208] sm:$0xf]
  %v1977 = vld [vmem:[%s14 + $0x20c] sm:$0xf]
  %v1978 = vld [vmem:[%s14 + $0x210] sm:$0xf]
  %v1979 = vld [vmem:[%s14 + $0x214] sm:$0xf]
  %v1980 = vld [vmem:[%s14 + $0x218] sm:$0xf]
  %v1981 = vld [vmem:[%s14 + $0x21c] sm:$0xf]
  %v1982 = vld [vmem:[%s14 + $0x220] sm:$0xf]
  %v1983 = vld [vmem:[%s14 + $0x224] sm:$0xf]
  %v1984 = vld [vmem:[%s14 + $0x228] sm:$0xf]
  %v1985 = vld [vmem:[%s14 + $0x22c] sm:$0xf]
  %v1986 = vld [vmem:[%s14 + $0x230] sm:$0xf]
  %v1987 = vld [vmem:[%s14 + $0x234] sm:$0xf]
  %v1988 = vld [vmem:[%s14 + $0x238] sm:$0xf]
  %v1989 = vld [vmem:[%s14 + $0x23c] sm:$0xf]
  %v1990 = vld [vmem:[%s14 + $0x240] sm:$0xf]
  %v1991 = vld [vmem:[%s14 + $0x244] sm:$0xf]
  %v1992 = vld [vmem:[%s14 + $0x248] sm:$0xf]
  %v1993 = vld [vmem:[%s14 + $0x24c] sm:$0xf]
  %v1994 = vld [vmem:[%s14 + $0x250] sm:$0xf]
  %v1995 = vld [vmem:[%s14 + $0x254] sm:$0xf]
  %v1996 = vld [vmem:[%s14 + $0x258] sm:$0xf]
  %v1997 = vld [vmem:[%s14 + $0x25c] sm:$0xf]
  %v1998 = vld [vmem:[%s14 + $0x260] sm:$0xf]
  %v1999 = vld [vmem:[%s14 + $0x264] sm:$0xf]
  %v2000 = vld [vmem:[%s14 + $0x268] sm:$0xf]
  %v2001 = vld [vmem:[%s14 + $0x26c] sm:$0xf]
  %v2002 = vld [vmem:[%s14 + $0x270] sm:$0xf]
  %v2003 = vld [vmem:[%s14 + $0x274] sm:$0xf]
  %v2004 = vld [vmem:[%s14 + $0x278] sm:$0xf]
  %v2005 = vld [vmem:[%s14 + $0x27c] sm:$0xf]
  %v2006 = vld [vmem:[%s14 + $0x280] sm:$0xf]
  %v2007 = vld [vmem:[%s14 + $0x284] sm:$0xf]
  %v2008 = vld [vmem:[%s14 + $0x288] sm:$0xf]
  %v2009 = vld [vmem:[%s14 + $0x28c] sm:$0xf]
  %v2010 = vld [vmem:[%s14 + $0x290] sm:$0xf]
  %v2011 = vld [vmem:[%s14 + $0x294] sm:$0xf]
  %v2012 = vld [vmem:[%s14 + $0x298] sm:$0xf]
  %v2013 = vld [vmem:[%s14 + $0x29c] sm:$0xf]
  %v2014 = vld [vmem:[%s14 + $0x2a0] sm:$0xf]
  %v2015 = vld [vmem:[%s14 + $0x2a4] sm:$0xf]
  %v2016 = vld [vmem:[%s14 + $0x2a8] sm:$0xf]
  %v2017 = vld [vmem:[%s14 + $0x2ac] sm:$0xf]
  %v2018 = vld [vmem:[%s14 + $0x2b0] sm:$0xf]
  %v2019 = vld [vmem:[%s14 + $0x2b4] sm:$0xf]
  %v2020 = vld [vmem:[%s14 + $0x2b8] sm:$0xf]
  %v2021 = vld [vmem:[%s14 + $0x2bc] sm:$0xf]
  %v2022 = vld [vmem:[%s14 + $0x2c0] sm:$0xf]
  %v2023 = vld [vmem:[%s14 + $0x2c4] sm:$0xf]
  %v2024 = vld [vmem:[%s14 + $0x2c8] sm:$0xf]
  %v2025 = vld [vmem:[%s14 + $0x2cc] sm:$0xf]
  %v2026 = vld [vmem:[%s14 + $0x2d0] sm:$0xf]
  %v2027 = vld [vmem:[%s14 + $0x2d4] sm:$0xf]
  %v2028 = vld [vmem:[%s14 + $0x2d8] sm:$0xf]
  %v2029 = vld [vmem:[%s14 + $0x2dc] sm:$0xf]
  %v2030 = vld [vmem:[%s14 + $0x2e0] sm:$0xf]
  %v2031 = vld [vmem:[%s14 + $0x2e4] sm:$0xf]
  %v2032 = vld [vmem:[%s14 + $0x2e8] sm:$0xf]
  %v2033 = vld [vmem:[%s14 + $0x2ec] sm:$0xf]
  %v2034 = vld [vmem:[%s14 + $0x2f0] sm:$0xf]
  %v2035 = vld [vmem:[%s14 + $0x2f4] sm:$0xf]
  %v2036 = vld [vmem:[%s14 + $0x2f8] sm:$0xf]
  %v2037 = vld [vmem:[%s14 + $0x2fc] sm:$0xf]
  %v2102 = vunpack.c.l.b16 %v1974
  %v2103 = vunpack.c.l.b16 %v1975
  %v2104 = vunpack.c.l.b16 %v1976
  %v2105 = vunpack.c.l.b16 %v1977
  %v2106 = vunpack.c.l.b16 %v1978
  %v2107 = vunpack.c.l.b16 %v1979
  %v2108 = vunpack.c.l.b16 %v1980
  %v2109 = vunpack.c.l.b16 %v1981
  %v2110 = vunpack.c.l.b16 %v1982
  %v2111 = vunpack.c.l.b16 %v1983
  %v2112 = vunpack.c.l.b16 %v1984
  %v2113 = vunpack.c.l.b16 %v1985
  %v2114 = vunpack.c.l.b16 %v1986
  %v2115 = vunpack.c.l.b16 %v1987
  %v2116 = vunpack.c.l.b16 %v1988
  %v2117 = vunpack.c.l.b16 %v1989
  %v2118 = vunpack.c.l.b16 %v1990
  %v2119 = vunpack.c.l.b16 %v1991
  %v2120 = vunpack.c.l.b16 %v1992
  %v2121 = vunpack.c.l.b16 %v1993
  %v2122 = vunpack.c.l.b16 %v1994
  %v2123 = vunpack.c.l.b16 %v1995
  %v2124 = vunpack.c.l.b16 %v1996
  %v2125 = vunpack.c.l.b16 %v1997
  %v2126 = vunpack.c.l.b16 %v1998
  %v2127 = vunpack.c.l.b16 %v1999
  %v2128 = vunpack.c.l.b16 %v2000
  %v2129 = vunpack.c.l.b16 %v2001
  %v2130 = vunpack.c.l.b16 %v2002
  %v2131 = vunpack.c.l.b16 %v2003
  %v2132 = vunpack.c.l.b16 %v2004
  %v2133 = vunpack.c.l.b16 %v2005
  %v2134 = vunpack.c.l.b16 %v2006
  %v2135 = vunpack.c.l.b16 %v2007
  %v2136 = vunpack.c.l.b16 %v2008
  %v2137 = vunpack.c.l.b16 %v2009
  %v2138 = vunpack.c.l.b16 %v2010
  %v2139 = vunpack.c.l.b16 %v2011
  %v2140 = vunpack.c.l.b16 %v2012
  %v2141 = vunpack.c.l.b16 %v2013
  %v2142 = vunpack.c.l.b16 %v2014
  %v2143 = vunpack.c.l.b16 %v2015
  %v2144 = vunpack.c.l.b16 %v2016
  %v2145 = vunpack.c.l.b16 %v2017
  %v2146 = vunpack.c.l.b16 %v2018
  %v2147 = vunpack.c.l.b16 %v2019
  %v2148 = vunpack.c.l.b16 %v2020
  %v2149 = vunpack.c.l.b16 %v2021
  %v2150 = vunpack.c.l.b16 %v2022
  %v2151 = vunpack.c.l.b16 %v2023
  %v2152 = vunpack.c.l.b16 %v2024
  %v2153 = vunpack.c.l.b16 %v2025
  %v2154 = vunpack.c.l.b16 %v2026
  %v2155 = vunpack.c.l.b16 %v2027
  %v2156 = vunpack.c.l.b16 %v2028
  %v2157 = vunpack.c.l.b16 %v2029
  %v2158 = vunpack.c.l.b16 %v2030
  %v2159 = vunpack.c.l.b16 %v2031
  %v2160 = vunpack.c.l.b16 %v2032
  %v2161 = vunpack.c.l.b16 %v2033
  %v2162 = vunpack.c.l.b16 %v2034
  %v2163 = vunpack.c.l.b16 %v2035
  %v2164 = vunpack.c.l.b16 %v2036
  %v2165 = vunpack.c.l.b16 %v2037
  %v2166 = vpack.c.b16 %v2103, %v2102
  %v2167 = vpack.c.b16 %v2105, %v2104
  %v2168 = vpack.c.b16 %v2107, %v2106
  %v2169 = vpack.c.b16 %v2109, %v2108
  %v2170 = vpack.c.b16 %v2111, %v2110
  %v2171 = vpack.c.b16 %v2113, %v2112
  %v2172 = vpack.c.b16 %v2115, %v2114
  %v2173 = vpack.c.b16 %v2117, %v2116
  %v2174 = vpack.c.b16 %v2119, %v2118
  %v2175 = vpack.c.b16 %v2121, %v2120
  %v2176 = vpack.c.b16 %v2123, %v2122
  %v2177 = vpack.c.b16 %v2125, %v2124
  %v2178 = vpack.c.b16 %v2127, %v2126
  %v2179 = vpack.c.b16 %v2129, %v2128
  %v2180 = vpack.c.b16 %v2131, %v2130
  %v2181 = vpack.c.b16 %v2133, %v2132
  %v2182 = vpack.c.b16 %v2135, %v2134
  %v2183 = vpack.c.b16 %v2137, %v2136
  %v2184 = vpack.c.b16 %v2139, %v2138
  %v2185 = vpack.c.b16 %v2141, %v2140
  %v2186 = vpack.c.b16 %v2143, %v2142
  %v2187 = vpack.c.b16 %v2145, %v2144
  %v2188 = vpack.c.b16 %v2147, %v2146
  %v2189 = vpack.c.b16 %v2149, %v2148
  %v2190 = vpack.c.b16 %v2151, %v2150
  %v2191 = vpack.c.b16 %v2153, %v2152
  %v2192 = vpack.c.b16 %v2155, %v2154
  %v2193 = vpack.c.b16 %v2157, %v2156
  %v2194 = vpack.c.b16 %v2159, %v2158
  %v2195 = vpack.c.b16 %v2161, %v2160
  %v2196 = vpack.c.b16 %v2163, %v2162
  %v2197 = vpack.c.b16 %v2165, %v2164
  %2230 = vmatpush.bf16.msra.mxu0 %v2173
  %2231 = vmatpush.bf16.msra.mxu0 %v2172
  %2232 = vmatpush.bf16.msra.mxu0 %v2171
  %2233 = vmatpush.bf16.msra.mxu0 %v2170
  %2234 = vmatpush.bf16.msra.mxu0 %v2169
  %2235 = vmatpush.bf16.msra.mxu0 %v2168
  %2236 = vmatpush.bf16.msra.mxu0 %v2167
  %2237 = vmatpush.bf16.msra.mxu0 %v2166
  %2238 = vmatmul.bf16.gmra.mxu0 %v1970
  %v2239 = vpop.f32.mrf.mxu0
  %v2240 = vadd.f32 0.0, %v2239
  %v2241 = vpop.f32.mrf.mxu0
  %v2242 = vadd.f32 0.0, %v2241
  %2243 = vdwg.mxu0
  %2244 = vmatpush.bf16.msra.mxu0 %v2181
  %2245 = vmatpush.bf16.msra.mxu0 %v2180
  %2246 = vmatpush.bf16.msra.mxu0 %v2179
  %2247 = vmatpush.bf16.msra.mxu0 %v2178
  %2248 = vmatpush.bf16.msra.mxu0 %v2177
  %2249 = vmatpush.bf16.msra.mxu0 %v2176
  %2250 = vmatpush.bf16.msra.mxu0 %v2175
  %2251 = vmatpush.bf16.msra.mxu0 %v2174
  %2252 = vmatmul.bf16.gmra.mxu0 %v1971
  %v2253 = vpop.f32.mrf.mxu0
  %v2254 = vadd.f32 %v2240, %v2253
  %v2255 = vpop.f32.mrf.mxu0
  %v2256 = vadd.f32 %v2242, %v2255
  %2257 = vdwg.mxu0
  %2258 = vmatpush.bf16.msra.mxu0 %v2189
  %2259 = vmatpush.bf16.msra.mxu0 %v2188
  %2260 = vmatpush.bf16.msra.mxu0 %v2187
  %2261 = vmatpush.bf16.msra.mxu0 %v2186
  %2262 = vmatpush.bf16.msra.mxu0 %v2185
  %2263 = vmatpush.bf16.msra.mxu0 %v2184
  %2264 = vmatpush.bf16.msra.mxu0 %v2183
  %2265 = vmatpush.bf16.msra.mxu0 %v2182
  %2266 = vmatmul.bf16.gmra.mxu0 %v1972
  %v2267 = vpop.f32.mrf.mxu0
  %v2268 = vadd.f32 %v2254, %v2267
  %v2269 = vpop.f32.mrf.mxu0
  %v2270 = vadd.f32 %v2256, %v2269
  %2271 = vdwg.mxu0
  %2272 = vmatpush.bf16.msra.mxu0 %v2197
  %2273 = vmatpush.bf16.msra.mxu0 %v2196
  %2274 = vmatpush.bf16.msra.mxu0 %v2195
  %2275 = vmatpush.bf16.msra.mxu0 %v2194
  %2276 = vmatpush.bf16.msra.mxu0 %v2193
  %2277 = vmatpush.bf16.msra.mxu0 %v2192
  %2278 = vmatpush.bf16.msra.mxu0 %v2191
  %2279 = vmatpush.bf16.msra.mxu0 %v2190
  %2280 = vmatmul.bf16.gmra.mxu0 %v1973
  %v2281 = vpop.f32.mrf.mxu0
  %v2282 = vadd.f32 %v2268, %v2281
  %v2283 = vpop.f32.mrf.mxu0
  %v2284 = vadd.f32 %v2270, %v2283
  %2285 = vdwg.mxu0
  %v2286 = vadd.f32 %v1844, %v2282
  %v2287 = vadd.f32 %v1846, %v2284
  %v2288 = vld [vmem:[%s12 + $0x30] sm:$0xff]
  %v2289 = vld [vmem:[%s12 + $0x38] sm:$0xff]
  %v2290 = vld [vmem:[%s12 + $0x70] sm:$0xff]
  %v2291 = vld [vmem:[%s12 + $0x78] sm:$0xff]
  %v2292 = vld [vmem:[%s12 + $0xb0] sm:$0xff]
  %v2293 = vld [vmem:[%s12 + $0xb8] sm:$0xff]
  %v2294 = vld [vmem:[%s12 + $0xf0] sm:$0xff]
  %v2295 = vld [vmem:[%s12 + $0xf8] sm:$0xff]
  %v2296 = vld [vmem:[%s13 + $0xc] sm:$0xf]
  %v2298 = vperm.slane %v2296, 0
  %v2299 = vperm.slane %v2296, 1
  %v2300 = vperm.slane %v2296, 2
  %v2301 = vperm.slane %v2296, 3
  %v2314 = vunpack.c.l.b16 %v2288
  %v2315 = vunpack.c.h.b16 %v2288
  %v2316 = vunpack.c.l.b16 %v2289
  %v2317 = vunpack.c.h.b16 %v2289
  %v2318 = vunpack.c.l.b16 %v2290
  %v2319 = vunpack.c.h.b16 %v2290
  %v2320 = vunpack.c.l.b16 %v2291
  %v2321 = vunpack.c.h.b16 %v2291
  %v2322 = vunpack.c.l.b16 %v2292
  %v2323 = vunpack.c.h.b16 %v2292
  %v2324 = vunpack.c.l.b16 %v2293
  %v2325 = vunpack.c.h.b16 %v2293
  %v2326 = vunpack.c.l.b16 %v2294
  %v2327 = vunpack.c.h.b16 %v2294
  %v2328 = vunpack.c.l.b16 %v2295
  %v2329 = vunpack.c.h.b16 %v2295
  %v2330 = vpack.c.b16 %v2318, %v2314
  %v2331 = vpack.c.b16 %v2319, %v2315
  %v2332 = vpack.c.b16 %v2320, %v2316
  %v2333 = vpack.c.b16 %v2321, %v2317
  %v2334 = vpack.c.b16 %v2326, %v2322
  %v2335 = vpack.c.b16 %v2327, %v2323
  %v2336 = vpack.c.b16 %v2328, %v2324
  %v2337 = vpack.c.b16 %v2329, %v2325
  %2346 = vmatpush.bf16.msra.mxu0 0
  %2347 = vmatpush.bf16.msra.mxu0 0
  %2348 = vmatpush.bf16.msra.mxu0 0
  %2349 = vmatpush.bf16.msra.mxu0 0
  %2350 = vmatpush.bf16.msra.mxu0 0
  %2351 = vmatpush.bf16.msra.mxu0 0
  %2352 = vmatpush.bf16.msra.mxu0 %v2334
  %2353 = vmatpush.bf16.msra.mxu0 %v2330
  %2354 = vmatmul.bf16.gmra.mxu0 %v1028
  %v2355 = vpop.f32.mrf.mxu0
  %v2356 = vadd.f32 %v2298, %v2355
  %v2357 = vpop.f32.mrf.mxu0
  %v2358 = vadd.f32 %v2298, %v2357
  %2359 = vdwg.mxu0
  %2360 = vmatpush.bf16.msra.mxu0 0
  %2361 = vmatpush.bf16.msra.mxu0 0
  %2362 = vmatpush.bf16.msra.mxu0 0
  %2363 = vmatpush.bf16.msra.mxu0 0
  %2364 = vmatpush.bf16.msra.mxu0 0
  %2365 = vmatpush.bf16.msra.mxu0 0
  %2366 = vmatpush.bf16.msra.mxu0 %v2335
  %2367 = vmatpush.bf16.msra.mxu0 %v2331
  %2368 = vmatmul.bf16.gmra.mxu0 %v1028
  %v2369 = vpop.f32.mrf.mxu0
  %v2370 = vadd.f32 %v2299, %v2369
  %v2371 = vpop.f32.mrf.mxu0
  %v2372 = vadd.f32 %v2299, %v2371
  %2373 = vdwg.mxu0
  %2374 = vmatpush.bf16.msra.mxu0 0
  %2375 = vmatpush.bf16.msra.mxu0 0
  %2376 = vmatpush.bf16.msra.mxu0 0
  %2377 = vmatpush.bf16.msra.mxu0 0
  %2378 = vmatpush.bf16.msra.mxu0 0
  %2379 = vmatpush.bf16.msra.mxu0 0
  %2380 = vmatpush.bf16.msra.mxu0 %v2336
  %2381 = vmatpush.bf16.msra.mxu0 %v2332
  %2382 = vmatmul.bf16.gmra.mxu0 %v1028
  %v2383 = vpop.f32.mrf.mxu0
  %v2384 = vadd.f32 %v2300, %v2383
  %v2385 = vpop.f32.mrf.mxu0
  %v2386 = vadd.f32 %v2300, %v2385
  %2387 = vdwg.mxu0
  %2388 = vmatpush.bf16.msra.mxu0 0
  %2389 = vmatpush.bf16.msra.mxu0 0
  %2390 = vmatpush.bf16.msra.mxu0 0
  %2391 = vmatpush.bf16.msra.mxu0 0
  %2392 = vmatpush.bf16.msra.mxu0 0
  %2393 = vmatpush.bf16.msra.mxu0 0
  %2394 = vmatpush.bf16.msra.mxu0 %v2337
  %2395 = vmatpush.bf16.msra.mxu0 %v2333
  %2396 = vmatmul.bf16.gmra.mxu0 %v1028
  %v2397 = vpop.f32.mrf.mxu0
  %v2398 = vadd.f32 %v2301, %v2397
  %v2399 = vpop.f32.mrf.mxu0
  %v2400 = vadd.f32 %v2301, %v2399
  %2401 = vdwg.mxu0
  %v2402 = vmax.f32 %v2356, 0.0
  %v2403 = vmax.f32 %v2370, 0.0
  %v2404 = vmax.f32 %v2384, 0.0
  %v2405 = vmax.f32 %v2398, 0.0
  %v2406 = vmax.f32 %v2358, 0.0
  %v2407 = vmax.f32 %v2372, 0.0
  %v2408 = vmax.f32 %v2386, 0.0
  %v2409 = vmax.f32 %v2400, 0.0
  %v2410 = vpack.c.bf16 %v2406, %v2402
  %v2411 = vpack.c.bf16 %v2407, %v2403
  %v2412 = vpack.c.bf16 %v2408, %v2404
  %v2413 = vpack.c.bf16 %v2409, %v2405
  %v2414 = vld [vmem:[%s14 + $0x300] sm:$0xf]
  %v2415 = vld [vmem:[%s14 + $0x304] sm:$0xf]
  %v2416 = vld [vmem:[%s14 + $0x308] sm:$0xf]
  %v2417 = vld [vmem:[%s14 + $0x30c] sm:$0xf]
  %v2418 = vld [vmem:[%s14 + $0x310] sm:$0xf]
  %v2419 = vld [vmem:[%s14 + $0x314] sm:$0xf]
  %v2420 = vld [vmem:[%s14 + $0x318] sm:$0xf]
  %v2421 = vld [vmem:[%s14 + $0x31c] sm:$0xf]
  %v2422 = vld [vmem:[%s14 + $0x320] sm:$0xf]
  %v2423 = vld [vmem:[%s14 + $0x324] sm:$0xf]
  %v2424 = vld [vmem:[%s14 + $0x328] sm:$0xf]
  %v2425 = vld [vmem:[%s14 + $0x32c] sm:$0xf]
  %v2426 = vld [vmem:[%s14 + $0x330] sm:$0xf]
  %v2427 = vld [vmem:[%s14 + $0x334] sm:$0xf]
  %v2428 = vld [vmem:[%s14 + $0x338] sm:$0xf]
  %v2429 = vld [vmem:[%s14 + $0x33c] sm:$0xf]
  %v2430 = vld [vmem:[%s14 + $0x340] sm:$0xf]
  %v2431 = vld [vmem:[%s14 + $0x344] sm:$0xf]
  %v2432 = vld [vmem:[%s14 + $0x348] sm:$0xf]
  %v2433 = vld [vmem:[%s14 + $0x34c] sm:$0xf]
  %v2434 = vld [vmem:[%s14 + $0x350] sm:$0xf]
  %v2435 = vld [vmem:[%s14 + $0x354] sm:$0xf]
  %v2436 = vld [vmem:[%s14 + $0x358] sm:$0xf]
  %v2437 = vld [vmem:[%s14 + $0x35c] sm:$0xf]
  %v2438 = vld [vmem:[%s14 + $0x360] sm:$0xf]
  %v2439 = vld [vmem:[%s14 + $0x364] sm:$0xf]
  %v2440 = vld [vmem:[%s14 + $0x368] sm:$0xf]
  %v2441 = vld [vmem:[%s14 + $0x36c] sm:$0xf]
  %v2442 = vld [vmem:[%s14 + $0x370] sm:$0xf]
  %v2443 = vld [vmem:[%s14 + $0x374] sm:$0xf]
  %v2444 = vld [vmem:[%s14 + $0x378] sm:$0xf]
  %v2445 = vld [vmem:[%s14 + $0x37c] sm:$0xf]
  %v2446 = vld [vmem:[%s14 + $0x380] sm:$0xf]
  %v2447 = vld [vmem:[%s14 + $0x384] sm:$0xf]
  %v2448 = vld [vmem:[%s14 + $0x388] sm:$0xf]
  %v2449 = vld [vmem:[%s14 + $0x38c] sm:$0xf]
  %v2450 = vld [vmem:[%s14 + $0x390] sm:$0xf]
  %v2451 = vld [vmem:[%s14 + $0x394] sm:$0xf]
  %v2452 = vld [vmem:[%s14 + $0x398] sm:$0xf]
  %v2453 = vld [vmem:[%s14 + $0x39c] sm:$0xf]
  %v2454 = vld [vmem:[%s14 + $0x3a0] sm:$0xf]
  %v2455 = vld [vmem:[%s14 + $0x3a4] sm:$0xf]
  %v2456 = vld [vmem:[%s14 + $0x3a8] sm:$0xf]
  %v2457 = vld [vmem:[%s14 + $0x3ac] sm:$0xf]
  %v2458 = vld [vmem:[%s14 + $0x3b0] sm:$0xf]
  %v2459 = vld [vmem:[%s14 + $0x3b4] sm:$0xf]
  %v2460 = vld [vmem:[%s14 + $0x3b8] sm:$0xf]
  %v2461 = vld [vmem:[%s14 + $0x3bc] sm:$0xf]
  %v2462 = vld [vmem:[%s14 + $0x3c0] sm:$0xf]
  %v2463 = vld [vmem:[%s14 + $0x3c4] sm:$0xf]
  %v2464 = vld [vmem:[%s14 + $0x3c8] sm:$0xf]
  %v2465 = vld [vmem:[%s14 + $0x3cc] sm:$0xf]
  %v2466 = vld [vmem:[%s14 + $0x3d0] sm:$0xf]
  %v2467 = vld [vmem:[%s14 + $0x3d4] sm:$0xf]
  %v2468 = vld [vmem:[%s14 + $0x3d8] sm:$0xf]
  %v2469 = vld [vmem:[%s14 + $0x3dc] sm:$0xf]
  %v2470 = vld [vmem:[%s14 + $0x3e0] sm:$0xf]
  %v2471 = vld [vmem:[%s14 + $0x3e4] sm:$0xf]
  %v2472 = vld [vmem:[%s14 + $0x3e8] sm:$0xf]
  %v2473 = vld [vmem:[%s14 + $0x3ec] sm:$0xf]
  %v2474 = vld [vmem:[%s14 + $0x3f0] sm:$0xf]
  %v2475 = vld [vmem:[%s14 + $0x3f4] sm:$0xf]
  %v2476 = vld [vmem:[%s14 + $0x3f8] sm:$0xf]
  %v2477 = vld [vmem:[%s14 + $0x3fc] sm:$0xf]
  %v2542 = vunpack.c.l.b16 %v2414
  %v2543 = vunpack.c.l.b16 %v2415
  %v2544 = vunpack.c.l.b16 %v2416
  %v2545 = vunpack.c.l.b16 %v2417
  %v2546 = vunpack.c.l.b16 %v2418
  %v2547 = vunpack.c.l.b16 %v2419
  %v2548 = vunpack.c.l.b16 %v2420
  %v2549 = vunpack.c.l.b16 %v2421
  %v2550 = vunpack.c.l.b16 %v2422
  %v2551 = vunpack.c.l.b16 %v2423
  %v2552 = vunpack.c.l.b16 %v2424
  %v2553 = vunpack.c.l.b16 %v2425
  %v2554 = vunpack.c.l.b16 %v2426
  %v2555 = vunpack.c.l.b16 %v2427
  %v2556 = vunpack.c.l.b16 %v2428
  %v2557 = vunpack.c.l.b16 %v2429
  %v2558 = vunpack.c.l.b16 %v2430
  %v2559 = vunpack.c.l.b16 %v2431
  %v2560 = vunpack.c.l.b16 %v2432
  %v2561 = vunpack.c.l.b16 %v2433
  %v2562 = vunpack.c.l.b16 %v2434
  %v2563 = vunpack.c.l.b16 %v2435
  %v2564 = vunpack.c.l.b16 %v2436
  %v2565 = vunpack.c.l.b16 %v2437
  %v2566 = vunpack.c.l.b16 %v2438
  %v2567 = vunpack.c.l.b16 %v2439
  %v2568 = vunpack.c.l.b16 %v2440
  %v2569 = vunpack.c.l.b16 %v2441
  %v2570 = vunpack.c.l.b16 %v2442
  %v2571 = vunpack.c.l.b16 %v2443
  %v2572 = vunpack.c.l.b16 %v2444
  %v2573 = vunpack.c.l.b16 %v2445
  %v2574 = vunpack.c.l.b16 %v2446
  %v2575 = vunpack.c.l.b16 %v2447
  %v2576 = vunpack.c.l.b16 %v2448
  %v2577 = vunpack.c.l.b16 %v2449
  %v2578 = vunpack.c.l.b16 %v2450
  %v2579 = vunpack.c.l.b16 %v2451
  %v2580 = vunpack.c.l.b16 %v2452
  %v2581 = vunpack.c.l.b16 %v2453
  %v2582 = vunpack.c.l.b16 %v2454
  %v2583 = vunpack.c.l.b16 %v2455
  %v2584 = vunpack.c.l.b16 %v2456
  %v2585 = vunpack.c.l.b16 %v2457
  %v2586 = vunpack.c.l.b16 %v2458
  %v2587 = vunpack.c.l.b16 %v2459
  %v2588 = vunpack.c.l.b16 %v2460
  %v2589 = vunpack.c.l.b16 %v2461
  %v2590 = vunpack.c.l.b16 %v2462
  %v2591 = vunpack.c.l.b16 %v2463
  %v2592 = vunpack.c.l.b16 %v2464
  %v2593 = vunpack.c.l.b16 %v2465
  %v2594 = vunpack.c.l.b16 %v2466
  %v2595 = vunpack.c.l.b16 %v2467
  %v2596 = vunpack.c.l.b16 %v2468
  %v2597 = vunpack.c.l.b16 %v2469
  %v2598 = vunpack.c.l.b16 %v2470
  %v2599 = vunpack.c.l.b16 %v2471
  %v2600 = vunpack.c.l.b16 %v2472
  %v2601 = vunpack.c.l.b16 %v2473
  %v2602 = vunpack.c.l.b16 %v2474
  %v2603 = vunpack.c.l.b16 %v2475
  %v2604 = vunpack.c.l.b16 %v2476
  %v2605 = vunpack.c.l.b16 %v2477
  %v2606 = vpack.c.b16 %v2543, %v2542
  %v2607 = vpack.c.b16 %v2545, %v2544
  %v2608 = vpack.c.b16 %v2547, %v2546
  %v2609 = vpack.c.b16 %v2549, %v2548
  %v2610 = vpack.c.b16 %v2551, %v2550
  %v2611 = vpack.c.b16 %v2553, %v2552
  %v2612 = vpack.c.b16 %v2555, %v2554
  %v2613 = vpack.c.b16 %v2557, %v2556
  %v2614 = vpack.c.b16 %v2559, %v2558
  %v2615 = vpack.c.b16 %v2561, %v2560
  %v2616 = vpack.c.b16 %v2563, %v2562
  %v2617 = vpack.c.b16 %v2565, %v2564
  %v2618 = vpack.c.b16 %v2567, %v2566
  %v2619 = vpack.c.b16 %v2569, %v2568
  %v2620 = vpack.c.b16 %v2571, %v2570
  %v2621 = vpack.c.b16 %v2573, %v2572
  %v2622 = vpack.c.b16 %v2575, %v2574
  %v2623 = vpack.c.b16 %v2577, %v2576
  %v2624 = vpack.c.b16 %v2579, %v2578
  %v2625 = vpack.c.b16 %v2581, %v2580
  %v2626 = vpack.c.b16 %v2583, %v2582
  %v2627 = vpack.c.b16 %v2585, %v2584
  %v2628 = vpack.c.b16 %v2587, %v2586
  %v2629 = vpack.c.b16 %v2589, %v2588
  %v2630 = vpack.c.b16 %v2591, %v2590
  %v2631 = vpack.c.b16 %v2593, %v2592
  %v2632 = vpack.c.b16 %v2595, %v2594
  %v2633 = vpack.c.b16 %v2597, %v2596
  %v2634 = vpack.c.b16 %v2599, %v2598
  %v2635 = vpack.c.b16 %v2601, %v2600
  %v2636 = vpack.c.b16 %v2603, %v2602
  %v2637 = vpack.c.b16 %v2605, %v2604
  %2670 = vmatpush.bf16.msra.mxu0 %v2613
  %2671 = vmatpush.bf16.msra.mxu0 %v2612
  %2672 = vmatpush.bf16.msra.mxu0 %v2611
  %2673 = vmatpush.bf16.msra.mxu0 %v2610
  %2674 = vmatpush.bf16.msra.mxu0 %v2609
  %2675 = vmatpush.bf16.msra.mxu0 %v2608
  %2676 = vmatpush.bf16.msra.mxu0 %v2607
  %2677 = vmatpush.bf16.msra.mxu0 %v2606
  %2678 = vmatmul.bf16.gmra.mxu0 %v2410
  %v2679 = vpop.f32.mrf.mxu0
  %v2680 = vadd.f32 0.0, %v2679
  %v2681 = vpop.f32.mrf.mxu0
  %v2682 = vadd.f32 0.0, %v2681
  %2683 = vdwg.mxu0
  %2684 = vmatpush.bf16.msra.mxu0 %v2621
  %2685 = vmatpush.bf16.msra.mxu0 %v2620
  %2686 = vmatpush.bf16.msra.mxu0 %v2619
  %2687 = vmatpush.bf16.msra.mxu0 %v2618
  %2688 = vmatpush.bf16.msra.mxu0 %v2617
  %2689 = vmatpush.bf16.msra.mxu0 %v2616
  %2690 = vmatpush.bf16.msra.mxu0 %v2615
  %2691 = vmatpush.bf16.msra.mxu0 %v2614
  %2692 = vmatmul.bf16.gmra.mxu0 %v2411
  %v2693 = vpop.f32.mrf.mxu0
  %v2694 = vadd.f32 %v2680, %v2693
  %v2695 = vpop.f32.mrf.mxu0
  %v2696 = vadd.f32 %v2682, %v2695
  %2697 = vdwg.mxu0
  %2698 = vmatpush.bf16.msra.mxu0 %v2629
  %2699 = vmatpush.bf16.msra.mxu0 %v2628
  %2700 = vmatpush.bf16.msra.mxu0 %v2627
  %2701 = vmatpush.bf16.msra.mxu0 %v2626
  %2702 = vmatpush.bf16.msra.mxu0 %v2625
  %2703 = vmatpush.bf16.msra.mxu0 %v2624
  %2704 = vmatpush.bf16.msra.mxu0 %v2623
  %2705 = vmatpush.bf16.msra.mxu0 %v2622
  %2706 = vmatmul.bf16.gmra.mxu0 %v2412
  %v2707 = vpop.f32.mrf.mxu0
  %v2708 = vadd.f32 %v2694, %v2707
  %v2709 = vpop.f32.mrf.mxu0
  %v2710 = vadd.f32 %v2696, %v2709
  %2711 = vdwg.mxu0
  %2712 = vmatpush.bf16.msra.mxu0 %v2637
  %2713 = vmatpush.bf16.msra.mxu0 %v2636
  %2714 = vmatpush.bf16.msra.mxu0 %v2635
  %2715 = vmatpush.bf16.msra.mxu0 %v2634
  %2716 = vmatpush.bf16.msra.mxu0 %v2633
  %2717 = vmatpush.bf16.msra.mxu0 %v2632
  %2718 = vmatpush.bf16.msra.mxu0 %v2631
  %2719 = vmatpush.bf16.msra.mxu0 %v2630
  %2720 = vmatmul.bf16.gmra.mxu0 %v2413
  %v2721 = vpop.f32.mrf.mxu0
  %v2722 = vadd.f32 %v2708, %v2721
  %v2723 = vpop.f32.mrf.mxu0
  %v2724 = vadd.f32 %v2710, %v2723
  %2725 = vdwg.mxu0
  %v2726 = vadd.f32 %v2286, %v2722
  %v2727 = vadd.f32 %v2287, %v2724
  %v2728 = vadd.f32 %v966, %v2726
  %v2729 = vadd.f32 %v967, %v2727
  %v2731 = vperm.slane %v127, 0
  %v2733 = vadd.f32 %v2728, %v2731
  %v2734 = vadd.f32 %v2729, %v2731
  %v2735 = vsel %vm154, %v2733, 0.0
  %2736 = vadd.xlane.f32.xlu0 %v2735
  %v2737 = vpop.xlane.xlu0 %2736
  %v2738 = vsel %vm154, %v2734, 0.0
  %2739 = vadd.xlane.f32.xlu0 %v2738
  %v2740 = vpop.xlane.xlu0 %2739
  %v2741 = vmul.f32 %v2737, %v919
  %v2742 = vmul.f32 %v2740, %v919
  %v2743 = vsub.f32 %v2733, %v2741
  %v2744 = vsub.f32 %v2734, %v2742
  %v2745 = vmul.f32 %v2743, %v2743
  %v2746 = vmul.f32 %v2744, %v2744
  %v2747 = vsel %vm154, %v2745, 0.0
  %2748 = vadd.xlane.f32.xlu0 %v2747
  %v2749 = vpop.xlane.xlu0 %2748
  %v2750 = vsel %vm154, %v2746, 0.0
  %2751 = vadd.xlane.f32.xlu0 %v2750
  %v2752 = vpop.xlane.xlu0 %2751
  %v2753 = vmul.f32 %v2749, %v919
  %v2754 = vmul.f32 %v2752, %v919
  %v2755 = vadd.f32 %v2753, 1e-05
  %v2756 = vadd.f32 %v2754, 1e-05
  %v2757 = vrsqrt.pop %v2755
  %v2758 = vmul.f32 %v2757, %v2755
  %v2759 = vmul.f32 %v2758, %v2757
  %v2760 = vmul.f32 0.5, %v2759
  %v2761 = vsub.f32 1.5, %v2760
  %v2762 = vmul.f32 %v2757, %v2761
  %vm2763 = vweird.f32 %v2755
  %vm2764 = vweird.f32 %v2757
  %vm2765 = vmor %vm2763, %vm2764
  %v2766 = vsel %vm2765, %v2757, %v2762
  %v2767 = vrsqrt.pop %v2756
  %v2768 = vmul.f32 %v2767, %v2756
  %v2769 = vmul.f32 %v2768, %v2767
  %v2770 = vmul.f32 0.5, %v2769
  %v2771 = vsub.f32 1.5, %v2770
  %v2772 = vmul.f32 %v2767, %v2771
  %vm2773 = vweird.f32 %v2756
  %vm2774 = vweird.f32 %v2767
  %vm2775 = vmor %vm2773, %vm2774
  %v2776 = vsel %vm2775, %v2767, %v2772
  %v2777 = vmul.f32 %v2743, %v2766
  %v2778 = vmul.f32 %v2744, %v2776
  %v2780 = vperm.slane %v125, 0
  %v2782 = vmul.f32 %v2777, %v2780
  %v2783 = vmul.f32 %v2778, %v2780
  %v2785 = vperm.slane %v126, 0
  %v2787 = vadd.f32 %v2782, %v2785
  %v2788 = vadd.f32 %v2783, %v2785
  %v2789 = vpack.c.bf16 %v2788, %v2787
  %v2791 = vsel %vm154, %v2789, 0
  %2793 = vmatpush.bf16.msra.mxu0 0
  %2794 = vmatpush.bf16.msra.mxu0 0
  %2795 = vmatpush.bf16.msra.mxu0 0
  %2796 = vmatpush.bf16.msra.mxu0 0
  %2797 = vmatpush.bf16.msra.mxu0 0
  %2798 = vmatpush.bf16.msra.mxu0 0
  %2799 = vmatpush.bf16.msra.mxu0 %v151
  %2800 = vmatpush.bf16.msra.mxu0 %v150
  %2801 = vmatmul.bf16.gmra.mxu0 %v2791
  %v2802 = vpop.f32.mrf.mxu0
  %v2803 = vadd.f32 %v140, %v2802
  %v2804 = vpop.f32.mrf.mxu0
  %v2805 = vadd.f32 %v140, %v2804
  %2806 = vdwg.mxu0
  %2809 = vrot.lane.b32.xlu0 %v2803, 120
  %v2810 = vpop.permute.xlu0 %2809
  %2811 = vrot.lane.b32.xlu0 %v2805, 120
  %v2812 = vpop.permute.xlu0 %2811
  %2815 = vrot.lane.b32.xlu0 %v2803, 112
  %v2816 = vpop.permute.xlu0 %2815
  %2817 = vrot.lane.b32.xlu0 %v2805, 112
  %v2818 = vpop.permute.xlu0 %2817
  %2821 = vrot.lane.b32.xlu0 %v2803, 104
  %v2822 = vpop.permute.xlu0 %2821
  %2823 = vrot.lane.b32.xlu0 %v2805, 104
  %v2824 = vpop.permute.xlu0 %2823
  %v2827 = vpack.c.bf16 %v2803, %v2803
  %v2828 = vpack.c.bf16 %v2805, %v2805
  %v2829 = vpack.c.bf16 %v2810, %v2810
  %v2830 = vpack.c.bf16 %v2812, %v2812
  %v2831 = vpack.c.bf16 %v2816, %v2816
  %v2832 = vpack.c.bf16 %v2818, %v2818
  %v2833 = vpack.c.bf16 %v2822, %v2822
  %v2834 = vpack.c.bf16 %v2824, %v2824
  %v2836 = vunpack.c.l.b16 %v2827
  %v2837 = vpack.c.b16 %v2836, %v2836
  %2838 = vrot.lane.b32.xlu0 %v2837, 96
  %v2839 = vpop.permute.xlu0 %2838
  %v2841 = vsel %vm205, %v2827, 0
  %v2844 = vsel %vm205, %v2839, 0
  %2846 = vmatpush.bf16.xpose.msra.mxu0 0
  %2847 = vmatpush.bf16.xpose.msra.mxu0 0
  %2848 = vmatpush.bf16.xpose.msra.mxu0 0
  %2849 = vmatpush.bf16.xpose.msra.mxu0 0
  %2850 = vmatpush.bf16.xpose.msra.mxu0 0
  %2851 = vmatpush.bf16.xpose.msra.mxu0 0
  %2852 = vmatpush.bf16.xpose.msra.mxu0 0
  %2853 = vmatpush.bf16.xpose.msra.mxu0 %v2844
  %2854 = vmatmul.bf16.gmra.mxu0 %v2841
  %v2855 = vpop.f32.mrf.mxu0
  %v2856 = vadd.f32 0.0, %v2855
  %v2857 = vpop.f32.mrf.mxu0
  %2858 = vdwg.mxu0
  %v2860 = vunpack.c.l.b16 %v2828
  %v2861 = vpack.c.b16 %v2860, %v2860
  %2862 = vrot.lane.b32.xlu0 %v2861, 96
  %v2863 = vpop.permute.xlu0 %2862
  %v2865 = vsel %vm205, %v2828, 0
  %v2868 = vsel %vm205, %v2863, 0
  %2870 = vmatpush.bf16.xpose.msra.mxu0 0
  %2871 = vmatpush.bf16.xpose.msra.mxu0 0
  %2872 = vmatpush.bf16.xpose.msra.mxu0 0
  %2873 = vmatpush.bf16.xpose.msra.mxu0 0
  %2874 = vmatpush.bf16.xpose.msra.mxu0 0
  %2875 = vmatpush.bf16.xpose.msra.mxu0 0
  %2876 = vmatpush.bf16.xpose.msra.mxu0 0
  %2877 = vmatpush.bf16.xpose.msra.mxu0 %v2868
  %2878 = vmatmul.bf16.gmra.mxu0 %v2865
  %v2879 = vpop.f32.mrf.mxu0
  %v2880 = vadd.f32 0.0, %v2879
  %v2881 = vpop.f32.mrf.mxu0
  %2882 = vdwg.mxu0
  %v2884 = vunpack.c.l.b16 %v2829
  %v2885 = vpack.c.b16 %v2884, %v2884
  %2886 = vrot.lane.b32.xlu0 %v2885, 96
  %v2887 = vpop.permute.xlu0 %2886
  %v2889 = vsel %vm205, %v2829, 0
  %v2892 = vsel %vm205, %v2887, 0
  %2894 = vmatpush.bf16.xpose.msra.mxu0 0
  %2895 = vmatpush.bf16.xpose.msra.mxu0 0
  %2896 = vmatpush.bf16.xpose.msra.mxu0 0
  %2897 = vmatpush.bf16.xpose.msra.mxu0 0
  %2898 = vmatpush.bf16.xpose.msra.mxu0 0
  %2899 = vmatpush.bf16.xpose.msra.mxu0 0
  %2900 = vmatpush.bf16.xpose.msra.mxu0 0
  %2901 = vmatpush.bf16.xpose.msra.mxu0 %v2892
  %2902 = vmatmul.bf16.gmra.mxu0 %v2889
  %v2903 = vpop.f32.mrf.mxu0
  %v2904 = vadd.f32 0.0, %v2903
  %v2905 = vpop.f32.mrf.mxu0
  %2906 = vdwg.mxu0
  %v2908 = vunpack.c.l.b16 %v2830
  %v2909 = vpack.c.b16 %v2908, %v2908
  %2910 = vrot.lane.b32.xlu0 %v2909, 96
  %v2911 = vpop.permute.xlu0 %2910
  %v2913 = vsel %vm205, %v2830, 0
  %v2916 = vsel %vm205, %v2911, 0
  %2918 = vmatpush.bf16.xpose.msra.mxu0 0
  %2919 = vmatpush.bf16.xpose.msra.mxu0 0
  %2920 = vmatpush.bf16.xpose.msra.mxu0 0
  %2921 = vmatpush.bf16.xpose.msra.mxu0 0
  %2922 = vmatpush.bf16.xpose.msra.mxu0 0
  %2923 = vmatpush.bf16.xpose.msra.mxu0 0
  %2924 = vmatpush.bf16.xpose.msra.mxu0 0
  %2925 = vmatpush.bf16.xpose.msra.mxu0 %v2916
  %2926 = vmatmul.bf16.gmra.mxu0 %v2913
  %v2927 = vpop.f32.mrf.mxu0
  %v2928 = vadd.f32 0.0, %v2927
  %v2929 = vpop.f32.mrf.mxu0
  %2930 = vdwg.mxu0
  %v2932 = vunpack.c.l.b16 %v2831
  %v2933 = vpack.c.b16 %v2932, %v2932
  %2934 = vrot.lane.b32.xlu0 %v2933, 96
  %v2935 = vpop.permute.xlu0 %2934
  %v2937 = vsel %vm205, %v2831, 0
  %v2940 = vsel %vm205, %v2935, 0
  %2942 = vmatpush.bf16.xpose.msra.mxu0 0
  %2943 = vmatpush.bf16.xpose.msra.mxu0 0
  %2944 = vmatpush.bf16.xpose.msra.mxu0 0
  %2945 = vmatpush.bf16.xpose.msra.mxu0 0
  %2946 = vmatpush.bf16.xpose.msra.mxu0 0
  %2947 = vmatpush.bf16.xpose.msra.mxu0 0
  %2948 = vmatpush.bf16.xpose.msra.mxu0 0
  %2949 = vmatpush.bf16.xpose.msra.mxu0 %v2940
  %2950 = vmatmul.bf16.gmra.mxu0 %v2937
  %v2951 = vpop.f32.mrf.mxu0
  %v2952 = vadd.f32 0.0, %v2951
  %v2953 = vpop.f32.mrf.mxu0
  %2954 = vdwg.mxu0
  %v2956 = vunpack.c.l.b16 %v2832
  %v2957 = vpack.c.b16 %v2956, %v2956
  %2958 = vrot.lane.b32.xlu0 %v2957, 96
  %v2959 = vpop.permute.xlu0 %2958
  %v2961 = vsel %vm205, %v2832, 0
  %v2964 = vsel %vm205, %v2959, 0
  %2966 = vmatpush.bf16.xpose.msra.mxu0 0
  %2967 = vmatpush.bf16.xpose.msra.mxu0 0
  %2968 = vmatpush.bf16.xpose.msra.mxu0 0
  %2969 = vmatpush.bf16.xpose.msra.mxu0 0
  %2970 = vmatpush.bf16.xpose.msra.mxu0 0
  %2971 = vmatpush.bf16.xpose.msra.mxu0 0
  %2972 = vmatpush.bf16.xpose.msra.mxu0 0
  %2973 = vmatpush.bf16.xpose.msra.mxu0 %v2964
  %2974 = vmatmul.bf16.gmra.mxu0 %v2961
  %v2975 = vpop.f32.mrf.mxu0
  %v2976 = vadd.f32 0.0, %v2975
  %v2977 = vpop.f32.mrf.mxu0
  %2978 = vdwg.mxu0
  %v2980 = vunpack.c.l.b16 %v2833
  %v2981 = vpack.c.b16 %v2980, %v2980
  %2982 = vrot.lane.b32.xlu0 %v2981, 96
  %v2983 = vpop.permute.xlu0 %2982
  %v2985 = vsel %vm205, %v2833, 0
  %v2988 = vsel %vm205, %v2983, 0
  %2990 = vmatpush.bf16.xpose.msra.mxu0 0
  %2991 = vmatpush.bf16.xpose.msra.mxu0 0
  %2992 = vmatpush.bf16.xpose.msra.mxu0 0
  %2993 = vmatpush.bf16.xpose.msra.mxu0 0
  %2994 = vmatpush.bf16.xpose.msra.mxu0 0
  %2995 = vmatpush.bf16.xpose.msra.mxu0 0
  %2996 = vmatpush.bf16.xpose.msra.mxu0 0
  %2997 = vmatpush.bf16.xpose.msra.mxu0 %v2988
  %2998 = vmatmul.bf16.gmra.mxu0 %v2985
  %v2999 = vpop.f32.mrf.mxu0
  %v3000 = vadd.f32 0.0, %v2999
  %v3001 = vpop.f32.mrf.mxu0
  %3002 = vdwg.mxu0
  %v3004 = vunpack.c.l.b16 %v2834
  %v3005 = vpack.c.b16 %v3004, %v3004
  %3006 = vrot.lane.b32.xlu0 %v3005, 96
  %v3007 = vpop.permute.xlu0 %3006
  %v3009 = vsel %vm205, %v2834, 0
  %v3012 = vsel %vm205, %v3007, 0
  %3014 = vmatpush.bf16.xpose.msra.mxu0 0
  %3015 = vmatpush.bf16.xpose.msra.mxu0 0
  %3016 = vmatpush.bf16.xpose.msra.mxu0 0
  %3017 = vmatpush.bf16.xpose.msra.mxu0 0
  %3018 = vmatpush.bf16.xpose.msra.mxu0 0
  %3019 = vmatpush.bf16.xpose.msra.mxu0 0
  %3020 = vmatpush.bf16.xpose.msra.mxu0 0
  %3021 = vmatpush.bf16.xpose.msra.mxu0 %v3012
  %3022 = vmatmul.bf16.gmra.mxu0 %v3009
  %v3023 = vpop.f32.mrf.mxu0
  %v3024 = vadd.f32 0.0, %v3023
  %v3025 = vpop.f32.mrf.mxu0
  %3026 = vdwg.mxu0
  %v3027 = vmul.f32 %v2856, 0.35355338
  %v3028 = vmul.f32 %v2880, 0.35355338
  %v3029 = vmul.f32 %v2904, 0.35355338
  %v3030 = vmul.f32 %v2928, 0.35355338
  %v3031 = vmul.f32 %v2952, 0.35355338
  %v3032 = vmul.f32 %v2976, 0.35355338
  %v3033 = vmul.f32 %v3000, 0.35355338
  %v3034 = vmul.f32 %v3024, 0.35355338
  %v3035 = vadd.f32 %v3027, %v134
  %v3036 = vadd.f32 %v3028, %v135
  %v3037 = vadd.f32 %v3029, %v134
  %v3038 = vadd.f32 %v3030, %v135
  %v3039 = vadd.f32 %v3031, %v134
  %v3040 = vadd.f32 %v3032, %v135
  %v3041 = vadd.f32 %v3033, %v134
  %v3042 = vadd.f32 %v3034, %v135
  %v3043 = vsel %vm205, %v3035, -inf
  %3044 = vmax.xlane.f32.xlu0 %v3043
  %v3045 = vpop.xlane.xlu0 %3044
  %v3046 = vsel %vm205, %v3036, -inf
  %3047 = vmax.xlane.f32.xlu0 %v3046
  %v3048 = vpop.xlane.xlu0 %3047
  %v3049 = vsel %vm205, %v3037, -inf
  %3050 = vmax.xlane.f32.xlu0 %v3049
  %v3051 = vpop.xlane.xlu0 %3050
  %v3052 = vsel %vm205, %v3038, -inf
  %3053 = vmax.xlane.f32.xlu0 %v3052
  %v3054 = vpop.xlane.xlu0 %3053
  %v3055 = vsel %vm205, %v3039, -inf
  %3056 = vmax.xlane.f32.xlu0 %v3055
  %v3057 = vpop.xlane.xlu0 %3056
  %v3058 = vsel %vm205, %v3040, -inf
  %3059 = vmax.xlane.f32.xlu0 %v3058
  %v3060 = vpop.xlane.xlu0 %3059
  %v3061 = vsel %vm205, %v3041, -inf
  %3062 = vmax.xlane.f32.xlu0 %v3061
  %v3063 = vpop.xlane.xlu0 %3062
  %v3064 = vsel %vm205, %v3042, -inf
  %3065 = vmax.xlane.f32.xlu0 %v3064
  %v3066 = vpop.xlane.xlu0 %3065
  %v3067 = vsub.f32 %v3035, %v3045
  %v3068 = vsub.f32 %v3036, %v3048
  %v3069 = vsub.f32 %v3037, %v3051
  %v3070 = vsub.f32 %v3038, %v3054
  %v3071 = vsub.f32 %v3039, %v3057
  %v3072 = vsub.f32 %v3040, %v3060
  %v3073 = vsub.f32 %v3041, %v3063
  %v3074 = vsub.f32 %v3042, %v3066
  %v3075 = vmul.f32 %v3067, 1.442695
  %v3076 = vpow.pop %v3075
  %v3077 = vmul.f32 %v3068, 1.442695
  %v3078 = vpow.pop %v3077
  %v3079 = vmul.f32 %v3069, 1.442695
  %v3080 = vpow.pop %v3079
  %v3081 = vmul.f32 %v3070, 1.442695
  %v3082 = vpow.pop %v3081
  %v3083 = vmul.f32 %v3071, 1.442695
  %v3084 = vpow.pop %v3083
  %v3085 = vmul.f32 %v3072, 1.442695
  %v3086 = vpow.pop %v3085
  %v3087 = vmul.f32 %v3073, 1.442695
  %v3088 = vpow.pop %v3087
  %v3089 = vmul.f32 %v3074, 1.442695
  %v3090 = vpow.pop %v3089
  %v3091 = vsel %vm205, %v3076, 0.0
  %3092 = vadd.xlane.f32.xlu0 %v3091
  %v3093 = vpop.xlane.xlu0 %3092
  %v3094 = vsel %vm205, %v3078, 0.0
  %3095 = vadd.xlane.f32.xlu0 %v3094
  %v3096 = vpop.xlane.xlu0 %3095
  %v3097 = vsel %vm205, %v3080, 0.0
  %3098 = vadd.xlane.f32.xlu0 %v3097
  %v3099 = vpop.xlane.xlu0 %3098
  %v3100 = vsel %vm205, %v3082, 0.0
  %3101 = vadd.xlane.f32.xlu0 %v3100
  %v3102 = vpop.xlane.xlu0 %3101
  %v3103 = vsel %vm205, %v3084, 0.0
  %3104 = vadd.xlane.f32.xlu0 %v3103
  %v3105 = vpop.xlane.xlu0 %3104
  %v3106 = vsel %vm205, %v3086, 0.0
  %3107 = vadd.xlane.f32.xlu0 %v3106
  %v3108 = vpop.xlane.xlu0 %3107
  %v3109 = vsel %vm205, %v3088, 0.0
  %3110 = vadd.xlane.f32.xlu0 %v3109
  %v3111 = vpop.xlane.xlu0 %3110
  %v3112 = vsel %vm205, %v3090, 0.0
  %3113 = vadd.xlane.f32.xlu0 %v3112
  %v3114 = vpop.xlane.xlu0 %3113
  %v3115 = vrcp.pop %v3093
  %v3116 = vmul.f32 %v3093, %v3115
  %v3117 = vsub.f32 1.0, %v3116
  %v3118 = vmul.f32 %v3115, %v3117
  %v3119 = vadd.f32 %v3115, %v3118
  %vm3120 = vweird.f32 %v3093
  %vm3121 = vweird.f32 %v3115
  %vm3122 = vmor %vm3120, %vm3121
  %v3123 = vsel %vm3122, %v3115, %v3119
  %v3124 = vand.u32 2147483647, %v3093
  %vm3125 = vcmp.eq.f32.partialorder %v3124, 8.507059e+37
  %v3126 = vand.u32 %v3093, 2147483648
  %v3127 = vor.u32 1.1754944e-38, %v3126
  %v3128 = vsel %vm3125, %v3127, %v3123
  %v3129 = vmul.f32 %v3076, %v3128
  %v3130 = vrcp.pop %v3096
  %v3131 = vmul.f32 %v3096, %v3130
  %v3132 = vsub.f32 1.0, %v3131
  %v3133 = vmul.f32 %v3130, %v3132
  %v3134 = vadd.f32 %v3130, %v3133
  %vm3135 = vweird.f32 %v3096
  %vm3136 = vweird.f32 %v3130
  %vm3137 = vmor %vm3135, %vm3136
  %v3138 = vsel %vm3137, %v3130, %v3134
  %v3139 = vand.u32 2147483647, %v3096
  %vm3140 = vcmp.eq.f32.partialorder %v3139, 8.507059e+37
  %v3141 = vand.u32 %v3096, 2147483648
  %v3142 = vor.u32 1.1754944e-38, %v3141
  %v3143 = vsel %vm3140, %v3142, %v3138
  %v3144 = vmul.f32 %v3078, %v3143
  %v3145 = vrcp.pop %v3099
  %v3146 = vmul.f32 %v3099, %v3145
  %v3147 = vsub.f32 1.0, %v3146
  %v3148 = vmul.f32 %v3145, %v3147
  %v3149 = vadd.f32 %v3145, %v3148
  %vm3150 = vweird.f32 %v3099
  %vm3151 = vweird.f32 %v3145
  %vm3152 = vmor %vm3150, %vm3151
  %v3153 = vsel %vm3152, %v3145, %v3149
  %v3154 = vand.u32 2147483647, %v3099
  %vm3155 = vcmp.eq.f32.partialorder %v3154, 8.507059e+37
  %v3156 = vand.u32 %v3099, 2147483648
  %v3157 = vor.u32 1.1754944e-38, %v3156
  %v3158 = vsel %vm3155, %v3157, %v3153
  %v3159 = vmul.f32 %v3080, %v3158
  %v3160 = vrcp.pop %v3102
  %v3161 = vmul.f32 %v3102, %v3160
  %v3162 = vsub.f32 1.0, %v3161
  %v3163 = vmul.f32 %v3160, %v3162
  %v3164 = vadd.f32 %v3160, %v3163
  %vm3165 = vweird.f32 %v3102
  %vm3166 = vweird.f32 %v3160
  %vm3167 = vmor %vm3165, %vm3166
  %v3168 = vsel %vm3167, %v3160, %v3164
  %v3169 = vand.u32 2147483647, %v3102
  %vm3170 = vcmp.eq.f32.partialorder %v3169, 8.507059e+37
  %v3171 = vand.u32 %v3102, 2147483648
  %v3172 = vor.u32 1.1754944e-38, %v3171
  %v3173 = vsel %vm3170, %v3172, %v3168
  %v3174 = vmul.f32 %v3082, %v3173
  %v3175 = vrcp.pop %v3105
  %v3176 = vmul.f32 %v3105, %v3175
  %v3177 = vsub.f32 1.0, %v3176
  %v3178 = vmul.f32 %v3175, %v3177
  %v3179 = vadd.f32 %v3175, %v3178
  %vm3180 = vweird.f32 %v3105
  %vm3181 = vweird.f32 %v3175
  %vm3182 = vmor %vm3180, %vm3181
  %v3183 = vsel %vm3182, %v3175, %v3179
  %v3184 = vand.u32 2147483647, %v3105
  %vm3185 = vcmp.eq.f32.partialorder %v3184, 8.507059e+37
  %v3186 = vand.u32 %v3105, 2147483648
  %v3187 = vor.u32 1.1754944e-38, %v3186
  %v3188 = vsel %vm3185, %v3187, %v3183
  %v3189 = vmul.f32 %v3084, %v3188
  %v3190 = vrcp.pop %v3108
  %v3191 = vmul.f32 %v3108, %v3190
  %v3192 = vsub.f32 1.0, %v3191
  %v3193 = vmul.f32 %v3190, %v3192
  %v3194 = vadd.f32 %v3190, %v3193
  %vm3195 = vweird.f32 %v3108
  %vm3196 = vweird.f32 %v3190
  %vm3197 = vmor %vm3195, %vm3196
  %v3198 = vsel %vm3197, %v3190, %v3194
  %v3199 = vand.u32 2147483647, %v3108
  %vm3200 = vcmp.eq.f32.partialorder %v3199, 8.507059e+37
  %v3201 = vand.u32 %v3108, 2147483648
  %v3202 = vor.u32 1.1754944e-38, %v3201
  %v3203 = vsel %vm3200, %v3202, %v3198
  %v3204 = vmul.f32 %v3086, %v3203
  %v3205 = vrcp.pop %v3111
  %v3206 = vmul.f32 %v3111, %v3205
  %v3207 = vsub.f32 1.0, %v3206
  %v3208 = vmul.f32 %v3205, %v3207
  %v3209 = vadd.f32 %v3205, %v3208
  %vm3210 = vweird.f32 %v3111
  %vm3211 = vweird.f32 %v3205
  %vm3212 = vmor %vm3210, %vm3211
  %v3213 = vsel %vm3212, %v3205, %v3209
  %v3214 = vand.u32 2147483647, %v3111
  %vm3215 = vcmp.eq.f32.partialorder %v3214, 8.507059e+37
  %v3216 = vand.u32 %v3111, 2147483648
  %v3217 = vor.u32 1.1754944e-38, %v3216
  %v3218 = vsel %vm3215, %v3217, %v3213
  %v3219 = vmul.f32 %v3088, %v3218
  %v3220 = vrcp.pop %v3114
  %v3221 = vmul.f32 %v3114, %v3220
  %v3222 = vsub.f32 1.0, %v3221
  %v3223 = vmul.f32 %v3220, %v3222
  %v3224 = vadd.f32 %v3220, %v3223
  %vm3225 = vweird.f32 %v3114
  %vm3226 = vweird.f32 %v3220
  %vm3227 = vmor %vm3225, %vm3226
  %v3228 = vsel %vm3227, %v3220, %v3224
  %v3229 = vand.u32 2147483647, %v3114
  %vm3230 = vcmp.eq.f32.partialorder %v3229, 8.507059e+37
  %v3231 = vand.u32 %v3114, 2147483648
  %v3232 = vor.u32 1.1754944e-38, %v3231
  %v3233 = vsel %vm3230, %v3232, %v3228
  %v3234 = vmul.f32 %v3090, %v3233
  %v3235 = vpack.c.bf16 %v3129, %v3129
  %v3236 = vpack.c.bf16 %v3144, %v3144
  %v3237 = vpack.c.bf16 %v3159, %v3159
  %v3238 = vpack.c.bf16 %v3174, %v3174
  %v3239 = vpack.c.bf16 %v3189, %v3189
  %v3240 = vpack.c.bf16 %v3204, %v3204
  %v3241 = vpack.c.bf16 %v3219, %v3219
  %v3242 = vpack.c.bf16 %v3234, %v3234
  %3243 = vrot.lane.b32.xlu0 %v2837, 64
  %v3244 = vpop.permute.xlu0 %3243
  %v3246 = vsel %vm205, %v3235, 0
  %v3249 = vsel %vm614, %v3244, 0
  %3251 = vmatpush.bf16.msra.mxu0 0
  %3252 = vmatpush.bf16.msra.mxu0 0
  %3253 = vmatpush.bf16.msra.mxu0 0
  %3254 = vmatpush.bf16.msra.mxu0 0
  %3255 = vmatpush.bf16.msra.mxu0 0
  %3256 = vmatpush.bf16.msra.mxu0 0
  %3257 = vmatpush.bf16.msra.mxu0 0
  %3258 = vmatpush.bf16.msra.mxu0 %v3249
  %3259 = vmatmul.bf16.gmra.mxu0 %v3246
  %v3260 = vpop.f32.mrf.mxu0
  %v3261 = vadd.f32 0.0, %v3260
  %v3262 = vpop.f32.mrf.mxu0
  %3263 = vdwg.mxu0
  %3264 = vrot.lane.b32.xlu0 %v2861, 64
  %v3265 = vpop.permute.xlu0 %3264
  %v3267 = vsel %vm205, %v3236, 0
  %v3270 = vsel %vm614, %v3265, 0
  %3272 = vmatpush.bf16.msra.mxu0 0
  %3273 = vmatpush.bf16.msra.mxu0 0
  %3274 = vmatpush.bf16.msra.mxu0 0
  %3275 = vmatpush.bf16.msra.mxu0 0
  %3276 = vmatpush.bf16.msra.mxu0 0
  %3277 = vmatpush.bf16.msra.mxu0 0
  %3278 = vmatpush.bf16.msra.mxu0 0
  %3279 = vmatpush.bf16.msra.mxu0 %v3270
  %3280 = vmatmul.bf16.gmra.mxu0 %v3267
  %v3281 = vpop.f32.mrf.mxu0
  %v3282 = vadd.f32 0.0, %v3281
  %v3283 = vpop.f32.mrf.mxu0
  %3284 = vdwg.mxu0
  %3285 = vrot.lane.b32.xlu0 %v2885, 64
  %v3286 = vpop.permute.xlu0 %3285
  %v3288 = vsel %vm205, %v3237, 0
  %v3291 = vsel %vm614, %v3286, 0
  %3293 = vmatpush.bf16.msra.mxu0 0
  %3294 = vmatpush.bf16.msra.mxu0 0
  %3295 = vmatpush.bf16.msra.mxu0 0
  %3296 = vmatpush.bf16.msra.mxu0 0
  %3297 = vmatpush.bf16.msra.mxu0 0
  %3298 = vmatpush.bf16.msra.mxu0 0
  %3299 = vmatpush.bf16.msra.mxu0 0
  %3300 = vmatpush.bf16.msra.mxu0 %v3291
  %3301 = vmatmul.bf16.gmra.mxu0 %v3288
  %v3302 = vpop.f32.mrf.mxu0
  %v3303 = vadd.f32 0.0, %v3302
  %v3304 = vpop.f32.mrf.mxu0
  %3305 = vdwg.mxu0
  %3306 = vrot.lane.b32.xlu0 %v2909, 64
  %v3307 = vpop.permute.xlu0 %3306
  %v3309 = vsel %vm205, %v3238, 0
  %v3312 = vsel %vm614, %v3307, 0
  %3314 = vmatpush.bf16.msra.mxu0 0
  %3315 = vmatpush.bf16.msra.mxu0 0
  %3316 = vmatpush.bf16.msra.mxu0 0
  %3317 = vmatpush.bf16.msra.mxu0 0
  %3318 = vmatpush.bf16.msra.mxu0 0
  %3319 = vmatpush.bf16.msra.mxu0 0
  %3320 = vmatpush.bf16.msra.mxu0 0
  %3321 = vmatpush.bf16.msra.mxu0 %v3312
  %3322 = vmatmul.bf16.gmra.mxu0 %v3309
  %v3323 = vpop.f32.mrf.mxu0
  %v3324 = vadd.f32 0.0, %v3323
  %v3325 = vpop.f32.mrf.mxu0
  %3326 = vdwg.mxu0
  %3327 = vrot.lane.b32.xlu0 %v2933, 64
  %v3328 = vpop.permute.xlu0 %3327
  %v3330 = vsel %vm205, %v3239, 0
  %v3333 = vsel %vm614, %v3328, 0
  %3335 = vmatpush.bf16.msra.mxu0 0
  %3336 = vmatpush.bf16.msra.mxu0 0
  %3337 = vmatpush.bf16.msra.mxu0 0
  %3338 = vmatpush.bf16.msra.mxu0 0
  %3339 = vmatpush.bf16.msra.mxu0 0
  %3340 = vmatpush.bf16.msra.mxu0 0
  %3341 = vmatpush.bf16.msra.mxu0 0
  %3342 = vmatpush.bf16.msra.mxu0 %v3333
  %3343 = vmatmul.bf16.gmra.mxu0 %v3330
  %v3344 = vpop.f32.mrf.mxu0
  %v3345 = vadd.f32 0.0, %v3344
  %v3346 = vpop.f32.mrf.mxu0
  %3347 = vdwg.mxu0
  %3348 = vrot.lane.b32.xlu0 %v2957, 64
  %v3349 = vpop.permute.xlu0 %3348
  %v3351 = vsel %vm205, %v3240, 0
  %v3354 = vsel %vm614, %v3349, 0
  %3356 = vmatpush.bf16.msra.mxu0 0
  %3357 = vmatpush.bf16.msra.mxu0 0
  %3358 = vmatpush.bf16.msra.mxu0 0
  %3359 = vmatpush.bf16.msra.mxu0 0
  %3360 = vmatpush.bf16.msra.mxu0 0
  %3361 = vmatpush.bf16.msra.mxu0 0
  %3362 = vmatpush.bf16.msra.mxu0 0
  %3363 = vmatpush.bf16.msra.mxu0 %v3354
  %3364 = vmatmul.bf16.gmra.mxu0 %v3351
  %v3365 = vpop.f32.mrf.mxu0
  %v3366 = vadd.f32 0.0, %v3365
  %v3367 = vpop.f32.mrf.mxu0
  %3368 = vdwg.mxu0
  %3369 = vrot.lane.b32.xlu0 %v2981, 64
  %v3370 = vpop.permute.xlu0 %3369
  %v3372 = vsel %vm205, %v3241, 0
  %v3375 = vsel %vm614, %v3370, 0
  %3377 = vmatpush.bf16.msra.mxu0 0
  %3378 = vmatpush.bf16.msra.mxu0 0
  %3379 = vmatpush.bf16.msra.mxu0 0
  %3380 = vmatpush.bf16.msra.mxu0 0
  %3381 = vmatpush.bf16.msra.mxu0 0
  %3382 = vmatpush.bf16.msra.mxu0 0
  %3383 = vmatpush.bf16.msra.mxu0 0
  %3384 = vmatpush.bf16.msra.mxu0 %v3375
  %3385 = vmatmul.bf16.gmra.mxu0 %v3372
  %v3386 = vpop.f32.mrf.mxu0
  %v3387 = vadd.f32 0.0, %v3386
  %v3388 = vpop.f32.mrf.mxu0
  %3389 = vdwg.mxu0
  %3390 = vrot.lane.b32.xlu0 %v3005, 64
  %v3391 = vpop.permute.xlu0 %3390
  %v3393 = vsel %vm205, %v3242, 0
  %v3396 = vsel %vm614, %v3391, 0
  %3398 = vmatpush.bf16.msra.mxu0 0
  %3399 = vmatpush.bf16.msra.mxu0 0
  %3400 = vmatpush.bf16.msra.mxu0 0
  %3401 = vmatpush.bf16.msra.mxu0 0
  %3402 = vmatpush.bf16.msra.mxu0 0
  %3403 = vmatpush.bf16.msra.mxu0 0
  %3404 = vmatpush.bf16.msra.mxu0 0
  %3405 = vmatpush.bf16.msra.mxu0 %v3396
  %3406 = vmatmul.bf16.gmra.mxu0 %v3393
  %v3407 = vpop.f32.mrf.mxu0
  %v3408 = vadd.f32 0.0, %v3407
  %v3409 = vpop.f32.mrf.mxu0
  %3410 = vdwg.mxu0
  %v3411 = vpack.c.bf16 %v3261, %v3261
  %v3412 = vpack.c.bf16 %v3282, %v3282
  %v3413 = vpack.c.bf16 %v3303, %v3303
  %v3414 = vpack.c.bf16 %v3324, %v3324
  %v3415 = vpack.c.bf16 %v3345, %v3345
  %v3416 = vpack.c.bf16 %v3366, %v3366
  %v3417 = vpack.c.bf16 %v3387, %v3387
  %v3418 = vpack.c.bf16 %v3408, %v3408
  %v3421 = vunpack.c.l.b16 %v3411
  %v3422 = vunpack.c.l.b16 %v3412
  %v3423 = vpack.c.b16 %v3422, %v3421
  %v3425 = vsel %vm205, %v3423, 0
  %3427 = vmatpush.bf16.msra.mxu0 0
  %3428 = vmatpush.bf16.msra.mxu0 0
  %3429 = vmatpush.bf16.msra.mxu0 0
  %3430 = vmatpush.bf16.msra.mxu0 0
  %3431 = vmatpush.bf16.msra.mxu0 0
  %3432 = vmatpush.bf16.msra.mxu0 0
  %3433 = vmatpush.bf16.msra.mxu0 0
  %3434 = vmatpush.bf16.msra.mxu0 %v795
  %3435 = vmatmul.bf16.gmra.mxu0 %v3425
  %v3436 = vpop.f32.mrf.mxu0
  %v3437 = vadd.f32 0.0, %v3436
  %v3438 = vpop.f32.mrf.mxu0
  %v3439 = vadd.f32 0.0, %v3438
  %3440 = vdwg.mxu0
  %v3443 = vunpack.c.l.b16 %v3413
  %v3444 = vunpack.c.l.b16 %v3414
  %v3445 = vpack.c.b16 %v3444, %v3443
  %v3447 = vsel %vm205, %v3445, 0
  %3449 = vmatpush.bf16.msra.mxu0 0
  %3450 = vmatpush.bf16.msra.mxu0 0
  %3451 = vmatpush.bf16.msra.mxu0 0
  %3452 = vmatpush.bf16.msra.mxu0 0
  %3453 = vmatpush.bf16.msra.mxu0 0
  %3454 = vmatpush.bf16.msra.mxu0 0
  %3455 = vmatpush.bf16.msra.mxu0 0
  %3456 = vmatpush.bf16.msra.mxu0 %v820
  %3457 = vmatmul.bf16.gmra.mxu0 %v3447
  %v3458 = vpop.f32.mrf.mxu0
  %v3459 = vadd.f32 0.0, %v3458
  %v3460 = vpop.f32.mrf.mxu0
  %v3461 = vadd.f32 0.0, %v3460
  %3462 = vdwg.mxu0
  %v3465 = vunpack.c.l.b16 %v3415
  %v3466 = vunpack.c.l.b16 %v3416
  %v3467 = vpack.c.b16 %v3466, %v3465
  %v3469 = vsel %vm205, %v3467, 0
  %3471 = vmatpush.bf16.msra.mxu0 0
  %3472 = vmatpush.bf16.msra.mxu0 0
  %3473 = vmatpush.bf16.msra.mxu0 0
  %3474 = vmatpush.bf16.msra.mxu0 0
  %3475 = vmatpush.bf16.msra.mxu0 0
  %3476 = vmatpush.bf16.msra.mxu0 0
  %3477 = vmatpush.bf16.msra.mxu0 0
  %3478 = vmatpush.bf16.msra.mxu0 %v845
  %3479 = vmatmul.bf16.gmra.mxu0 %v3469
  %v3480 = vpop.f32.mrf.mxu0
  %v3481 = vadd.f32 0.0, %v3480
  %v3482 = vpop.f32.mrf.mxu0
  %v3483 = vadd.f32 0.0, %v3482
  %3484 = vdwg.mxu0
  %v3487 = vunpack.c.l.b16 %v3417
  %v3488 = vunpack.c.l.b16 %v3418
  %v3489 = vpack.c.b16 %v3488, %v3487
  %v3491 = vsel %vm205, %v3489, 0
  %3493 = vmatpush.bf16.msra.mxu0 0
  %3494 = vmatpush.bf16.msra.mxu0 0
  %3495 = vmatpush.bf16.msra.mxu0 0
  %3496 = vmatpush.bf16.msra.mxu0 0
  %3497 = vmatpush.bf16.msra.mxu0 0
  %3498 = vmatpush.bf16.msra.mxu0 0
  %3499 = vmatpush.bf16.msra.mxu0 0
  %3500 = vmatpush.bf16.msra.mxu0 %v870
  %3501 = vmatmul.bf16.gmra.mxu0 %v3491
  %v3502 = vpop.f32.mrf.mxu0
  %v3503 = vadd.f32 0.0, %v3502
  %v3504 = vpop.f32.mrf.mxu0
  %v3505 = vadd.f32 0.0, %v3504
  %3506 = vdwg.mxu0
  %v3507 = vsel %vm154, %v3437, 0.0
  %v3508 = vsel %vm154, %v3459, 0.0
  %v3509 = vadd.f32 %v3507, %v3508
  %v3510 = vsel %vm154, %v3481, 0.0
  %v3511 = vadd.f32 %v3509, %v3510
  %v3512 = vsel %vm154, %v3503, 0.0
  %v3513 = vadd.f32 %v3511, %v3512
  %v3514 = vsel %vm154, %v3439, 0.0
  %v3515 = vsel %vm154, %v3461, 0.0
  %v3516 = vadd.f32 %v3514, %v3515
  %v3517 = vsel %vm154, %v3483, 0.0
  %v3518 = vadd.f32 %v3516, %v3517
  %v3519 = vsel %vm154, %v3505, 0.0
  %v3520 = vadd.f32 %v3518, %v3519
  %v3521 = vadd.f32 %v2787, %v3513
  %v3522 = vadd.f32 %v2788, %v3520
  %v3523 = vadd.f32 %v3521, %v903
  %v3524 = vadd.f32 %v3522, %v903
  %v3525 = vsel %vm154, %v3523, 0.0
  %3526 = vadd.xlane.f32.xlu0 %v3525
  %v3527 = vpop.xlane.xlu0 %3526
  %v3528 = vsel %vm154, %v3524, 0.0
  %3529 = vadd.xlane.f32.xlu0 %v3528
  %v3530 = vpop.xlane.xlu0 %3529
  %v3531 = vmul.f32 %v3527, %v919
  %v3532 = vmul.f32 %v3530, %v919
  %v3533 = vsub.f32 %v3523, %v3531
  %v3534 = vsub.f32 %v3524, %v3532
  %v3535 = vmul.f32 %v3533, %v3533
  %v3536 = vmul.f32 %v3534, %v3534
  %v3537 = vsel %vm154, %v3535, 0.0
  %3538 = vadd.xlane.f32.xlu0 %v3537
  %v3539 = vpop.xlane.xlu0 %3538
  %v3540 = vsel %vm154, %v3536, 0.0
  %3541 = vadd.xlane.f32.xlu0 %v3540
  %v3542 = vpop.xlane.xlu0 %3541
  %v3543 = vmul.f32 %v3539, %v919
  %v3544 = vmul.f32 %v3542, %v919
  %v3545 = vadd.f32 %v3543, 1e-05
  %v3546 = vadd.f32 %v3544, 1e-05
  %v3547 = vrsqrt.pop %v3545
  %v3548 = vmul.f32 %v3547, %v3545
  %v3549 = vmul.f32 %v3548, %v3547
  %v3550 = vmul.f32 0.5, %v3549
  %v3551 = vsub.f32 1.5, %v3550
  %v3552 = vmul.f32 %v3547, %v3551
  %vm3553 = vweird.f32 %v3545
  %vm3554 = vweird.f32 %v3547
  %vm3555 = vmor %vm3553, %vm3554
  %v3556 = vsel %vm3555, %v3547, %v3552
  %v3557 = vrsqrt.pop %v3546
  %v3558 = vmul.f32 %v3557, %v3546
  %v3559 = vmul.f32 %v3558, %v3557
  %v3560 = vmul.f32 0.5, %v3559
  %v3561 = vsub.f32 1.5, %v3560
  %v3562 = vmul.f32 %v3557, %v3561
  %vm3563 = vweird.f32 %v3546
  %vm3564 = vweird.f32 %v3557
  %vm3565 = vmor %vm3563, %vm3564
  %v3566 = vsel %vm3565, %v3557, %v3562
  %v3567 = vmul.f32 %v3533, %v3556
  %v3568 = vmul.f32 %v3534, %v3566
  %v3569 = vmul.f32 %v3567, %v959
  %v3570 = vmul.f32 %v3568, %v959
  %v3571 = vadd.f32 %v3569, %v964
  %v3572 = vadd.f32 %v3570, %v964
  %v3573 = vpack.c.bf16 %v3572, %v3571
  %v3574 = vld [vmem:[%s12] sm:$0xff]
  %v3575 = vld [vmem:[%s12 + $0x8] sm:$0xff]
  %v3576 = vld [vmem:[%s12 + $0x40] sm:$0xff]
  %v3577 = vld [vmem:[%s12 + $0x48] sm:$0xff]
  %v3578 = vld [vmem:[%s12 + $0x80] sm:$0xff]
  %v3579 = vld [vmem:[%s12 + $0x88] sm:$0xff]
  %v3580 = vld [vmem:[%s12 + $0xc0] sm:$0xff]
  %v3581 = vld [vmem:[%s12 + $0xc8] sm:$0xff]
  %v3582 = vld [vmem:[%s13] sm:$0xf]
  %v3584 = vperm.slane %v3582, 0
  %v3585 = vperm.slane %v3582, 1
  %v3586 = vperm.slane %v3582, 2
  %v3587 = vperm.slane %v3582, 3
  %v3600 = vunpack.c.l.b16 %v3574
  %v3601 = vunpack.c.h.b16 %v3574
  %v3602 = vunpack.c.l.b16 %v3575
  %v3603 = vunpack.c.h.b16 %v3575
  %v3604 = vunpack.c.l.b16 %v3576
  %v3605 = vunpack.c.h.b16 %v3576
  %v3606 = vunpack.c.l.b16 %v3577
  %v3607 = vunpack.c.h.b16 %v3577
  %v3608 = vunpack.c.l.b16 %v3578
  %v3609 = vunpack.c.h.b16 %v3578
  %v3610 = vunpack.c.l.b16 %v3579
  %v3611 = vunpack.c.h.b16 %v3579
  %v3612 = vunpack.c.l.b16 %v3580
  %v3613 = vunpack.c.h.b16 %v3580
  %v3614 = vunpack.c.l.b16 %v3581
  %v3615 = vunpack.c.h.b16 %v3581
  %v3616 = vpack.c.b16 %v3604, %v3600
  %v3617 = vpack.c.b16 %v3605, %v3601
  %v3618 = vpack.c.b16 %v3606, %v3602
  %v3619 = vpack.c.b16 %v3607, %v3603
  %v3620 = vpack.c.b16 %v3612, %v3608
  %v3621 = vpack.c.b16 %v3613, %v3609
  %v3622 = vpack.c.b16 %v3614, %v3610
  %v3623 = vpack.c.b16 %v3615, %v3611
  %v3633 = vsel %vm154, %v3573, 0
  %3635 = vmatpush.bf16.msra.mxu0 0
  %3636 = vmatpush.bf16.msra.mxu0 0
  %3637 = vmatpush.bf16.msra.mxu0 0
  %3638 = vmatpush.bf16.msra.mxu0 0
  %3639 = vmatpush.bf16.msra.mxu0 0
  %3640 = vmatpush.bf16.msra.mxu0 0
  %3641 = vmatpush.bf16.msra.mxu0 %v3620
  %3642 = vmatpush.bf16.msra.mxu0 %v3616
  %3643 = vmatmul.bf16.gmra.mxu0 %v3633
  %v3644 = vpop.f32.mrf.mxu0
  %v3645 = vadd.f32 %v3584, %v3644
  %v3646 = vpop.f32.mrf.mxu0
  %v3647 = vadd.f32 %v3584, %v3646
  %3648 = vdwg.mxu0
  %3649 = vmatpush.bf16.msra.mxu0 0
  %3650 = vmatpush.bf16.msra.mxu0 0
  %3651 = vmatpush.bf16.msra.mxu0 0
  %3652 = vmatpush.bf16.msra.mxu0 0
  %3653 = vmatpush.bf16.msra.mxu0 0
  %3654 = vmatpush.bf16.msra.mxu0 0
  %3655 = vmatpush.bf16.msra.mxu0 %v3621
  %3656 = vmatpush.bf16.msra.mxu0 %v3617
  %3657 = vmatmul.bf16.gmra.mxu0 %v3633
  %v3658 = vpop.f32.mrf.mxu0
  %v3659 = vadd.f32 %v3585, %v3658
  %v3660 = vpop.f32.mrf.mxu0
  %v3661 = vadd.f32 %v3585, %v3660
  %3662 = vdwg.mxu0
  %3663 = vmatpush.bf16.msra.mxu0 0
  %3664 = vmatpush.bf16.msra.mxu0 0
  %3665 = vmatpush.bf16.msra.mxu0 0
  %3666 = vmatpush.bf16.msra.mxu0 0
  %3667 = vmatpush.bf16.msra.mxu0 0
  %3668 = vmatpush.bf16.msra.mxu0 0
  %3669 = vmatpush.bf16.msra.mxu0 %v3622
  %3670 = vmatpush.bf16.msra.mxu0 %v3618
  %3671 = vmatmul.bf16.gmra.mxu0 %v3633
  %v3672 = vpop.f32.mrf.mxu0
  %v3673 = vadd.f32 %v3586, %v3672
  %v3674 = vpop.f32.mrf.mxu0
  %v3675 = vadd.f32 %v3586, %v3674
  %3676 = vdwg.mxu0
  %3677 = vmatpush.bf16.msra.mxu0 0
  %3678 = vmatpush.bf16.msra.mxu0 0
  %3679 = vmatpush.bf16.msra.mxu0 0
  %3680 = vmatpush.bf16.msra.mxu0 0
  %3681 = vmatpush.bf16.msra.mxu0 0
  %3682 = vmatpush.bf16.msra.mxu0 0
  %3683 = vmatpush.bf16.msra.mxu0 %v3623
  %3684 = vmatpush.bf16.msra.mxu0 %v3619
  %3685 = vmatmul.bf16.gmra.mxu0 %v3633
  %v3686 = vpop.f32.mrf.mxu0
  %v3687 = vadd.f32 %v3587, %v3686
  %v3688 = vpop.f32.mrf.mxu0
  %v3689 = vadd.f32 %v3587, %v3688
  %3690 = vdwg.mxu0
  %v3691 = vmax.f32 %v3645, 0.0
  %v3692 = vmax.f32 %v3659, 0.0
  %v3693 = vmax.f32 %v3673, 0.0
  %v3694 = vmax.f32 %v3687, 0.0
  %v3695 = vmax.f32 %v3647, 0.0
  %v3696 = vmax.f32 %v3661, 0.0
  %v3697 = vmax.f32 %v3675, 0.0
  %v3698 = vmax.f32 %v3689, 0.0
  %v3699 = vpack.c.bf16 %v3695, %v3691
  %v3700 = vpack.c.bf16 %v3696, %v3692
  %v3701 = vpack.c.bf16 %v3697, %v3693
  %v3702 = vpack.c.bf16 %v3698, %v3694
  %v3703 = vld [vmem:[%s14] sm:$0xf]
  %v3704 = vld [vmem:[%s14 + $0x4] sm:$0xf]
  %v3705 = vld [vmem:[%s14 + $0x8] sm:$0xf]
  %v3706 = vld [vmem:[%s14 + $0xc] sm:$0xf]
  %v3707 = vld [vmem:[%s14 + $0x10] sm:$0xf]
  %v3708 = vld [vmem:[%s14 + $0x14] sm:$0xf]
  %v3709 = vld [vmem:[%s14 + $0x18] sm:$0xf]
  %v3710 = vld [vmem:[%s14 + $0x1c] sm:$0xf]
  %v3711 = vld [vmem:[%s14 + $0x20] sm:$0xf]
  %v3712 = vld [vmem:[%s14 + $0x24] sm:$0xf]
  %v3713 = vld [vmem:[%s14 + $0x28] sm:$0xf]
  %v3714 = vld [vmem:[%s14 + $0x2c] sm:$0xf]
  %v3715 = vld [vmem:[%s14 + $0x30] sm:$0xf]
  %v3716 = vld [vmem:[%s14 + $0x34] sm:$0xf]
  %v3717 = vld [vmem:[%s14 + $0x38] sm:$0xf]
  %v3718 = vld [vmem:[%s14 + $0x3c] sm:$0xf]
  %v3719 = vld [vmem:[%s14 + $0x40] sm:$0xf]
  %v3720 = vld [vmem:[%s14 + $0x44] sm:$0xf]
  %v3721 = vld [vmem:[%s14 + $0x48] sm:$0xf]
  %v3722 = vld [vmem:[%s14 + $0x4c] sm:$0xf]
  %v3723 = vld [vmem:[%s14 + $0x50] sm:$0xf]
  %v3724 = vld [vmem:[%s14 + $0x54] sm:$0xf]
  %v3725 = vld [vmem:[%s14 + $0x58] sm:$0xf]
  %v3726 = vld [vmem:[%s14 + $0x5c] sm:$0xf]
  %v3727 = vld [vmem:[%s14 + $0x60] sm:$0xf]
  %v3728 = vld [vmem:[%s14 + $0x64] sm:$0xf]
  %v3729 = vld [vmem:[%s14 + $0x68] sm:$0xf]
  %v3730 = vld [vmem:[%s14 + $0x6c] sm:$0xf]
  %v3731 = vld [vmem:[%s14 + $0x70] sm:$0xf]
  %v3732 = vld [vmem:[%s14 + $0x74] sm:$0xf]
  %v3733 = vld [vmem:[%s14 + $0x78] sm:$0xf]
  %v3734 = vld [vmem:[%s14 + $0x7c] sm:$0xf]
  %v3735 = vld [vmem:[%s14 + $0x80] sm:$0xf]
  %v3736 = vld [vmem:[%s14 + $0x84] sm:$0xf]
  %v3737 = vld [vmem:[%s14 + $0x88] sm:$0xf]
  %v3738 = vld [vmem:[%s14 + $0x8c] sm:$0xf]
  %v3739 = vld [vmem:[%s14 + $0x90] sm:$0xf]
  %v3740 = vld [vmem:[%s14 + $0x94] sm:$0xf]
  %v3741 = vld [vmem:[%s14 + $0x98] sm:$0xf]
  %v3742 = vld [vmem:[%s14 + $0x9c] sm:$0xf]
  %v3743 = vld [vmem:[%s14 + $0xa0] sm:$0xf]
  %v3744 = vld [vmem:[%s14 + $0xa4] sm:$0xf]
  %v3745 = vld [vmem:[%s14 + $0xa8] sm:$0xf]
  %v3746 = vld [vmem:[%s14 + $0xac] sm:$0xf]
  %v3747 = vld [vmem:[%s14 + $0xb0] sm:$0xf]
  %v3748 = vld [vmem:[%s14 + $0xb4] sm:$0xf]
  %v3749 = vld [vmem:[%s14 + $0xb8] sm:$0xf]
  %v3750 = vld [vmem:[%s14 + $0xbc] sm:$0xf]
  %v3751 = vld [vmem:[%s14 + $0xc0] sm:$0xf]
  %v3752 = vld [vmem:[%s14 + $0xc4] sm:$0xf]
  %v3753 = vld [vmem:[%s14 + $0xc8] sm:$0xf]
  %v3754 = vld [vmem:[%s14 + $0xcc] sm:$0xf]
  %v3755 = vld [vmem:[%s14 + $0xd0] sm:$0xf]
  %v3756 = vld [vmem:[%s14 + $0xd4] sm:$0xf]
  %v3757 = vld [vmem:[%s14 + $0xd8] sm:$0xf]
  %v3758 = vld [vmem:[%s14 + $0xdc] sm:$0xf]
  %v3759 = vld [vmem:[%s14 + $0xe0] sm:$0xf]
  %v3760 = vld [vmem:[%s14 + $0xe4] sm:$0xf]
  %v3761 = vld [vmem:[%s14 + $0xe8] sm:$0xf]
  %v3762 = vld [vmem:[%s14 + $0xec] sm:$0xf]
  %v3763 = vld [vmem:[%s14 + $0xf0] sm:$0xf]
  %v3764 = vld [vmem:[%s14 + $0xf4] sm:$0xf]
  %v3765 = vld [vmem:[%s14 + $0xf8] sm:$0xf]
  %v3766 = vld [vmem:[%s14 + $0xfc] sm:$0xf]
  %v3767 = vld [vmem:[%s12 + $0x10] sm:$0xff]
  %v3768 = vld [vmem:[%s12 + $0x18] sm:$0xff]
  %v3769 = vld [vmem:[%s12 + $0x50] sm:$0xff]
  %v3770 = vld [vmem:[%s12 + $0x58] sm:$0xff]
  %v3771 = vld [vmem:[%s12 + $0x90] sm:$0xff]
  %v3772 = vld [vmem:[%s12 + $0x98] sm:$0xff]
  %v3773 = vld [vmem:[%s12 + $0xd0] sm:$0xff]
  %v3774 = vld [vmem:[%s12 + $0xd8] sm:$0xff]
  %v3775 = vld [vmem:[%s13 + $0x4] sm:$0xf]
  %v3777 = vperm.slane %v3775, 0
  %v3778 = vperm.slane %v3775, 1
  %v3779 = vperm.slane %v3775, 2
  %v3780 = vperm.slane %v3775, 3
  %v3793 = vunpack.c.l.b16 %v3767
  %v3794 = vunpack.c.h.b16 %v3767
  %v3795 = vunpack.c.l.b16 %v3768
  %v3796 = vunpack.c.h.b16 %v3768
  %v3797 = vunpack.c.l.b16 %v3769
  %v3798 = vunpack.c.h.b16 %v3769
  %v3799 = vunpack.c.l.b16 %v3770
  %v3800 = vunpack.c.h.b16 %v3770
  %v3801 = vunpack.c.l.b16 %v3771
  %v3802 = vunpack.c.h.b16 %v3771
  %v3803 = vunpack.c.l.b16 %v3772
  %v3804 = vunpack.c.h.b16 %v3772
  %v3805 = vunpack.c.l.b16 %v3773
  %v3806 = vunpack.c.h.b16 %v3773
  %v3807 = vunpack.c.l.b16 %v3774
  %v3808 = vunpack.c.h.b16 %v3774
  %v3809 = vpack.c.b16 %v3797, %v3793
  %v3810 = vpack.c.b16 %v3798, %v3794
  %v3811 = vpack.c.b16 %v3799, %v3795
  %v3812 = vpack.c.b16 %v3800, %v3796
  %v3813 = vpack.c.b16 %v3805, %v3801
  %v3814 = vpack.c.b16 %v3806, %v3802
  %v3815 = vpack.c.b16 %v3807, %v3803
  %v3816 = vpack.c.b16 %v3808, %v3804
  %3825 = vmatpush.bf16.msra.mxu0 0
  %3826 = vmatpush.bf16.msra.mxu0 0
  %3827 = vmatpush.bf16.msra.mxu0 0
  %3828 = vmatpush.bf16.msra.mxu0 0
  %3829 = vmatpush.bf16.msra.mxu0 0
  %3830 = vmatpush.bf16.msra.mxu0 0
  %3831 = vmatpush.bf16.msra.mxu0 %v3813
  %3832 = vmatpush.bf16.msra.mxu0 %v3809
  %3833 = vmatmul.bf16.gmra.mxu0 %v3633
  %v3834 = vpop.f32.mrf.mxu0
  %v3835 = vadd.f32 %v3777, %v3834
  %v3836 = vpop.f32.mrf.mxu0
  %v3837 = vadd.f32 %v3777, %v3836
  %3838 = vdwg.mxu0
  %3839 = vmatpush.bf16.msra.mxu0 0
  %3840 = vmatpush.bf16.msra.mxu0 0
  %3841 = vmatpush.bf16.msra.mxu0 0
  %3842 = vmatpush.bf16.msra.mxu0 0
  %3843 = vmatpush.bf16.msra.mxu0 0
  %3844 = vmatpush.bf16.msra.mxu0 0
  %3845 = vmatpush.bf16.msra.mxu0 %v3814
  %3846 = vmatpush.bf16.msra.mxu0 %v3810
  %3847 = vmatmul.bf16.gmra.mxu0 %v3633
  %v3848 = vpop.f32.mrf.mxu0
  %v3849 = vadd.f32 %v3778, %v3848
  %v3850 = vpop.f32.mrf.mxu0
  %v3851 = vadd.f32 %v3778, %v3850
  %3852 = vdwg.mxu0
  %3853 = vmatpush.bf16.msra.mxu0 0
  %3854 = vmatpush.bf16.msra.mxu0 0
  %3855 = vmatpush.bf16.msra.mxu0 0
  %3856 = vmatpush.bf16.msra.mxu0 0
  %3857 = vmatpush.bf16.msra.mxu0 0
  %3858 = vmatpush.bf16.msra.mxu0 0
  %3859 = vmatpush.bf16.msra.mxu0 %v3815
  %3860 = vmatpush.bf16.msra.mxu0 %v3811
  %3861 = vmatmul.bf16.gmra.mxu0 %v3633
  %v3862 = vpop.f32.mrf.mxu0
  %v3863 = vadd.f32 %v3779, %v3862
  %v3864 = vpop.f32.mrf.mxu0
  %v3865 = vadd.f32 %v3779, %v3864
  %3866 = vdwg.mxu0
  %3867 = vmatpush.bf16.msra.mxu0 0
  %3868 = vmatpush.bf16.msra.mxu0 0
  %3869 = vmatpush.bf16.msra.mxu0 0
  %3870 = vmatpush.bf16.msra.mxu0 0
  %3871 = vmatpush.bf16.msra.mxu0 0
  %3872 = vmatpush.bf16.msra.mxu0 0
  %3873 = vmatpush.bf16.msra.mxu0 %v3816
  %3874 = vmatpush.bf16.msra.mxu0 %v3812
  %3875 = vmatmul.bf16.gmra.mxu0 %v3633
  %v3876 = vpop.f32.mrf.mxu0
  %v3877 = vadd.f32 %v3780, %v3876
  %v3878 = vpop.f32.mrf.mxu0
  %v3879 = vadd.f32 %v3780, %v3878
  %3880 = vdwg.mxu0
  %v3881 = vmax.f32 %v3835, 0.0
  %v3882 = vmax.f32 %v3849, 0.0
  %v3883 = vmax.f32 %v3863, 0.0
  %v3884 = vmax.f32 %v3877, 0.0
  %v3885 = vmax.f32 %v3837, 0.0
  %v3886 = vmax.f32 %v3851, 0.0
  %v3887 = vmax.f32 %v3865, 0.0
  %v3888 = vmax.f32 %v3879, 0.0
  %v3889 = vpack.c.bf16 %v3885, %v3881
  %v3890 = vpack.c.bf16 %v3886, %v3882
  %v3891 = vpack.c.bf16 %v3887, %v3883
  %v3892 = vpack.c.bf16 %v3888, %v3884
  %v3893 = vld [vmem:[%s14 + $0x100] sm:$0xf]
  %v3894 = vld [vmem:[%s14 + $0x104] sm:$0xf]
  %v3895 = vld [vmem:[%s14 + $0x108] sm:$0xf]
  %v3896 = vld [vmem:[%s14 + $0x10c] sm:$0xf]
  %v3897 = vld [vmem:[%s14 + $0x110] sm:$0xf]
  %v3898 = vld [vmem:[%s14 + $0x114] sm:$0xf]
  %v3899 = vld [vmem:[%s14 + $0x118] sm:$0xf]
  %v3900 = vld [vmem:[%s14 + $0x11c] sm:$0xf]
  %v3901 = vld [vmem:[%s14 + $0x120] sm:$0xf]
  %v3902 = vld [vmem:[%s14 + $0x124] sm:$0xf]
  %v3903 = vld [vmem:[%s14 + $0x128] sm:$0xf]
  %v3904 = vld [vmem:[%s14 + $0x12c] sm:$0xf]
  %v3905 = vld [vmem:[%s14 + $0x130] sm:$0xf]
  %v3906 = vld [vmem:[%s14 + $0x134] sm:$0xf]
  %v3907 = vld [vmem:[%s14 + $0x138] sm:$0xf]
  %v3908 = vld [vmem:[%s14 + $0x13c] sm:$0xf]
  %v3909 = vld [vmem:[%s14 + $0x140] sm:$0xf]
  %v3910 = vld [vmem:[%s14 + $0x144] sm:$0xf]
  %v3911 = vld [vmem:[%s14 + $0x148] sm:$0xf]
  %v3912 = vld [vmem:[%s14 + $0x14c] sm:$0xf]
  %v3913 = vld [vmem:[%s14 + $0x150] sm:$0xf]
  %v3914 = vld [vmem:[%s14 + $0x154] sm:$0xf]
  %v3915 = vld [vmem:[%s14 + $0x158] sm:$0xf]
  %v3916 = vld [vmem:[%s14 + $0x15c] sm:$0xf]
  %v3917 = vld [vmem:[%s14 + $0x160] sm:$0xf]
  %v3918 = vld [vmem:[%s14 + $0x164] sm:$0xf]
  %v3919 = vld [vmem:[%s14 + $0x168] sm:$0xf]
  %v3920 = vld [vmem:[%s14 + $0x16c] sm:$0xf]
  %v3921 = vld [vmem:[%s14 + $0x170] sm:$0xf]
  %v3922 = vld [vmem:[%s14 + $0x174] sm:$0xf]
  %v3923 = vld [vmem:[%s14 + $0x178] sm:$0xf]
  %v3924 = vld [vmem:[%s14 + $0x17c] sm:$0xf]
  %v3925 = vld [vmem:[%s14 + $0x180] sm:$0xf]
  %v3926 = vld [vmem:[%s14 + $0x184] sm:$0xf]
  %v3927 = vld [vmem:[%s14 + $0x188] sm:$0xf]
  %v3928 = vld [vmem:[%s14 + $0x18c] sm:$0xf]
  %v3929 = vld [vmem:[%s14 + $0x190] sm:$0xf]
  %v3930 = vld [vmem:[%s14 + $0x194] sm:$0xf]
  %v3931 = vld [vmem:[%s14 + $0x198] sm:$0xf]
  %v3932 = vld [vmem:[%s14 + $0x19c] sm:$0xf]
  %v3933 = vld [vmem:[%s14 + $0x1a0] sm:$0xf]
  %v3934 = vld [vmem:[%s14 + $0x1a4] sm:$0xf]
  %v3935 = vld [vmem:[%s14 + $0x1a8] sm:$0xf]
  %v3936 = vld [vmem:[%s14 + $0x1ac] sm:$0xf]
  %v3937 = vld [vmem:[%s14 + $0x1b0] sm:$0xf]
  %v3938 = vld [vmem:[%s14 + $0x1b4] sm:$0xf]
  %v3939 = vld [vmem:[%s14 + $0x1b8] sm:$0xf]
  %v3940 = vld [vmem:[%s14 + $0x1bc] sm:$0xf]
  %v3941 = vld [vmem:[%s14 + $0x1c0] sm:$0xf]
  %v3942 = vld [vmem:[%s14 + $0x1c4] sm:$0xf]
  %v3943 = vld [vmem:[%s14 + $0x1c8] sm:$0xf]
  %v3944 = vld [vmem:[%s14 + $0x1cc] sm:$0xf]
  %v3945 = vld [vmem:[%s14 + $0x1d0] sm:$0xf]
  %v3946 = vld [vmem:[%s14 + $0x1d4] sm:$0xf]
  %v3947 = vld [vmem:[%s14 + $0x1d8] sm:$0xf]
  %v3948 = vld [vmem:[%s14 + $0x1dc] sm:$0xf]
  %v3949 = vld [vmem:[%s14 + $0x1e0] sm:$0xf]
  %v3950 = vld [vmem:[%s14 + $0x1e4] sm:$0xf]
  %v3951 = vld [vmem:[%s14 + $0x1e8] sm:$0xf]
  %v3952 = vld [vmem:[%s14 + $0x1ec] sm:$0xf]
  %v3953 = vld [vmem:[%s14 + $0x1f0] sm:$0xf]
  %v3954 = vld [vmem:[%s14 + $0x1f4] sm:$0xf]
  %v3955 = vld [vmem:[%s14 + $0x1f8] sm:$0xf]
  %v3956 = vld [vmem:[%s14 + $0x1fc] sm:$0xf]
  %v4021 = vunpack.c.l.b16 %v3893
  %v4022 = vunpack.c.l.b16 %v3894
  %v4023 = vunpack.c.l.b16 %v3895
  %v4024 = vunpack.c.l.b16 %v3896
  %v4025 = vunpack.c.l.b16 %v3897
  %v4026 = vunpack.c.l.b16 %v3898
  %v4027 = vunpack.c.l.b16 %v3899
  %v4028 = vunpack.c.l.b16 %v3900
  %v4029 = vunpack.c.l.b16 %v3901
  %v4030 = vunpack.c.l.b16 %v3902
  %v4031 = vunpack.c.l.b16 %v3903
  %v4032 = vunpack.c.l.b16 %v3904
  %v4033 = vunpack.c.l.b16 %v3905
  %v4034 = vunpack.c.l.b16 %v3906
  %v4035 = vunpack.c.l.b16 %v3907
  %v4036 = vunpack.c.l.b16 %v3908
  %v4037 = vunpack.c.l.b16 %v3909
  %v4038 = vunpack.c.l.b16 %v3910
  %v4039 = vunpack.c.l.b16 %v3911
  %v4040 = vunpack.c.l.b16 %v3912
  %v4041 = vunpack.c.l.b16 %v3913
  %v4042 = vunpack.c.l.b16 %v3914
  %v4043 = vunpack.c.l.b16 %v3915
  %v4044 = vunpack.c.l.b16 %v3916
  %v4045 = vunpack.c.l.b16 %v3917
  %v4046 = vunpack.c.l.b16 %v3918
  %v4047 = vunpack.c.l.b16 %v3919
  %v4048 = vunpack.c.l.b16 %v3920
  %v4049 = vunpack.c.l.b16 %v3921
  %v4050 = vunpack.c.l.b16 %v3922
  %v4051 = vunpack.c.l.b16 %v3923
  %v4052 = vunpack.c.l.b16 %v3924
  %v4053 = vunpack.c.l.b16 %v3925
  %v4054 = vunpack.c.l.b16 %v3926
  %v4055 = vunpack.c.l.b16 %v3927
  %v4056 = vunpack.c.l.b16 %v3928
  %v4057 = vunpack.c.l.b16 %v3929
  %v4058 = vunpack.c.l.b16 %v3930
  %v4059 = vunpack.c.l.b16 %v3931
  %v4060 = vunpack.c.l.b16 %v3932
  %v4061 = vunpack.c.l.b16 %v3933
  %v4062 = vunpack.c.l.b16 %v3934
  %v4063 = vunpack.c.l.b16 %v3935
  %v4064 = vunpack.c.l.b16 %v3936
  %v4065 = vunpack.c.l.b16 %v3937
  %v4066 = vunpack.c.l.b16 %v3938
  %v4067 = vunpack.c.l.b16 %v3939
  %v4068 = vunpack.c.l.b16 %v3940
  %v4069 = vunpack.c.l.b16 %v3941
  %v4070 = vunpack.c.l.b16 %v3942
  %v4071 = vunpack.c.l.b16 %v3943
  %v4072 = vunpack.c.l.b16 %v3944
  %v4073 = vunpack.c.l.b16 %v3945
  %v4074 = vunpack.c.l.b16 %v3946
  %v4075 = vunpack.c.l.b16 %v3947
  %v4076 = vunpack.c.l.b16 %v3948
  %v4077 = vunpack.c.l.b16 %v3949
  %v4078 = vunpack.c.l.b16 %v3950
  %v4079 = vunpack.c.l.b16 %v3951
  %v4080 = vunpack.c.l.b16 %v3952
  %v4081 = vunpack.c.l.b16 %v3953
  %v4082 = vunpack.c.l.b16 %v3954
  %v4083 = vunpack.c.l.b16 %v3955
  %v4084 = vunpack.c.l.b16 %v3956
  %v4085 = vpack.c.b16 %v4022, %v4021
  %v4086 = vpack.c.b16 %v4024, %v4023
  %v4087 = vpack.c.b16 %v4026, %v4025
  %v4088 = vpack.c.b16 %v4028, %v4027
  %v4089 = vpack.c.b16 %v4030, %v4029
  %v4090 = vpack.c.b16 %v4032, %v4031
  %v4091 = vpack.c.b16 %v4034, %v4033
  %v4092 = vpack.c.b16 %v4036, %v4035
  %v4093 = vpack.c.b16 %v4038, %v4037
  %v4094 = vpack.c.b16 %v4040, %v4039
  %v4095 = vpack.c.b16 %v4042, %v4041
  %v4096 = vpack.c.b16 %v4044, %v4043
  %v4097 = vpack.c.b16 %v4046, %v4045
  %v4098 = vpack.c.b16 %v4048, %v4047
  %v4099 = vpack.c.b16 %v4050, %v4049
  %v4100 = vpack.c.b16 %v4052, %v4051
  %v4101 = vpack.c.b16 %v4054, %v4053
  %v4102 = vpack.c.b16 %v4056, %v4055
  %v4103 = vpack.c.b16 %v4058, %v4057
  %v4104 = vpack.c.b16 %v4060, %v4059
  %v4105 = vpack.c.b16 %v4062, %v4061
  %v4106 = vpack.c.b16 %v4064, %v4063
  %v4107 = vpack.c.b16 %v4066, %v4065
  %v4108 = vpack.c.b16 %v4068, %v4067
  %v4109 = vpack.c.b16 %v4070, %v4069
  %v4110 = vpack.c.b16 %v4072, %v4071
  %v4111 = vpack.c.b16 %v4074, %v4073
  %v4112 = vpack.c.b16 %v4076, %v4075
  %v4113 = vpack.c.b16 %v4078, %v4077
  %v4114 = vpack.c.b16 %v4080, %v4079
  %v4115 = vpack.c.b16 %v4082, %v4081
  %v4116 = vpack.c.b16 %v4084, %v4083
  %4149 = vmatpush.bf16.msra.mxu0 %v4092
  %4150 = vmatpush.bf16.msra.mxu0 %v4091
  %4151 = vmatpush.bf16.msra.mxu0 %v4090
  %4152 = vmatpush.bf16.msra.mxu0 %v4089
  %4153 = vmatpush.bf16.msra.mxu0 %v4088
  %4154 = vmatpush.bf16.msra.mxu0 %v4087
  %4155 = vmatpush.bf16.msra.mxu0 %v4086
  %4156 = vmatpush.bf16.msra.mxu0 %v4085
  %4157 = vmatmul.bf16.gmra.mxu0 %v3889
  %v4158 = vpop.f32.mrf.mxu0
  %v4159 = vadd.f32 0.0, %v4158
  %v4160 = vpop.f32.mrf.mxu0
  %v4161 = vadd.f32 0.0, %v4160
  %4162 = vdwg.mxu0
  %4163 = vmatpush.bf16.msra.mxu0 %v4100
  %4164 = vmatpush.bf16.msra.mxu0 %v4099
  %4165 = vmatpush.bf16.msra.mxu0 %v4098
  %4166 = vmatpush.bf16.msra.mxu0 %v4097
  %4167 = vmatpush.bf16.msra.mxu0 %v4096
  %4168 = vmatpush.bf16.msra.mxu0 %v4095
  %4169 = vmatpush.bf16.msra.mxu0 %v4094
  %4170 = vmatpush.bf16.msra.mxu0 %v4093
  %4171 = vmatmul.bf16.gmra.mxu0 %v3890
  %v4172 = vpop.f32.mrf.mxu0
  %v4173 = vadd.f32 %v4159, %v4172
  %v4174 = vpop.f32.mrf.mxu0
  %v4175 = vadd.f32 %v4161, %v4174
  %4176 = vdwg.mxu0
  %4177 = vmatpush.bf16.msra.mxu0 %v4108
  %4178 = vmatpush.bf16.msra.mxu0 %v4107
  %4179 = vmatpush.bf16.msra.mxu0 %v4106
  %4180 = vmatpush.bf16.msra.mxu0 %v4105
  %4181 = vmatpush.bf16.msra.mxu0 %v4104
  %4182 = vmatpush.bf16.msra.mxu0 %v4103
  %4183 = vmatpush.bf16.msra.mxu0 %v4102
  %4184 = vmatpush.bf16.msra.mxu0 %v4101
  %4185 = vmatmul.bf16.gmra.mxu0 %v3891
  %v4186 = vpop.f32.mrf.mxu0
  %v4187 = vadd.f32 %v4173, %v4186
  %v4188 = vpop.f32.mrf.mxu0
  %v4189 = vadd.f32 %v4175, %v4188
  %4190 = vdwg.mxu0
  %4191 = vmatpush.bf16.msra.mxu0 %v4116
  %4192 = vmatpush.bf16.msra.mxu0 %v4115
  %4193 = vmatpush.bf16.msra.mxu0 %v4114
  %4194 = vmatpush.bf16.msra.mxu0 %v4113
  %4195 = vmatpush.bf16.msra.mxu0 %v4112
  %4196 = vmatpush.bf16.msra.mxu0 %v4111
  %4197 = vmatpush.bf16.msra.mxu0 %v4110
  %4198 = vmatpush.bf16.msra.mxu0 %v4109
  %4199 = vmatmul.bf16.gmra.mxu0 %v3892
  %v4200 = vpop.f32.mrf.mxu0
  %v4201 = vadd.f32 %v4187, %v4200
  %v4202 = vpop.f32.mrf.mxu0
  %v4203 = vadd.f32 %v4189, %v4202
  %4204 = vdwg.mxu0
  %v4269 = vunpack.c.l.b16 %v3703
  %v4270 = vunpack.c.l.b16 %v3704
  %v4271 = vunpack.c.l.b16 %v3705
  %v4272 = vunpack.c.l.b16 %v3706
  %v4273 = vunpack.c.l.b16 %v3707
  %v4274 = vunpack.c.l.b16 %v3708
  %v4275 = vunpack.c.l.b16 %v3709
  %v4276 = vunpack.c.l.b16 %v3710
  %v4277 = vunpack.c.l.b16 %v3711
  %v4278 = vunpack.c.l.b16 %v3712
  %v4279 = vunpack.c.l.b16 %v3713
  %v4280 = vunpack.c.l.b16 %v3714
  %v4281 = vunpack.c.l.b16 %v3715
  %v4282 = vunpack.c.l.b16 %v3716
  %v4283 = vunpack.c.l.b16 %v3717
  %v4284 = vunpack.c.l.b16 %v3718
  %v4285 = vunpack.c.l.b16 %v3719
  %v4286 = vunpack.c.l.b16 %v3720
  %v4287 = vunpack.c.l.b16 %v3721
  %v4288 = vunpack.c.l.b16 %v3722
  %v4289 = vunpack.c.l.b16 %v3723
  %v4290 = vunpack.c.l.b16 %v3724
  %v4291 = vunpack.c.l.b16 %v3725
  %v4292 = vunpack.c.l.b16 %v3726
  %v4293 = vunpack.c.l.b16 %v3727
  %v4294 = vunpack.c.l.b16 %v3728
  %v4295 = vunpack.c.l.b16 %v3729
  %v4296 = vunpack.c.l.b16 %v3730
  %v4297 = vunpack.c.l.b16 %v3731
  %v4298 = vunpack.c.l.b16 %v3732
  %v4299 = vunpack.c.l.b16 %v3733
  %v4300 = vunpack.c.l.b16 %v3734
  %v4301 = vunpack.c.l.b16 %v3735
  %v4302 = vunpack.c.l.b16 %v3736
  %v4303 = vunpack.c.l.b16 %v3737
  %v4304 = vunpack.c.l.b16 %v3738
  %v4305 = vunpack.c.l.b16 %v3739
  %v4306 = vunpack.c.l.b16 %v3740
  %v4307 = vunpack.c.l.b16 %v3741
  %v4308 = vunpack.c.l.b16 %v3742
  %v4309 = vunpack.c.l.b16 %v3743
  %v4310 = vunpack.c.l.b16 %v3744
  %v4311 = vunpack.c.l.b16 %v3745
  %v4312 = vunpack.c.l.b16 %v3746
  %v4313 = vunpack.c.l.b16 %v3747
  %v4314 = vunpack.c.l.b16 %v3748
  %v4315 = vunpack.c.l.b16 %v3749
  %v4316 = vunpack.c.l.b16 %v3750
  %v4317 = vunpack.c.l.b16 %v3751
  %v4318 = vunpack.c.l.b16 %v3752
  %v4319 = vunpack.c.l.b16 %v3753
  %v4320 = vunpack.c.l.b16 %v3754
  %v4321 = vunpack.c.l.b16 %v3755
  %v4322 = vunpack.c.l.b16 %v3756
  %v4323 = vunpack.c.l.b16 %v3757
  %v4324 = vunpack.c.l.b16 %v3758
  %v4325 = vunpack.c.l.b16 %v3759
  %v4326 = vunpack.c.l.b16 %v3760
  %v4327 = vunpack.c.l.b16 %v3761
  %v4328 = vunpack.c.l.b16 %v3762
  %v4329 = vunpack.c.l.b16 %v3763
  %v4330 = vunpack.c.l.b16 %v3764
  %v4331 = vunpack.c.l.b16 %v3765
  %v4332 = vunpack.c.l.b16 %v3766
  %v4333 = vpack.c.b16 %v4270, %v4269
  %v4334 = vpack.c.b16 %v4272, %v4271
  %v4335 = vpack.c.b16 %v4274, %v4273
  %v4336 = vpack.c.b16 %v4276, %v4275
  %v4337 = vpack.c.b16 %v4278, %v4277
  %v4338 = vpack.c.b16 %v4280, %v4279
  %v4339 = vpack.c.b16 %v4282, %v4281
  %v4340 = vpack.c.b16 %v4284, %v4283
  %v4341 = vpack.c.b16 %v4286, %v4285
  %v4342 = vpack.c.b16 %v4288, %v4287
  %v4343 = vpack.c.b16 %v4290, %v4289
  %v4344 = vpack.c.b16 %v4292, %v4291
  %v4345 = vpack.c.b16 %v4294, %v4293
  %v4346 = vpack.c.b16 %v4296, %v4295
  %v4347 = vpack.c.b16 %v4298, %v4297
  %v4348 = vpack.c.b16 %v4300, %v4299
  %v4349 = vpack.c.b16 %v4302, %v4301
  %v4350 = vpack.c.b16 %v4304, %v4303
  %v4351 = vpack.c.b16 %v4306, %v4305
  %v4352 = vpack.c.b16 %v4308, %v4307
  %v4353 = vpack.c.b16 %v4310, %v4309
  %v4354 = vpack.c.b16 %v4312, %v4311
  %v4355 = vpack.c.b16 %v4314, %v4313
  %v4356 = vpack.c.b16 %v4316, %v4315
  %v4357 = vpack.c.b16 %v4318, %v4317
  %v4358 = vpack.c.b16 %v4320, %v4319
  %v4359 = vpack.c.b16 %v4322, %v4321
  %v4360 = vpack.c.b16 %v4324, %v4323
  %v4361 = vpack.c.b16 %v4326, %v4325
  %v4362 = vpack.c.b16 %v4328, %v4327
  %v4363 = vpack.c.b16 %v4330, %v4329
  %v4364 = vpack.c.b16 %v4332, %v4331
  %4397 = vmatpush.bf16.msra.mxu0 %v4340
  %4398 = vmatpush.bf16.msra.mxu0 %v4339
  %4399 = vmatpush.bf16.msra.mxu0 %v4338
  %4400 = vmatpush.bf16.msra.mxu0 %v4337
  %4401 = vmatpush.bf16.msra.mxu0 %v4336
  %4402 = vmatpush.bf16.msra.mxu0 %v4335
  %4403 = vmatpush.bf16.msra.mxu0 %v4334
  %4404 = vmatpush.bf16.msra.mxu0 %v4333
  %4405 = vmatmul.bf16.gmra.mxu0 %v3699
  %v4406 = vpop.f32.mrf.mxu0
  %v4407 = vadd.f32 %v4201, %v4406
  %v4408 = vpop.f32.mrf.mxu0
  %v4409 = vadd.f32 %v4203, %v4408
  %4410 = vdwg.mxu0
  %4411 = vmatpush.bf16.msra.mxu0 %v4348
  %4412 = vmatpush.bf16.msra.mxu0 %v4347
  %4413 = vmatpush.bf16.msra.mxu0 %v4346
  %4414 = vmatpush.bf16.msra.mxu0 %v4345
  %4415 = vmatpush.bf16.msra.mxu0 %v4344
  %4416 = vmatpush.bf16.msra.mxu0 %v4343
  %4417 = vmatpush.bf16.msra.mxu0 %v4342
  %4418 = vmatpush.bf16.msra.mxu0 %v4341
  %4419 = vmatmul.bf16.gmra.mxu0 %v3700
  %v4420 = vpop.f32.mrf.mxu0
  %v4421 = vadd.f32 %v4407, %v4420
  %v4422 = vpop.f32.mrf.mxu0
  %v4423 = vadd.f32 %v4409, %v4422
  %4424 = vdwg.mxu0
  %4425 = vmatpush.bf16.msra.mxu0 %v4356
  %4426 = vmatpush.bf16.msra.mxu0 %v4355
  %4427 = vmatpush.bf16.msra.mxu0 %v4354
  %4428 = vmatpush.bf16.msra.mxu0 %v4353
  %4429 = vmatpush.bf16.msra.mxu0 %v4352
  %4430 = vmatpush.bf16.msra.mxu0 %v4351
  %4431 = vmatpush.bf16.msra.mxu0 %v4350
  %4432 = vmatpush.bf16.msra.mxu0 %v4349
  %4433 = vmatmul.bf16.gmra.mxu0 %v3701
  %v4434 = vpop.f32.mrf.mxu0
  %v4435 = vadd.f32 %v4421, %v4434
  %v4436 = vpop.f32.mrf.mxu0
  %v4437 = vadd.f32 %v4423, %v4436
  %4438 = vdwg.mxu0
  %4439 = vmatpush.bf16.msra.mxu0 %v4364
  %4440 = vmatpush.bf16.msra.mxu0 %v4363
  %4441 = vmatpush.bf16.msra.mxu0 %v4362
  %4442 = vmatpush.bf16.msra.mxu0 %v4361
  %4443 = vmatpush.bf16.msra.mxu0 %v4360
  %4444 = vmatpush.bf16.msra.mxu0 %v4359
  %4445 = vmatpush.bf16.msra.mxu0 %v4358
  %4446 = vmatpush.bf16.msra.mxu0 %v4357
  %4447 = vmatmul.bf16.gmra.mxu0 %v3702
  %v4448 = vpop.f32.mrf.mxu0
  %v4449 = vadd.f32 %v4435, %v4448
  %v4450 = vpop.f32.mrf.mxu0
  %v4451 = vadd.f32 %v4437, %v4450
  %4452 = vdwg.mxu0
  %v4453 = vld [vmem:[%s12 + $0x20] sm:$0xff]
  %v4454 = vld [vmem:[%s12 + $0x28] sm:$0xff]
  %v4455 = vld [vmem:[%s12 + $0x60] sm:$0xff]
  %v4456 = vld [vmem:[%s12 + $0x68] sm:$0xff]
  %v4457 = vld [vmem:[%s12 + $0xa0] sm:$0xff]
  %v4458 = vld [vmem:[%s12 + $0xa8] sm:$0xff]
  %v4459 = vld [vmem:[%s12 + $0xe0] sm:$0xff]
  %v4460 = vld [vmem:[%s12 + $0xe8] sm:$0xff]
  %v4461 = vld [vmem:[%s13 + $0x8] sm:$0xf]
  %v4463 = vperm.slane %v4461, 0
  %v4464 = vperm.slane %v4461, 1
  %v4465 = vperm.slane %v4461, 2
  %v4466 = vperm.slane %v4461, 3
  %v4479 = vunpack.c.l.b16 %v4453
  %v4480 = vunpack.c.h.b16 %v4453
  %v4481 = vunpack.c.l.b16 %v4454
  %v4482 = vunpack.c.h.b16 %v4454
  %v4483 = vunpack.c.l.b16 %v4455
  %v4484 = vunpack.c.h.b16 %v4455
  %v4485 = vunpack.c.l.b16 %v4456
  %v4486 = vunpack.c.h.b16 %v4456
  %v4487 = vunpack.c.l.b16 %v4457
  %v4488 = vunpack.c.h.b16 %v4457
  %v4489 = vunpack.c.l.b16 %v4458
  %v4490 = vunpack.c.h.b16 %v4458
  %v4491 = vunpack.c.l.b16 %v4459
  %v4492 = vunpack.c.h.b16 %v4459
  %v4493 = vunpack.c.l.b16 %v4460
  %v4494 = vunpack.c.h.b16 %v4460
  %v4495 = vpack.c.b16 %v4483, %v4479
  %v4496 = vpack.c.b16 %v4484, %v4480
  %v4497 = vpack.c.b16 %v4485, %v4481
  %v4498 = vpack.c.b16 %v4486, %v4482
  %v4499 = vpack.c.b16 %v4491, %v4487
  %v4500 = vpack.c.b16 %v4492, %v4488
  %v4501 = vpack.c.b16 %v4493, %v4489
  %v4502 = vpack.c.b16 %v4494, %v4490
  %4511 = vmatpush.bf16.msra.mxu0 0
  %4512 = vmatpush.bf16.msra.mxu0 0
  %4513 = vmatpush.bf16.msra.mxu0 0
  %4514 = vmatpush.bf16.msra.mxu0 0
  %4515 = vmatpush.bf16.msra.mxu0 0
  %4516 = vmatpush.bf16.msra.mxu0 0
  %4517 = vmatpush.bf16.msra.mxu0 %v4499
  %4518 = vmatpush.bf16.msra.mxu0 %v4495
  %4519 = vmatmul.bf16.gmra.mxu0 %v3633
  %v4520 = vpop.f32.mrf.mxu0
  %v4521 = vadd.f32 %v4463, %v4520
  %v4522 = vpop.f32.mrf.mxu0
  %v4523 = vadd.f32 %v4463, %v4522
  %4524 = vdwg.mxu0
  %4525 = vmatpush.bf16.msra.mxu0 0
  %4526 = vmatpush.bf16.msra.mxu0 0
  %4527 = vmatpush.bf16.msra.mxu0 0
  %4528 = vmatpush.bf16.msra.mxu0 0
  %4529 = vmatpush.bf16.msra.mxu0 0
  %4530 = vmatpush.bf16.msra.mxu0 0
  %4531 = vmatpush.bf16.msra.mxu0 %v4500
  %4532 = vmatpush.bf16.msra.mxu0 %v4496
  %4533 = vmatmul.bf16.gmra.mxu0 %v3633
  %v4534 = vpop.f32.mrf.mxu0
  %v4535 = vadd.f32 %v4464, %v4534
  %v4536 = vpop.f32.mrf.mxu0
  %v4537 = vadd.f32 %v4464, %v4536
  %4538 = vdwg.mxu0
  %4539 = vmatpush.bf16.msra.mxu0 0
  %4540 = vmatpush.bf16.msra.mxu0 0
  %4541 = vmatpush.bf16.msra.mxu0 0
  %4542 = vmatpush.bf16.msra.mxu0 0
  %4543 = vmatpush.bf16.msra.mxu0 0
  %4544 = vmatpush.bf16.msra.mxu0 0
  %4545 = vmatpush.bf16.msra.mxu0 %v4501
  %4546 = vmatpush.bf16.msra.mxu0 %v4497
  %4547 = vmatmul.bf16.gmra.mxu0 %v3633
  %v4548 = vpop.f32.mrf.mxu0
  %v4549 = vadd.f32 %v4465, %v4548
  %v4550 = vpop.f32.mrf.mxu0
  %v4551 = vadd.f32 %v4465, %v4550
  %4552 = vdwg.mxu0
  %4553 = vmatpush.bf16.msra.mxu0 0
  %4554 = vmatpush.bf16.msra.mxu0 0
  %4555 = vmatpush.bf16.msra.mxu0 0
  %4556 = vmatpush.bf16.msra.mxu0 0
  %4557 = vmatpush.bf16.msra.mxu0 0
  %4558 = vmatpush.bf16.msra.mxu0 0
  %4559 = vmatpush.bf16.msra.mxu0 %v4502
  %4560 = vmatpush.bf16.msra.mxu0 %v4498
  %4561 = vmatmul.bf16.gmra.mxu0 %v3633
  %v4562 = vpop.f32.mrf.mxu0
  %v4563 = vadd.f32 %v4466, %v4562
  %v4564 = vpop.f32.mrf.mxu0
  %v4565 = vadd.f32 %v4466, %v4564
  %4566 = vdwg.mxu0
  %v4567 = vmax.f32 %v4521, 0.0
  %v4568 = vmax.f32 %v4535, 0.0
  %v4569 = vmax.f32 %v4549, 0.0
  %v4570 = vmax.f32 %v4563, 0.0
  %v4571 = vmax.f32 %v4523, 0.0
  %v4572 = vmax.f32 %v4537, 0.0
  %v4573 = vmax.f32 %v4551, 0.0
  %v4574 = vmax.f32 %v4565, 0.0
  %v4575 = vpack.c.bf16 %v4571, %v4567
  %v4576 = vpack.c.bf16 %v4572, %v4568
  %v4577 = vpack.c.bf16 %v4573, %v4569
  %v4578 = vpack.c.bf16 %v4574, %v4570
  %v4579 = vld [vmem:[%s14 + $0x200] sm:$0xf]
  %v4580 = vld [vmem:[%s14 + $0x204] sm:$0xf]
  %v4581 = vld [vmem:[%s14 + $0x208] sm:$0xf]
  %v4582 = vld [vmem:[%s14 + $0x20c] sm:$0xf]
  %v4583 = vld [vmem:[%s14 + $0x210] sm:$0xf]
  %v4584 = vld [vmem:[%s14 + $0x214] sm:$0xf]
  %v4585 = vld [vmem:[%s14 + $0x218] sm:$0xf]
  %v4586 = vld [vmem:[%s14 + $0x21c] sm:$0xf]
  %v4587 = vld [vmem:[%s14 + $0x220] sm:$0xf]
  %v4588 = vld [vmem:[%s14 + $0x224] sm:$0xf]
  %v4589 = vld [vmem:[%s14 + $0x228] sm:$0xf]
  %v4590 = vld [vmem:[%s14 + $0x22c] sm:$0xf]
  %v4591 = vld [vmem:[%s14 + $0x230] sm:$0xf]
  %v4592 = vld [vmem:[%s14 + $0x234] sm:$0xf]
  %v4593 = vld [vmem:[%s14 + $0x238] sm:$0xf]
  %v4594 = vld [vmem:[%s14 + $0x23c] sm:$0xf]
  %v4595 = vld [vmem:[%s14 + $0x240] sm:$0xf]
  %v4596 = vld [vmem:[%s14 + $0x244] sm:$0xf]
  %v4597 = vld [vmem:[%s14 + $0x248] sm:$0xf]
  %v4598 = vld [vmem:[%s14 + $0x24c] sm:$0xf]
  %v4599 = vld [vmem:[%s14 + $0x250] sm:$0xf]
  %v4600 = vld [vmem:[%s14 + $0x254] sm:$0xf]
  %v4601 = vld [vmem:[%s14 + $0x258] sm:$0xf]
  %v4602 = vld [vmem:[%s14 + $0x25c] sm:$0xf]
  %v4603 = vld [vmem:[%s14 + $0x260] sm:$0xf]
  %v4604 = vld [vmem:[%s14 + $0x264] sm:$0xf]
  %v4605 = vld [vmem:[%s14 + $0x268] sm:$0xf]
  %v4606 = vld [vmem:[%s14 + $0x26c] sm:$0xf]
  %v4607 = vld [vmem:[%s14 + $0x270] sm:$0xf]
  %v4608 = vld [vmem:[%s14 + $0x274] sm:$0xf]
  %v4609 = vld [vmem:[%s14 + $0x278] sm:$0xf]
  %v4610 = vld [vmem:[%s14 + $0x27c] sm:$0xf]
  %v4611 = vld [vmem:[%s14 + $0x280] sm:$0xf]
  %v4612 = vld [vmem:[%s14 + $0x284] sm:$0xf]
  %v4613 = vld [vmem:[%s14 + $0x288] sm:$0xf]
  %v4614 = vld [vmem:[%s14 + $0x28c] sm:$0xf]
  %v4615 = vld [vmem:[%s14 + $0x290] sm:$0xf]
  %v4616 = vld [vmem:[%s14 + $0x294] sm:$0xf]
  %v4617 = vld [vmem:[%s14 + $0x298] sm:$0xf]
  %v4618 = vld [vmem:[%s14 + $0x29c] sm:$0xf]
  %v4619 = vld [vmem:[%s14 + $0x2a0] sm:$0xf]
  %v4620 = vld [vmem:[%s14 + $0x2a4] sm:$0xf]
  %v4621 = vld [vmem:[%s14 + $0x2a8] sm:$0xf]
  %v4622 = vld [vmem:[%s14 + $0x2ac] sm:$0xf]
  %v4623 = vld [vmem:[%s14 + $0x2b0] sm:$0xf]
  %v4624 = vld [vmem:[%s14 + $0x2b4] sm:$0xf]
  %v4625 = vld [vmem:[%s14 + $0x2b8] sm:$0xf]
  %v4626 = vld [vmem:[%s14 + $0x2bc] sm:$0xf]
  %v4627 = vld [vmem:[%s14 + $0x2c0] sm:$0xf]
  %v4628 = vld [vmem:[%s14 + $0x2c4] sm:$0xf]
  %v4629 = vld [vmem:[%s14 + $0x2c8] sm:$0xf]
  %v4630 = vld [vmem:[%s14 + $0x2cc] sm:$0xf]
  %v4631 = vld [vmem:[%s14 + $0x2d0] sm:$0xf]
  %v4632 = vld [vmem:[%s14 + $0x2d4] sm:$0xf]
  %v4633 = vld [vmem:[%s14 + $0x2d8] sm:$0xf]
  %v4634 = vld [vmem:[%s14 + $0x2dc] sm:$0xf]
  %v4635 = vld [vmem:[%s14 + $0x2e0] sm:$0xf]
  %v4636 = vld [vmem:[%s14 + $0x2e4] sm:$0xf]
  %v4637 = vld [vmem:[%s14 + $0x2e8] sm:$0xf]
  %v4638 = vld [vmem:[%s14 + $0x2ec] sm:$0xf]
  %v4639 = vld [vmem:[%s14 + $0x2f0] sm:$0xf]
  %v4640 = vld [vmem:[%s14 + $0x2f4] sm:$0xf]
  %v4641 = vld [vmem:[%s14 + $0x2f8] sm:$0xf]
  %v4642 = vld [vmem:[%s14 + $0x2fc] sm:$0xf]
  %v4707 = vunpack.c.l.b16 %v4579
  %v4708 = vunpack.c.l.b16 %v4580
  %v4709 = vunpack.c.l.b16 %v4581
  %v4710 = vunpack.c.l.b16 %v4582
  %v4711 = vunpack.c.l.b16 %v4583
  %v4712 = vunpack.c.l.b16 %v4584
  %v4713 = vunpack.c.l.b16 %v4585
  %v4714 = vunpack.c.l.b16 %v4586
  %v4715 = vunpack.c.l.b16 %v4587
  %v4716 = vunpack.c.l.b16 %v4588
  %v4717 = vunpack.c.l.b16 %v4589
  %v4718 = vunpack.c.l.b16 %v4590
  %v4719 = vunpack.c.l.b16 %v4591
  %v4720 = vunpack.c.l.b16 %v4592
  %v4721 = vunpack.c.l.b16 %v4593
  %v4722 = vunpack.c.l.b16 %v4594
  %v4723 = vunpack.c.l.b16 %v4595
  %v4724 = vunpack.c.l.b16 %v4596
  %v4725 = vunpack.c.l.b16 %v4597
  %v4726 = vunpack.c.l.b16 %v4598
  %v4727 = vunpack.c.l.b16 %v4599
  %v4728 = vunpack.c.l.b16 %v4600
  %v4729 = vunpack.c.l.b16 %v4601
  %v4730 = vunpack.c.l.b16 %v4602
  %v4731 = vunpack.c.l.b16 %v4603
  %v4732 = vunpack.c.l.b16 %v4604
  %v4733 = vunpack.c.l.b16 %v4605
  %v4734 = vunpack.c.l.b16 %v4606
  %v4735 = vunpack.c.l.b16 %v4607
  %v4736 = vunpack.c.l.b16 %v4608
  %v4737 = vunpack.c.l.b16 %v4609
  %v4738 = vunpack.c.l.b16 %v4610
  %v4739 = vunpack.c.l.b16 %v4611
  %v4740 = vunpack.c.l.b16 %v4612
  %v4741 = vunpack.c.l.b16 %v4613
  %v4742 = vunpack.c.l.b16 %v4614
  %v4743 = vunpack.c.l.b16 %v4615
  %v4744 = vunpack.c.l.b16 %v4616
  %v4745 = vunpack.c.l.b16 %v4617
  %v4746 = vunpack.c.l.b16 %v4618
  %v4747 = vunpack.c.l.b16 %v4619
  %v4748 = vunpack.c.l.b16 %v4620
  %v4749 = vunpack.c.l.b16 %v4621
  %v4750 = vunpack.c.l.b16 %v4622
  %v4751 = vunpack.c.l.b16 %v4623
  %v4752 = vunpack.c.l.b16 %v4624
  %v4753 = vunpack.c.l.b16 %v4625
  %v4754 = vunpack.c.l.b16 %v4626
  %v4755 = vunpack.c.l.b16 %v4627
  %v4756 = vunpack.c.l.b16 %v4628
  %v4757 = vunpack.c.l.b16 %v4629
  %v4758 = vunpack.c.l.b16 %v4630
  %v4759 = vunpack.c.l.b16 %v4631
  %v4760 = vunpack.c.l.b16 %v4632
  %v4761 = vunpack.c.l.b16 %v4633
  %v4762 = vunpack.c.l.b16 %v4634
  %v4763 = vunpack.c.l.b16 %v4635
  %v4764 = vunpack.c.l.b16 %v4636
  %v4765 = vunpack.c.l.b16 %v4637
  %v4766 = vunpack.c.l.b16 %v4638
  %v4767 = vunpack.c.l.b16 %v4639
  %v4768 = vunpack.c.l.b16 %v4640
  %v4769 = vunpack.c.l.b16 %v4641
  %v4770 = vunpack.c.l.b16 %v4642
  %v4771 = vpack.c.b16 %v4708, %v4707
  %v4772 = vpack.c.b16 %v4710, %v4709
  %v4773 = vpack.c.b16 %v4712, %v4711
  %v4774 = vpack.c.b16 %v4714, %v4713
  %v4775 = vpack.c.b16 %v4716, %v4715
  %v4776 = vpack.c.b16 %v4718, %v4717
  %v4777 = vpack.c.b16 %v4720, %v4719
  %v4778 = vpack.c.b16 %v4722, %v4721
  %v4779 = vpack.c.b16 %v4724, %v4723
  %v4780 = vpack.c.b16 %v4726, %v4725
  %v4781 = vpack.c.b16 %v4728, %v4727
  %v4782 = vpack.c.b16 %v4730, %v4729
  %v4783 = vpack.c.b16 %v4732, %v4731
  %v4784 = vpack.c.b16 %v4734, %v4733
  %v4785 = vpack.c.b16 %v4736, %v4735
  %v4786 = vpack.c.b16 %v4738, %v4737
  %v4787 = vpack.c.b16 %v4740, %v4739
  %v4788 = vpack.c.b16 %v4742, %v4741
  %v4789 = vpack.c.b16 %v4744, %v4743
  %v4790 = vpack.c.b16 %v4746, %v4745
  %v4791 = vpack.c.b16 %v4748, %v4747
  %v4792 = vpack.c.b16 %v4750, %v4749
  %v4793 = vpack.c.b16 %v4752, %v4751
  %v4794 = vpack.c.b16 %v4754, %v4753
  %v4795 = vpack.c.b16 %v4756, %v4755
  %v4796 = vpack.c.b16 %v4758, %v4757
  %v4797 = vpack.c.b16 %v4760, %v4759
  %v4798 = vpack.c.b16 %v4762, %v4761
  %v4799 = vpack.c.b16 %v4764, %v4763
  %v4800 = vpack.c.b16 %v4766, %v4765
  %v4801 = vpack.c.b16 %v4768, %v4767
  %v4802 = vpack.c.b16 %v4770, %v4769
  %4835 = vmatpush.bf16.msra.mxu0 %v4778
  %4836 = vmatpush.bf16.msra.mxu0 %v4777
  %4837 = vmatpush.bf16.msra.mxu0 %v4776
  %4838 = vmatpush.bf16.msra.mxu0 %v4775
  %4839 = vmatpush.bf16.msra.mxu0 %v4774
  %4840 = vmatpush.bf16.msra.mxu0 %v4773
  %4841 = vmatpush.bf16.msra.mxu0 %v4772
  %4842 = vmatpush.bf16.msra.mxu0 %v4771
  %4843 = vmatmul.bf16.gmra.mxu0 %v4575
  %v4844 = vpop.f32.mrf.mxu0
  %v4845 = vadd.f32 0.0, %v4844
  %v4846 = vpop.f32.mrf.mxu0
  %v4847 = vadd.f32 0.0, %v4846
  %4848 = vdwg.mxu0
  %4849 = vmatpush.bf16.msra.mxu0 %v4786
  %4850 = vmatpush.bf16.msra.mxu0 %v4785
  %4851 = vmatpush.bf16.msra.mxu0 %v4784
  %4852 = vmatpush.bf16.msra.mxu0 %v4783
  %4853 = vmatpush.bf16.msra.mxu0 %v4782
  %4854 = vmatpush.bf16.msra.mxu0 %v4781
  %4855 = vmatpush.bf16.msra.mxu0 %v4780
  %4856 = vmatpush.bf16.msra.mxu0 %v4779
  %4857 = vmatmul.bf16.gmra.mxu0 %v4576
  %v4858 = vpop.f32.mrf.mxu0
  %v4859 = vadd.f32 %v4845, %v4858
  %v4860 = vpop.f32.mrf.mxu0
  %v4861 = vadd.f32 %v4847, %v4860
  %4862 = vdwg.mxu0
  %4863 = vmatpush.bf16.msra.mxu0 %v4794
  %4864 = vmatpush.bf16.msra.mxu0 %v4793
  %4865 = vmatpush.bf16.msra.mxu0 %v4792
  %4866 = vmatpush.bf16.msra.mxu0 %v4791
  %4867 = vmatpush.bf16.msra.mxu0 %v4790
  %4868 = vmatpush.bf16.msra.mxu0 %v4789
  %4869 = vmatpush.bf16.msra.mxu0 %v4788
  %4870 = vmatpush.bf16.msra.mxu0 %v4787
  %4871 = vmatmul.bf16.gmra.mxu0 %v4577
  %v4872 = vpop.f32.mrf.mxu0
  %v4873 = vadd.f32 %v4859, %v4872
  %v4874 = vpop.f32.mrf.mxu0
  %v4875 = vadd.f32 %v4861, %v4874
  %4876 = vdwg.mxu0
  %4877 = vmatpush.bf16.msra.mxu0 %v4802
  %4878 = vmatpush.bf16.msra.mxu0 %v4801
  %4879 = vmatpush.bf16.msra.mxu0 %v4800
  %4880 = vmatpush.bf16.msra.mxu0 %v4799
  %4881 = vmatpush.bf16.msra.mxu0 %v4798
  %4882 = vmatpush.bf16.msra.mxu0 %v4797
  %4883 = vmatpush.bf16.msra.mxu0 %v4796
  %4884 = vmatpush.bf16.msra.mxu0 %v4795
  %4885 = vmatmul.bf16.gmra.mxu0 %v4578
  %v4886 = vpop.f32.mrf.mxu0
  %v4887 = vadd.f32 %v4873, %v4886
  %v4888 = vpop.f32.mrf.mxu0
  %v4889 = vadd.f32 %v4875, %v4888
  %4890 = vdwg.mxu0
  %v4891 = vadd.f32 %v4449, %v4887
  %v4892 = vadd.f32 %v4451, %v4889
  %v4893 = vld [vmem:[%s12 + $0x30] sm:$0xff]
  %v4894 = vld [vmem:[%s12 + $0x38] sm:$0xff]
  %v4895 = vld [vmem:[%s12 + $0x70] sm:$0xff]
  %v4896 = vld [vmem:[%s12 + $0x78] sm:$0xff]
  %v4897 = vld [vmem:[%s12 + $0xb0] sm:$0xff]
  %v4898 = vld [vmem:[%s12 + $0xb8] sm:$0xff]
  %v4899 = vld [vmem:[%s12 + $0xf0] sm:$0xff]
  %v4900 = vld [vmem:[%s12 + $0xf8] sm:$0xff]
  %v4901 = vld [vmem:[%s13 + $0xc] sm:$0xf]
  %v4903 = vperm.slane %v4901, 0
  %v4904 = vperm.slane %v4901, 1
  %v4905 = vperm.slane %v4901, 2
  %v4906 = vperm.slane %v4901, 3
  %v4919 = vunpack.c.l.b16 %v4893
  %v4920 = vunpack.c.h.b16 %v4893
  %v4921 = vunpack.c.l.b16 %v4894
  %v4922 = vunpack.c.h.b16 %v4894
  %v4923 = vunpack.c.l.b16 %v4895
  %v4924 = vunpack.c.h.b16 %v4895
  %v4925 = vunpack.c.l.b16 %v4896
  %v4926 = vunpack.c.h.b16 %v4896
  %v4927 = vunpack.c.l.b16 %v4897
  %v4928 = vunpack.c.h.b16 %v4897
  %v4929 = vunpack.c.l.b16 %v4898
  %v4930 = vunpack.c.h.b16 %v4898
  %v4931 = vunpack.c.l.b16 %v4899
  %v4932 = vunpack.c.h.b16 %v4899
  %v4933 = vunpack.c.l.b16 %v4900
  %v4934 = vunpack.c.h.b16 %v4900
  %v4935 = vpack.c.b16 %v4923, %v4919
  %v4936 = vpack.c.b16 %v4924, %v4920
  %v4937 = vpack.c.b16 %v4925, %v4921
  %v4938 = vpack.c.b16 %v4926, %v4922
  %v4939 = vpack.c.b16 %v4931, %v4927
  %v4940 = vpack.c.b16 %v4932, %v4928
  %v4941 = vpack.c.b16 %v4933, %v4929
  %v4942 = vpack.c.b16 %v4934, %v4930
  %4951 = vmatpush.bf16.msra.mxu0 0
  %4952 = vmatpush.bf16.msra.mxu0 0
  %4953 = vmatpush.bf16.msra.mxu0 0
  %4954 = vmatpush.bf16.msra.mxu0 0
  %4955 = vmatpush.bf16.msra.mxu0 0
  %4956 = vmatpush.bf16.msra.mxu0 0
  %4957 = vmatpush.bf16.msra.mxu0 %v4939
  %4958 = vmatpush.bf16.msra.mxu0 %v4935
  %4959 = vmatmul.bf16.gmra.mxu0 %v3633
  %v4960 = vpop.f32.mrf.mxu0
  %v4961 = vadd.f32 %v4903, %v4960
  %v4962 = vpop.f32.mrf.mxu0
  %v4963 = vadd.f32 %v4903, %v4962
  %4964 = vdwg.mxu0
  %4965 = vmatpush.bf16.msra.mxu0 0
  %4966 = vmatpush.bf16.msra.mxu0 0
  %4967 = vmatpush.bf16.msra.mxu0 0
  %4968 = vmatpush.bf16.msra.mxu0 0
  %4969 = vmatpush.bf16.msra.mxu0 0
  %4970 = vmatpush.bf16.msra.mxu0 0
  %4971 = vmatpush.bf16.msra.mxu0 %v4940
  %4972 = vmatpush.bf16.msra.mxu0 %v4936
  %4973 = vmatmul.bf16.gmra.mxu0 %v3633
  %v4974 = vpop.f32.mrf.mxu0
  %v4975 = vadd.f32 %v4904, %v4974
  %v4976 = vpop.f32.mrf.mxu0
  %v4977 = vadd.f32 %v4904, %v4976
  %4978 = vdwg.mxu0
  %4979 = vmatpush.bf16.msra.mxu0 0
  %4980 = vmatpush.bf16.msra.mxu0 0
  %4981 = vmatpush.bf16.msra.mxu0 0
  %4982 = vmatpush.bf16.msra.mxu0 0
  %4983 = vmatpush.bf16.msra.mxu0 0
  %4984 = vmatpush.bf16.msra.mxu0 0
  %4985 = vmatpush.bf16.msra.mxu0 %v4941
  %4986 = vmatpush.bf16.msra.mxu0 %v4937
  %4987 = vmatmul.bf16.gmra.mxu0 %v3633
  %v4988 = vpop.f32.mrf.mxu0
  %v4989 = vadd.f32 %v4905, %v4988
  %v4990 = vpop.f32.mrf.mxu0
  %v4991 = vadd.f32 %v4905, %v4990
  %4992 = vdwg.mxu0
  %4993 = vmatpush.bf16.msra.mxu0 0
  %4994 = vmatpush.bf16.msra.mxu0 0
  %4995 = vmatpush.bf16.msra.mxu0 0
  %4996 = vmatpush.bf16.msra.mxu0 0
  %4997 = vmatpush.bf16.msra.mxu0 0
  %4998 = vmatpush.bf16.msra.mxu0 0
  %4999 = vmatpush.bf16.msra.mxu0 %v4942
  %5000 = vmatpush.bf16.msra.mxu0 %v4938
  %5001 = vmatmul.bf16.gmra.mxu0 %v3633
  %v5002 = vpop.f32.mrf.mxu0
  %v5003 = vadd.f32 %v4906, %v5002
  %v5004 = vpop.f32.mrf.mxu0
  %v5005 = vadd.f32 %v4906, %v5004
  %5006 = vdwg.mxu0
  %v5007 = vmax.f32 %v4961, 0.0
  %v5008 = vmax.f32 %v4975, 0.0
  %v5009 = vmax.f32 %v4989, 0.0
  %v5010 = vmax.f32 %v5003, 0.0
  %v5011 = vmax.f32 %v4963, 0.0
  %v5012 = vmax.f32 %v4977, 0.0
  %v5013 = vmax.f32 %v4991, 0.0
  %v5014 = vmax.f32 %v5005, 0.0
  %v5015 = vpack.c.bf16 %v5011, %v5007
  %v5016 = vpack.c.bf16 %v5012, %v5008
  %v5017 = vpack.c.bf16 %v5013, %v5009
  %v5018 = vpack.c.bf16 %v5014, %v5010
  %v5019 = vld [vmem:[%s14 + $0x300] sm:$0xf]
  %v5020 = vld [vmem:[%s14 + $0x304] sm:$0xf]
  %v5021 = vld [vmem:[%s14 + $0x308] sm:$0xf]
  %v5022 = vld [vmem:[%s14 + $0x30c] sm:$0xf]
  %v5023 = vld [vmem:[%s14 + $0x310] sm:$0xf]
  %v5024 = vld [vmem:[%s14 + $0x314] sm:$0xf]
  %v5025 = vld [vmem:[%s14 + $0x318] sm:$0xf]
  %v5026 = vld [vmem:[%s14 + $0x31c] sm:$0xf]
  %v5027 = vld [vmem:[%s14 + $0x320] sm:$0xf]
  %v5028 = vld [vmem:[%s14 + $0x324] sm:$0xf]
  %v5029 = vld [vmem:[%s14 + $0x328] sm:$0xf]
  %v5030 = vld [vmem:[%s14 + $0x32c] sm:$0xf]
  %v5031 = vld [vmem:[%s14 + $0x330] sm:$0xf]
  %v5032 = vld [vmem:[%s14 + $0x334] sm:$0xf]
  %v5033 = vld [vmem:[%s14 + $0x338] sm:$0xf]
  %v5034 = vld [vmem:[%s14 + $0x33c] sm:$0xf]
  %v5035 = vld [vmem:[%s14 + $0x340] sm:$0xf]
  %v5036 = vld [vmem:[%s14 + $0x344] sm:$0xf]
  %v5037 = vld [vmem:[%s14 + $0x348] sm:$0xf]
  %v5038 = vld [vmem:[%s14 + $0x34c] sm:$0xf]
  %v5039 = vld [vmem:[%s14 + $0x350] sm:$0xf]
  %v5040 = vld [vmem:[%s14 + $0x354] sm:$0xf]
  %v5041 = vld [vmem:[%s14 + $0x358] sm:$0xf]
  %v5042 = vld [vmem:[%s14 + $0x35c] sm:$0xf]
  %v5043 = vld [vmem:[%s14 + $0x360] sm:$0xf]
  %v5044 = vld [vmem:[%s14 + $0x364] sm:$0xf]
  %v5045 = vld [vmem:[%s14 + $0x368] sm:$0xf]
  %v5046 = vld [vmem:[%s14 + $0x36c] sm:$0xf]
  %v5047 = vld [vmem:[%s14 + $0x370] sm:$0xf]
  %v5048 = vld [vmem:[%s14 + $0x374] sm:$0xf]
  %v5049 = vld [vmem:[%s14 + $0x378] sm:$0xf]
  %v5050 = vld [vmem:[%s14 + $0x37c] sm:$0xf]
  %v5051 = vld [vmem:[%s14 + $0x380] sm:$0xf]
  %v5052 = vld [vmem:[%s14 + $0x384] sm:$0xf]
  %v5053 = vld [vmem:[%s14 + $0x388] sm:$0xf]
  %v5054 = vld [vmem:[%s14 + $0x38c] sm:$0xf]
  %v5055 = vld [vmem:[%s14 + $0x390] sm:$0xf]
  %v5056 = vld [vmem:[%s14 + $0x394] sm:$0xf]
  %v5057 = vld [vmem:[%s14 + $0x398] sm:$0xf]
  %v5058 = vld [vmem:[%s14 + $0x39c] sm:$0xf]
  %v5059 = vld [vmem:[%s14 + $0x3a0] sm:$0xf]
  %v5060 = vld [vmem:[%s14 + $0x3a4] sm:$0xf]
  %v5061 = vld [vmem:[%s14 + $0x3a8] sm:$0xf]
  %v5062 = vld [vmem:[%s14 + $0x3ac] sm:$0xf]
  %v5063 = vld [vmem:[%s14 + $0x3b0] sm:$0xf]
  %v5064 = vld [vmem:[%s14 + $0x3b4] sm:$0xf]
  %v5065 = vld [vmem:[%s14 + $0x3b8] sm:$0xf]
  %v5066 = vld [vmem:[%s14 + $0x3bc] sm:$0xf]
  %v5067 = vld [vmem:[%s14 + $0x3c0] sm:$0xf]
  %v5068 = vld [vmem:[%s14 + $0x3c4] sm:$0xf]
  %v5069 = vld [vmem:[%s14 + $0x3c8] sm:$0xf]
  %v5070 = vld [vmem:[%s14 + $0x3cc] sm:$0xf]
  %v5071 = vld [vmem:[%s14 + $0x3d0] sm:$0xf]
  %v5072 = vld [vmem:[%s14 + $0x3d4] sm:$0xf]
  %v5073 = vld [vmem:[%s14 + $0x3d8] sm:$0xf]
  %v5074 = vld [vmem:[%s14 + $0x3dc] sm:$0xf]
  %v5075 = vld [vmem:[%s14 + $0x3e0] sm:$0xf]
  %v5076 = vld [vmem:[%s14 + $0x3e4] sm:$0xf]
  %v5077 = vld [vmem:[%s14 + $0x3e8] sm:$0xf]
  %v5078 = vld [vmem:[%s14 + $0x3ec] sm:$0xf]
  %v5079 = vld [vmem:[%s14 + $0x3f0] sm:$0xf]
  %v5080 = vld [vmem:[%s14 + $0x3f4] sm:$0xf]
  %v5081 = vld [vmem:[%s14 + $0x3f8] sm:$0xf]
  %v5082 = vld [vmem:[%s14 + $0x3fc] sm:$0xf]
  %v5147 = vunpack.c.l.b16 %v5019
  %v5148 = vunpack.c.l.b16 %v5020
  %v5149 = vunpack.c.l.b16 %v5021
  %v5150 = vunpack.c.l.b16 %v5022
  %v5151 = vunpack.c.l.b16 %v5023
  %v5152 = vunpack.c.l.b16 %v5024
  %v5153 = vunpack.c.l.b16 %v5025
  %v5154 = vunpack.c.l.b16 %v5026
  %v5155 = vunpack.c.l.b16 %v5027
  %v5156 = vunpack.c.l.b16 %v5028
  %v5157 = vunpack.c.l.b16 %v5029
  %v5158 = vunpack.c.l.b16 %v5030
  %v5159 = vunpack.c.l.b16 %v5031
  %v5160 = vunpack.c.l.b16 %v5032
  %v5161 = vunpack.c.l.b16 %v5033
  %v5162 = vunpack.c.l.b16 %v5034
  %v5163 = vunpack.c.l.b16 %v5035
  %v5164 = vunpack.c.l.b16 %v5036
  %v5165 = vunpack.c.l.b16 %v5037
  %v5166 = vunpack.c.l.b16 %v5038
  %v5167 = vunpack.c.l.b16 %v5039
  %v5168 = vunpack.c.l.b16 %v5040
  %v5169 = vunpack.c.l.b16 %v5041
  %v5170 = vunpack.c.l.b16 %v5042
  %v5171 = vunpack.c.l.b16 %v5043
  %v5172 = vunpack.c.l.b16 %v5044
  %v5173 = vunpack.c.l.b16 %v5045
  %v5174 = vunpack.c.l.b16 %v5046
  %v5175 = vunpack.c.l.b16 %v5047
  %v5176 = vunpack.c.l.b16 %v5048
  %v5177 = vunpack.c.l.b16 %v5049
  %v5178 = vunpack.c.l.b16 %v5050
  %v5179 = vunpack.c.l.b16 %v5051
  %v5180 = vunpack.c.l.b16 %v5052
  %v5181 = vunpack.c.l.b16 %v5053
  %v5182 = vunpack.c.l.b16 %v5054
  %v5183 = vunpack.c.l.b16 %v5055
  %v5184 = vunpack.c.l.b16 %v5056
  %v5185 = vunpack.c.l.b16 %v5057
  %v5186 = vunpack.c.l.b16 %v5058
  %v5187 = vunpack.c.l.b16 %v5059
  %v5188 = vunpack.c.l.b16 %v5060
  %v5189 = vunpack.c.l.b16 %v5061
  %v5190 = vunpack.c.l.b16 %v5062
  %v5191 = vunpack.c.l.b16 %v5063
  %v5192 = vunpack.c.l.b16 %v5064
  %v5193 = vunpack.c.l.b16 %v5065
  %v5194 = vunpack.c.l.b16 %v5066
  %v5195 = vunpack.c.l.b16 %v5067
  %v5196 = vunpack.c.l.b16 %v5068
  %v5197 = vunpack.c.l.b16 %v5069
  %v5198 = vunpack.c.l.b16 %v5070
  %v5199 = vunpack.c.l.b16 %v5071
  %v5200 = vunpack.c.l.b16 %v5072
  %v5201 = vunpack.c.l.b16 %v5073
  %v5202 = vunpack.c.l.b16 %v5074
  %v5203 = vunpack.c.l.b16 %v5075
  %v5204 = vunpack.c.l.b16 %v5076
  %v5205 = vunpack.c.l.b16 %v5077
  %v5206 = vunpack.c.l.b16 %v5078
  %v5207 = vunpack.c.l.b16 %v5079
  %v5208 = vunpack.c.l.b16 %v5080
  %v5209 = vunpack.c.l.b16 %v5081
  %v5210 = vunpack.c.l.b16 %v5082
  %v5211 = vpack.c.b16 %v5148, %v5147
  %v5212 = vpack.c.b16 %v5150, %v5149
  %v5213 = vpack.c.b16 %v5152, %v5151
  %v5214 = vpack.c.b16 %v5154, %v5153
  %v5215 = vpack.c.b16 %v5156, %v5155
  %v5216 = vpack.c.b16 %v5158, %v5157
  %v5217 = vpack.c.b16 %v5160, %v5159
  %v5218 = vpack.c.b16 %v5162, %v5161
  %v5219 = vpack.c.b16 %v5164, %v5163
  %v5220 = vpack.c.b16 %v5166, %v5165
  %v5221 = vpack.c.b16 %v5168, %v5167
  %v5222 = vpack.c.b16 %v5170, %v5169
  %v5223 = vpack.c.b16 %v5172, %v5171
  %v5224 = vpack.c.b16 %v5174, %v5173
  %v5225 = vpack.c.b16 %v5176, %v5175
  %v5226 = vpack.c.b16 %v5178, %v5177
  %v5227 = vpack.c.b16 %v5180, %v5179
  %v5228 = vpack.c.b16 %v5182, %v5181
  %v5229 = vpack.c.b16 %v5184, %v5183
  %v5230 = vpack.c.b16 %v5186, %v5185
  %v5231 = vpack.c.b16 %v5188, %v5187
  %v5232 = vpack.c.b16 %v5190, %v5189
  %v5233 = vpack.c.b16 %v5192, %v5191
  %v5234 = vpack.c.b16 %v5194, %v5193
  %v5235 = vpack.c.b16 %v5196, %v5195
  %v5236 = vpack.c.b16 %v5198, %v5197
  %v5237 = vpack.c.b16 %v5200, %v5199
  %v5238 = vpack.c.b16 %v5202, %v5201
  %v5239 = vpack.c.b16 %v5204, %v5203
  %v5240 = vpack.c.b16 %v5206, %v5205
  %v5241 = vpack.c.b16 %v5208, %v5207
  %v5242 = vpack.c.b16 %v5210, %v5209
  %5275 = vmatpush.bf16.msra.mxu0 %v5218
  %5276 = vmatpush.bf16.msra.mxu0 %v5217
  %5277 = vmatpush.bf16.msra.mxu0 %v5216
  %5278 = vmatpush.bf16.msra.mxu0 %v5215
  %5279 = vmatpush.bf16.msra.mxu0 %v5214
  %5280 = vmatpush.bf16.msra.mxu0 %v5213
  %5281 = vmatpush.bf16.msra.mxu0 %v5212
  %5282 = vmatpush.bf16.msra.mxu0 %v5211
  %5283 = vmatmul.bf16.gmra.mxu0 %v5015
  %v5284 = vpop.f32.mrf.mxu0
  %v5285 = vadd.f32 0.0, %v5284
  %v5286 = vpop.f32.mrf.mxu0
  %v5287 = vadd.f32 0.0, %v5286
  %5288 = vdwg.mxu0
  %5289 = vmatpush.bf16.msra.mxu0 %v5226
  %5290 = vmatpush.bf16.msra.mxu0 %v5225
  %5291 = vmatpush.bf16.msra.mxu0 %v5224
  %5292 = vmatpush.bf16.msra.mxu0 %v5223
  %5293 = vmatpush.bf16.msra.mxu0 %v5222
  %5294 = vmatpush.bf16.msra.mxu0 %v5221
  %5295 = vmatpush.bf16.msra.mxu0 %v5220
  %5296 = vmatpush.bf16.msra.mxu0 %v5219
  %5297 = vmatmul.bf16.gmra.mxu0 %v5016
  %v5298 = vpop.f32.mrf.mxu0
  %v5299 = vadd.f32 %v5285, %v5298
  %v5300 = vpop.f32.mrf.mxu0
  %v5301 = vadd.f32 %v5287, %v5300
  %5302 = vdwg.mxu0
  %5303 = vmatpush.bf16.msra.mxu0 %v5234
  %5304 = vmatpush.bf16.msra.mxu0 %v5233
  %5305 = vmatpush.bf16.msra.mxu0 %v5232
  %5306 = vmatpush.bf16.msra.mxu0 %v5231
  %5307 = vmatpush.bf16.msra.mxu0 %v5230
  %5308 = vmatpush.bf16.msra.mxu0 %v5229
  %5309 = vmatpush.bf16.msra.mxu0 %v5228
  %5310 = vmatpush.bf16.msra.mxu0 %v5227
  %5311 = vmatmul.bf16.gmra.mxu0 %v5017
  %v5312 = vpop.f32.mrf.mxu0
  %v5313 = vadd.f32 %v5299, %v5312
  %v5314 = vpop.f32.mrf.mxu0
  %v5315 = vadd.f32 %v5301, %v5314
  %5316 = vdwg.mxu0
  %5317 = vmatpush.bf16.msra.mxu0 %v5242
  %5318 = vmatpush.bf16.msra.mxu0 %v5241
  %5319 = vmatpush.bf16.msra.mxu0 %v5240
  %5320 = vmatpush.bf16.msra.mxu0 %v5239
  %5321 = vmatpush.bf16.msra.mxu0 %v5238
  %5322 = vmatpush.bf16.msra.mxu0 %v5237
  %5323 = vmatpush.bf16.msra.mxu0 %v5236
  %5324 = vmatpush.bf16.msra.mxu0 %v5235
  %5325 = vmatmul.bf16.gmra.mxu0 %v5018
  %v5326 = vpop.f32.mrf.mxu0
  %v5327 = vadd.f32 %v5313, %v5326
  %v5328 = vpop.f32.mrf.mxu0
  %v5329 = vadd.f32 %v5315, %v5328
  %5330 = vdwg.mxu0
  %v5331 = vadd.f32 %v4891, %v5327
  %v5332 = vadd.f32 %v4892, %v5329
  %v5333 = vadd.f32 %v3571, %v5331
  %v5334 = vadd.f32 %v3572, %v5332
  %v5335 = vadd.f32 %v5333, %v2731
  %v5336 = vadd.f32 %v5334, %v2731
  %v5337 = vsel %vm154, %v5335, 0.0
  %5338 = vadd.xlane.f32.xlu0 %v5337
  %v5339 = vpop.xlane.xlu0 %5338
  %v5340 = vsel %vm154, %v5336, 0.0
  %5341 = vadd.xlane.f32.xlu0 %v5340
  %v5342 = vpop.xlane.xlu0 %5341
  %v5343 = vmul.f32 %v5339, %v919
  %v5344 = vmul.f32 %v5342, %v919
  %v5345 = vsub.f32 %v5335, %v5343
  %v5346 = vsub.f32 %v5336, %v5344
  %v5347 = vmul.f32 %v5345, %v5345
  %v5348 = vmul.f32 %v5346, %v5346
  %v5349 = vsel %vm154, %v5347, 0.0
  %5350 = vadd.xlane.f32.xlu0 %v5349
  %v5351 = vpop.xlane.xlu0 %5350
  %v5352 = vsel %vm154, %v5348, 0.0
  %5353 = vadd.xlane.f32.xlu0 %v5352
  %v5354 = vpop.xlane.xlu0 %5353
  %v5355 = vmul.f32 %v5351, %v919
  %v5356 = vmul.f32 %v5354, %v919
  %v5357 = vadd.f32 %v5355, 1e-05
  %v5358 = vadd.f32 %v5356, 1e-05
  %v5359 = vrsqrt.pop %v5357
  %v5360 = vmul.f32 %v5359, %v5357
  %v5361 = vmul.f32 %v5360, %v5359
  %v5362 = vmul.f32 0.5, %v5361
  %v5363 = vsub.f32 1.5, %v5362
  %v5364 = vmul.f32 %v5359, %v5363
  %vm5365 = vweird.f32 %v5357
  %vm5366 = vweird.f32 %v5359
  %vm5367 = vmor %vm5365, %vm5366
  %v5368 = vsel %vm5367, %v5359, %v5364
  %v5369 = vrsqrt.pop %v5358
  %v5370 = vmul.f32 %v5369, %v5358
  %v5371 = vmul.f32 %v5370, %v5369
  %v5372 = vmul.f32 0.5, %v5371
  %v5373 = vsub.f32 1.5, %v5372
  %v5374 = vmul.f32 %v5369, %v5373
  %vm5375 = vweird.f32 %v5358
  %vm5376 = vweird.f32 %v5369
  %vm5377 = vmor %vm5375, %vm5376
  %v5378 = vsel %vm5377, %v5369, %v5374
  %v5379 = vmul.f32 %v5345, %v5368
  %v5380 = vmul.f32 %v5346, %v5378
  %v5381 = vmul.f32 %v5379, %v2780
  %v5382 = vmul.f32 %v5380, %v2780
  %v5383 = vadd.f32 %v5381, %v2785
  %v5384 = vadd.f32 %v5382, %v2785
  %v5385 = vsub.f32 1.0, %v128
  %v5386 = vsub.f32 1.0, %v129
  %v5388 = vsel %vm205, %v5385, 0
  %5390 = vmatpush.msra.mxu0 0.0
  %5391 = vmatpush.msra.mxu0 0.0
  %5392 = vmatpush.msra.mxu0 0.0
  %5393 = vmatpush.msra.mxu0 0.0
  %5394 = vmatpush.msra.mxu0 0.0
  %5395 = vmatpush.msra.mxu0 0.0
  %5396 = vmatpush.msra.mxu0 0.0
  %5397 = vmatpush.msra.mxu0 0.0
  %5398 = vmatpush.msra.mxu0 0.0
  %5399 = vmatpush.msra.mxu0 0.0
  %5400 = vmatpush.msra.mxu0 0.0
  %5401 = vmatpush.msra.mxu0 0.0
  %5402 = vmatpush.msra.mxu0 0.0
  %5403 = vmatpush.msra.mxu0 0.0
  %5404 = vmatpush.msra.mxu0 0.0
  %5405 = vmatpush.msra.mxu0 %v5383
  %5406 = vmatmul.f32.gmra.mxu0 %v5388
  %v5407 = vpop.f32.mrf.mxu0
  %v5408 = vadd.f32 0.0, %v5407
  %5409 = vdwg.mxu0
  %v5411 = vsel %vm205, %v5386, 0
  %5413 = vmatpush.msra.mxu0 0.0
  %5414 = vmatpush.msra.mxu0 0.0
  %5415 = vmatpush.msra.mxu0 0.0
  %5416 = vmatpush.msra.mxu0 0.0
  %5417 = vmatpush.msra.mxu0 0.0
  %5418 = vmatpush.msra.mxu0 0.0
  %5419 = vmatpush.msra.mxu0 0.0
  %5420 = vmatpush.msra.mxu0 0.0
  %5421 = vmatpush.msra.mxu0 0.0
  %5422 = vmatpush.msra.mxu0 0.0
  %5423 = vmatpush.msra.mxu0 0.0
  %5424 = vmatpush.msra.mxu0 0.0
  %5425 = vmatpush.msra.mxu0 0.0
  %5426 = vmatpush.msra.mxu0 0.0
  %5427 = vmatpush.msra.mxu0 0.0
  %5428 = vmatpush.msra.mxu0 %v5384
  %5429 = vmatmul.f32.gmra.mxu0 %v5411
  %v5430 = vpop.f32.mrf.mxu0
  %v5431 = vadd.f32 0.0, %v5430
  %5432 = vdwg.mxu0
  %vm5433 = vcmask 57344
  %v5434 = vsel %vm5433, %v5385, 0.0
  %5435 = vadd.xlane.f32.xlu0 %v5434
  %v5436 = vpop.xlane.xlu0 %5435
  %v5437 = vsel %vm5433, %v5386, 0.0
  %5438 = vadd.xlane.f32.xlu0 %v5437
  %v5439 = vpop.xlane.xlu0 %5438
  %v5440 = vmax.f32 %v5436, 1.0
  %v5441 = vmax.f32 %v5439, 1.0
  %v5442 = vrcp.pop %v5440
  %v5443 = vmul.f32 %v5440, %v5442
  %v5444 = vsub.f32 1.0, %v5443
  %v5445 = vmul.f32 %v5442, %v5444
  %v5446 = vadd.f32 %v5442, %v5445
  %vm5447 = vweird.f32 %v5440
  %vm5448 = vweird.f32 %v5442
  %vm5449 = vmor %vm5447, %vm5448
  %v5450 = vsel %vm5449, %v5442, %v5446
  %v5451 = vand.u32 2147483647, %v5440
  %vm5452 = vcmp.eq.f32.partialorder %v5451, 8.507059e+37
  %v5453 = vand.u32 %v5440, 2147483648
  %v5454 = vor.u32 1.1754944e-38, %v5453
  %v5455 = vsel %vm5452, %v5454, %v5450
  %v5456 = vmul.f32 %v5408, %v5455
  %v5457 = vrcp.pop %v5441
  %v5458 = vmul.f32 %v5441, %v5457
  %v5459 = vsub.f32 1.0, %v5458
  %v5460 = vmul.f32 %v5457, %v5459
  %v5461 = vadd.f32 %v5457, %v5460
  %vm5462 = vweird.f32 %v5441
  %vm5463 = vweird.f32 %v5457
  %vm5464 = vmor %vm5462, %vm5463
  %v5465 = vsel %vm5464, %v5457, %v5461
  %v5466 = vand.u32 2147483647, %v5441
  %vm5467 = vcmp.eq.f32.partialorder %v5466, 8.507059e+37
  %v5468 = vand.u32 %v5441, 2147483648
  %v5469 = vor.u32 1.1754944e-38, %v5468
  %v5470 = vsel %vm5467, %v5469, %v5465
  %v5471 = vmul.f32 %v5431, %v5470
  %vm5472 = vcmask 253952
  %5473 = vst.msk [vmem:[%s16] sm:$0x1] %vm5472, %v5456
  %5474 = vst.msk [vmem:[%s16 + $0x1] sm:$0x1] %vm5472, %v5471
  // Predicated region
  $region66: #{trans_enc_forward.1} parent=0 // pred_check
    _
  $region67: #{trans_enc_forward.1} parent=0 // pred_check_branch
    %5476 = sbr.rel (0) target = $region69
  $region68: #{trans_enc_forward.1} parent=0 // pred_region
    _
  $region69: #{trans_enc_forward.1} parent=0 // pred_fallthru
    _
  // Predicated region
  $region70: #{trans_enc_forward.1} parent=0 // pred_check
    _
  $region71: #{trans_enc_forward.1} parent=0 // pred_check_branch
    %5478 = sbr.rel (0) target = $region73
  $region72: #{trans_enc_forward.1} parent=0 // pred_region
    _
  $region73: #{trans_enc_forward.1} parent=0 // pred_fallthru
    _

</llo_original>
